<compile_context>
chip_gen: v7x
topology: tpu7x:2x2x1
jax: 0.10.0
libtpu: 0.0.40
codegen_flags: <defaults>
</compile_context>

<pallas_src>
import jax
import jax.numpy as jnp
from jax.experimental import pallas as pl
from jax.experimental.pallas import tpu as pltpu

LEAK = 0.2          # LeakyReLU negative slope ("scale" in the PyTorch module)
IN_FEATURES = 784   # 28*28 after nn.Flatten
K_PAD = 896         # 7*128 -> lane-aligned K for the first matmul
HIDDEN = 512
OUT_LANES = 128     # lane-dense output slab; the real output is column 0


def dis_kernel(x_ref, w1_ref, b1_ref, w2_ref, b2_ref, w3_ref, b3_ref, o_ref):
    """Fused MLP discriminator forward (eval mode).
    MXU matmuls run on bf16 operands with f32 accumulation; elementwise stays f32
    (v5e has no bf16 VPU path)."""
    # ---- layer 1: (TB, 896)bf16 @ (896, 512)bf16 -> f32 ----
    h1 = jnp.dot(x_ref[...], w1_ref[...], preferred_element_type=jnp.float32)
    h1 = h1 + b1_ref[...]
    h1 = jnp.where(h1 > 0, h1, LEAK * h1)
    # TODO(synk): nn.Dropout(p=0.5) implemented as identity (eval-mode semantics);
    # training-mode dropout would need pltpu.prng_seed/prng_random_bits masking.

    # ---- layer 2: (TB, 512)bf16 @ (512, 512)bf16 -> f32 ----
    h2 = jnp.dot(h1.astype(jnp.bfloat16), w2_ref[...],
                 preferred_element_type=jnp.float32)
    h2 = h2 + b2_ref[...]
    h2 = jnp.where(h2 > 0, h2, LEAK * h2)

    # ---- layer 3: Linear(512,1) as VPU multiply + cross-lane reduce ----
    # (an N=1 MXU matmul wastes 127/255 output columns and forces lane-width-1
    #  masked stores; the VPU/XLU slots are otherwise idle here)
    h3 = jnp.sum(h2 * w3_ref[...], axis=-1, keepdims=True)   # (TB, 1) f32
    h3 = h3 + b3_ref[0, 0]                                    # scalar bias from SMEM

    # numerically stable sigmoid (never exponentiates a positive number)
    pos = h3 >= 0
    z = jnp.exp(jnp.where(pos, -h3, h3))
    sig = jnp.where(pos, 1.0 / (1.0 + z), z / (1.0 + z))

    # lane-dense store: broadcast across the 128-lane slab -> full unmasked vst
    o_ref[...] = jnp.broadcast_to(sig, o_ref.shape).astype(o_ref.dtype)


def prepare_params(params):
    """One-time conversion of f32 Linear params into kernel-ready layout:
       - w1 zero-padded on K (784 -> 896) and cast to bf16
       - w2 cast to bf16
       - w3 kept as an f32 row (1, 512) for the VPU/XLU final layer
       - b3 as an f32 (1, 1) scalar (placed in SMEM at call time)"""
    w1, b1, w2, b2, w3, b3 = params
    w1p = jnp.pad(w1, ((0, K_PAD - IN_FEATURES), (0, 0))).astype(jnp.bfloat16)
    w2p = w2.astype(jnp.bfloat16)
    w3_row = w3.reshape(1, HIDDEN).astype(jnp.float32)
    b3s = b3.reshape(1, 1).astype(jnp.float32)
    return (w1p, b1.astype(jnp.float32), w2p, b2.astype(jnp.float32), w3_row, b3s)


def _round_up(n, m):
    return -(-n // m) * m


def dis_forward(x_nchw, prepared, *, tile_b=128):
    """x_nchw: (B, 1, 28, 28) float32. Returns (B, 1) float32.

    tile_b=128 keeps >= 2 grid steps at moderate batches (v7x has 2 TensorCores
    sharing the parallel axis); raise to 256+ for large batches on v6e/v7x.
    VMEM footprint (bf16 weights ~1.4 MB + tiles) is far below default limits,
    so no vmem_limit_bytes override is needed at these tile sizes."""
    w1, b1, w2, b2, w3, b3 = prepared
    B = x_nchw.shape[0]

    tile_b = min(tile_b, _round_up(B, 8))   # clamp for small batches
    Bp = _round_up(B, tile_b)               # pad batch to a tile multiple

    x = x_nchw.reshape(B, -1).astype(jnp.float32)
    assert x.shape[1] == IN_FEATURES
    # zero-pad batch rows (B -> Bp) and feature columns (784 -> 896, lane aligned);
    # bf16 halves HBM->VMEM traffic for the activations.
    x = jnp.pad(x, ((0, Bp - B), (0, K_PAD - IN_FEATURES))).astype(jnp.bfloat16)

    grid = (Bp // tile_b,)
    in_specs = [
        pl.BlockSpec((tile_b, K_PAD), lambda i: (i, 0)),      # x tile     (bf16)
        pl.BlockSpec((K_PAD, HIDDEN), lambda i: (0, 0)),      # w1         (bf16)
        pl.BlockSpec((1, HIDDEN), lambda i: (0, 0)),          # b1         (f32)
        pl.BlockSpec((HIDDEN, HIDDEN), lambda i: (0, 0)),     # w2         (bf16)
        pl.BlockSpec((1, HIDDEN), lambda i: (0, 0)),          # b2         (f32)
        pl.BlockSpec((1, HIDDEN), lambda i: (0, 0)),          # w3 row     (f32)
        pl.BlockSpec(memory_space=pltpu.MemorySpace.SMEM),    # b3 scalar  (f32)
    ]
    out_specs = pl.BlockSpec((tile_b, OUT_LANES), lambda i: (i, 0))

    out = pl.pallas_call(
        dis_kernel,
        out_shape=jax.ShapeDtypeStruct((Bp, OUT_LANES), jnp.float32),
        grid_spec=pltpu.PrefetchScalarGridSpec(
            num_scalar_prefetch=0,
            grid=grid,
            in_specs=in_specs,
            out_specs=out_specs,
        ),
        compiler_params=pltpu.CompilerParams(
            dimension_semantics=("parallel",),
        ),
    )(x, w1, b1, w2, b2, w3, b3)

    return out[:B, :1]


def init_params(key):
    """Deterministic init mimicking nn.Linear default (U[-1/sqrt(fan_in), +...])."""
    ks = jax.random.split(key, 6)

    def linear(kw, kb, fan_in, fan_out):
        bound = 1.0 / jnp.sqrt(fan_in)
        # Stored transposed vs PyTorch: (fan_in, fan_out) so the kernel does x @ W.
        w = jax.random.uniform(kw, (fan_in, fan_out), jnp.float32, -bound, bound)
        b = jax.random.uniform(kb, (1, fan_out), jnp.float32, -bound, bound)
        return w, b

    w1, b1 = linear(ks[0], ks[1], IN_FEATURES, HIDDEN)
    w2, b2 = linear(ks[2], ks[3], HIDDEN, HIDDEN)
    w3, b3 = linear(ks[4], ks[5], HIDDEN, 1)
    return (w1, b1, w2, b2, w3, b3)


def dis_reference(x_nchw, params):
    """Plain-JAX f32 reference (eval mode)."""
    w1, b1, w2, b2, w3, b3 = params
    x = x_nchw.reshape(x_nchw.shape[0], -1)
    h = x @ w1 + b1
    h = jnp.where(h > 0, h, LEAK * h)
    h = h @ w2 + b2
    h = jnp.where(h > 0, h, LEAK * h)
    h = h @ w3 + b3
    return jax.nn.sigmoid(h)


if __name__ == "__main__":
    key = jax.random.PRNGKey(0)
    k_params, k_x = jax.random.split(key)

    params = init_params(k_params)
    prepared = prepare_params(params)

    B = 256  # small MNIST-like batch; 2 grid steps at tile_b=128
    x = jax.random.normal(k_x, (B, 1, 28, 28), jnp.float32)

    out = jax.block_until_ready(dis_forward(x, prepared, tile_b=128))
    ref = dis_reference(x, params)

    assert out.shape == (B, 1)
    # bf16 MXU operands vs f32 reference -> looser tolerance than pure f32
    assert jnp.max(jnp.abs(out - ref)) < 1e-2, "mismatch vs reference"

    print("KERNEL_OK")
</pallas_src>

<mosaic_0001>
module attributes {stable_mosaic.version = 11 : i64} {
  func.func @dis_kernel(%arg0: i32, %arg1: memref<128x896xbf16, #tpu.memory_space<vmem>>, %arg2: memref<896x512xbf16, #tpu.memory_space<vmem>>, %arg3: memref<1x512xf32, #tpu.memory_space<vmem>>, %arg4: memref<512x512xbf16, #tpu.memory_space<vmem>>, %arg5: memref<1x512xf32, #tpu.memory_space<vmem>>, %arg6: memref<1x512xf32, #tpu.memory_space<vmem>>, %arg7: memref<1x1xf32, #tpu.memory_space<smem>>, %arg8: memref<128x128xf32, #tpu.memory_space<vmem>>) attributes {dimension_semantics = [#tpu.dimension_semantics<parallel>], iteration_bounds = array<i64: 2>, scalar_prefetch = 0 : i64, scratch_operands = 0 : i64, tpu.core_type = #tpu.core_type<tc>, window_params = [{transform_indices = @transform_0, window_bounds = array<i64: 128, 896>}, {pipeline_mode = #tpu.pipeline_mode<synchronous>, transform_indices = @transform_1, window_bounds = array<i64: 896, 512>}, {pipeline_mode = #tpu.pipeline_mode<synchronous>, transform_indices = @transform_2, window_bounds = array<i64: 1, 512>}, {pipeline_mode = #tpu.pipeline_mode<synchronous>, transform_indices = @transform_3, window_bounds = array<i64: 512, 512>}, {pipeline_mode = #tpu.pipeline_mode<synchronous>, transform_indices = @transform_4, window_bounds = array<i64: 1, 512>}, {pipeline_mode = #tpu.pipeline_mode<synchronous>, transform_indices = @transform_5, window_bounds = array<i64: 1, 512>}, {transform_indices = @transform_6, window_bounds = array<i64: 1, 1>}, {transform_indices = @transform_7, window_bounds = array<i64: 128, 128>}]} {
    %c0 = arith.constant 0 : index
    %c0_0 = arith.constant 0 : index
    %0 = vector.load %arg1[%c0, %c0_0] : memref<128x896xbf16, #tpu.memory_space<vmem>>, vector<128x896xbf16>
    %c0_1 = arith.constant 0 : index
    %c0_2 = arith.constant 0 : index
    %1 = vector.load %arg2[%c0_1, %c0_2] : memref<896x512xbf16, #tpu.memory_space<vmem>>, vector<896x512xbf16>
    %cst = arith.constant dense<0.000000e+00> : vector<128x512xf32>
    %2 = tpu.matmul %0, %1, %cst {dimension_numbers = #tpu.dot_dimension_numbers<[1], [0], [0], [1], [0, 0, 1, 1], [], []>} : vector<128x896xbf16>, vector<896x512xbf16>, vector<128x512xf32> -> vector<128x512xf32>
    %c0_3 = arith.constant 0 : index
    %c0_4 = arith.constant 0 : index
    %3 = vector.load %arg3[%c0_3, %c0_4] : memref<1x512xf32, #tpu.memory_space<vmem>>, vector<1x512xf32>
    %4 = vector.broadcast %3 : vector<1x512xf32> to vector<128x512xf32>
    %5 = arith.addf %2, %4 : vector<128x512xf32>
    %cst_5 = arith.constant 0.000000e+00 : f32
    %6 = vector.broadcast %cst_5 : f32 to vector<128x512xf32>
    %7 = arith.cmpf ogt, %5, %6 : vector<128x512xf32>
    %cst_6 = arith.constant 2.000000e-01 : f32
    %8 = vector.broadcast %cst_6 : f32 to vector<128x512xf32>
    %9 = arith.mulf %8, %5 : vector<128x512xf32>
    %10 = arith.select %7, %5, %9 : vector<128x512xi1>, vector<128x512xf32>
    %11 = arith.truncf %10 : vector<128x512xf32> to vector<128x512xbf16>
    %c0_7 = arith.constant 0 : index
    %c0_8 = arith.constant 0 : index
    %12 = vector.load %arg4[%c0_7, %c0_8] : memref<512x512xbf16, #tpu.memory_space<vmem>>, vector<512x512xbf16>
    %cst_9 = arith.constant dense<0.000000e+00> : vector<128x512xf32>
    %13 = tpu.matmul %11, %12, %cst_9 {dimension_numbers = #tpu.dot_dimension_numbers<[1], [0], [0], [1], [0, 0, 1, 1], [], []>} : vector<128x512xbf16>, vector<512x512xbf16>, vector<128x512xf32> -> vector<128x512xf32>
    %c0_10 = arith.constant 0 : index
    %c0_11 = arith.constant 0 : index
    %14 = vector.load %arg5[%c0_10, %c0_11] : memref<1x512xf32, #tpu.memory_space<vmem>>, vector<1x512xf32>
    %15 = vector.broadcast %14 : vector<1x512xf32> to vector<128x512xf32>
    %16 = arith.addf %13, %15 : vector<128x512xf32>
    %cst_12 = arith.constant 0.000000e+00 : f32
    %17 = vector.broadcast %cst_12 : f32 to vector<128x512xf32>
    %18 = arith.cmpf ogt, %16, %17 : vector<128x512xf32>
    %cst_13 = arith.constant 2.000000e-01 : f32
    %19 = vector.broadcast %cst_13 : f32 to vector<128x512xf32>
    %20 = arith.mulf %19, %16 : vector<128x512xf32>
    %21 = arith.select %18, %16, %20 : vector<128x512xi1>, vector<128x512xf32>
    %c0_14 = arith.constant 0 : index
    %c0_15 = arith.constant 0 : index
    %22 = vector.load %arg6[%c0_14, %c0_15] : memref<1x512xf32, #tpu.memory_space<vmem>>, vector<1x512xf32>
    %23 = vector.broadcast %22 : vector<1x512xf32> to vector<128x512xf32>
    %24 = arith.mulf %21, %23 : vector<128x512xf32>
    %cst_16 = arith.constant dense<0.000000e+00> : vector<128xf32>
    %25 = vector.multi_reduction <add>, %24, %cst_16 [1] : vector<128x512xf32> to vector<128xf32>
    %26 = vector.shape_cast %25 : vector<128xf32> to vector<128x1xf32>
    %c0_17 = arith.constant 0 : index
    %c0_18 = arith.constant 0 : index
    %27 = memref.load %arg7[%c0_17, %c0_18] : memref<1x1xf32, #tpu.memory_space<smem>>
    %28 = vector.broadcast %27 : f32 to vector<128x1xf32>
    %29 = arith.addf %26, %28 : vector<128x1xf32>
    %cst_19 = arith.constant 0.000000e+00 : f32
    %30 = vector.broadcast %cst_19 : f32 to vector<128x1xf32>
    %31 = arith.cmpf oge, %29, %30 : vector<128x1xf32>
    %cst_20 = arith.constant 0.000000e+00 : f32
    %32 = vector.broadcast %cst_20 : f32 to vector<128x1xf32>
    %33 = arith.subf %32, %29 : vector<128x1xf32>
    %34 = arith.select %31, %33, %29 : vector<128x1xi1>, vector<128x1xf32>
    %35 = math.exp %34 : vector<128x1xf32>
    %cst_21 = arith.constant 1.000000e+00 : f32
    %36 = vector.broadcast %cst_21 : f32 to vector<128x1xf32>
    %37 = arith.addf %36, %35 : vector<128x1xf32>
    %cst_22 = arith.constant 1.000000e+00 : f32
    %38 = vector.broadcast %cst_22 : f32 to vector<128x1xf32>
    %39 = arith.divf %38, %37 : vector<128x1xf32>
    %cst_23 = arith.constant 1.000000e+00 : f32
    %40 = vector.broadcast %cst_23 : f32 to vector<128x1xf32>
    %41 = arith.addf %40, %35 : vector<128x1xf32>
    %42 = arith.divf %35, %41 : vector<128x1xf32>
    %43 = arith.select %31, %39, %42 : vector<128x1xi1>, vector<128x1xf32>
    %44 = vector.shape_cast %43 : vector<128x1xf32> to vector<128x1xf32>
    %45 = vector.broadcast %44 : vector<128x1xf32> to vector<128x128xf32>
    %c0_24 = arith.constant 0 : index
    %c0_25 = arith.constant 0 : index
    %46 = vector.load %arg8[%c0_24, %c0_25] : memref<128x128xf32, #tpu.memory_space<vmem>>, vector<128x128xf32>
    tpu.vector_store %arg8[%c0_24, %c0_25], %45 {strides = array<i32>} : memref<128x128xf32, #tpu.memory_space<vmem>>, vector<128x128xf32>,
    return
  }
  func.func @transform_0(%arg0: i32) -> (i32, i32) {
    %c0_i32 = arith.constant 0 : i32
    %c0_i32_0 = arith.constant 0 : i32
    return %arg0, %c0_i32 : i32, i32
  }
  func.func @transform_1(%arg0: i32) -> (i32, i32) {
    %c0_i32 = arith.constant 0 : i32
    %c0_i32_0 = arith.constant 0 : i32
    %c0_i32_1 = arith.constant 0 : i32
    return %c0_i32, %c0_i32_0 : i32, i32
  }
  func.func @transform_2(%arg0: i32) -> (i32, i32) {
    %c0_i32 = arith.constant 0 : i32
    %c0_i32_0 = arith.constant 0 : i32
    %c0_i32_1 = arith.constant 0 : i32
    return %c0_i32, %c0_i32_0 : i32, i32
  }
  func.func @transform_3(%arg0: i32) -> (i32, i32) {
    %c0_i32 = arith.constant 0 : i32
    %c0_i32_0 = arith.constant 0 : i32
    %c0_i32_1 = arith.constant 0 : i32
    return %c0_i32, %c0_i32_0 : i32, i32
  }
  func.func @transform_4(%arg0: i32) -> (i32, i32) {
    %c0_i32 = arith.constant 0 : i32
    %c0_i32_0 = arith.constant 0 : i32
    %c0_i32_1 = arith.constant 0 : i32
    return %c0_i32, %c0_i32_0 : i32, i32
  }
  func.func @transform_5(%arg0: i32) -> (i32, i32) {
    %c0_i32 = arith.constant 0 : i32
    %c0_i32_0 = arith.constant 0 : i32
    %c0_i32_1 = arith.constant 0 : i32
    return %c0_i32, %c0_i32_0 : i32, i32
  }
  func.func @transform_6(%arg0: i32) -> (i32, i32) {
    %c0_i32 = arith.constant 0 : i32
    %c0_i32_0 = arith.constant 0 : i32
    %c0_i32_1 = arith.constant 0 : i32
    return %c0_i32, %c0_i32_0 : i32, i32
  }
  func.func @transform_7(%arg0: i32) -> (i32, i32) {
    %c0_i32 = arith.constant 0 : i32
    %c0_i32_0 = arith.constant 0 : i32
    return %arg0, %c0_i32 : i32, i32
  }
}

</mosaic_0001>

<llo_original>
// kernel: tpu_custom_call.1
$region0: #{tpu_custom_call.1}
  #allocation0 [shape = 'u32[]', space=smem, size = 0x4, offset = 0x4, fixed_abs, tag = 'smem constant byte address 0x4 - core index']
  #allocation1 [shape = 'u32[144,128]{1,0:T(1,128)}', space=vmem, size = 0x12000, scoped, tag = 'internal scratch']
  #allocation2 [shape = 'f32[1,1]{1,0:T(1,128)S(6)}', space=smem, size = 0x200, scoped, tag = 'scoped memory for tpu_custom_call.1']
  %s0 = inlined_call_operand.hbm [shape: bf16[256,896], index: 0, kind: input, shape index: {}]
  %s1 = inlined_call_operand.hbm [shape: bf16[896,512], index: 1, kind: input, shape index: {}]
  %s2 = inlined_call_operand.vmem [shape: f32[1,512], index: 2, kind: input, shape index: {}]
  %s3 = inlined_call_operand.hbm [shape: bf16[512,512], index: 3, kind: input, shape index: {}]
  %s4 = inlined_call_operand.vmem [shape: f32[1,512], index: 4, kind: input, shape index: {}]
  %s5 = inlined_call_operand.vmem [shape: f32[1,512], index: 5, kind: input, shape index: {}]
  %s6 = inlined_call_operand.<no memory space> [shape: f32[1,1], index: 6, kind: input, shape index: {}]
  %s7 = inlined_call_operand.hbm [shape: f32[256,128], index: 7, kind: output, shape index: {}]
  %s8 = sld [smem:[#allocation0]]
  $region73: #{tpu_custom_call.1} parent=0
    _
  %s10 = ssub.s32 1, %s8
  %s11 = scalar_select 0, %s10, %s8
  %12 = sst [smem:[#allocation2]] %s6
  $region1: #{tpu_custom_call.1} parent=0
    #allocation3 [shape = 'u8[458752]{0}', space=vmem, size = 0x70000, scoped, tag = 'input window, operand 0']
    #allocation4 [shape = 's32[2]{0}', space=sflag, size = 0x8, scoped, tag = 'scoped memory for tpu_custom_call.1']
    #allocation5 [shape = 's32[2]{0}', space=sflag, size = 0x8, scoped, tag = 'scoped memory for tpu_custom_call.1']
    #allocation6 [shape = 'u8[917504]{0}', space=vmem, size = 0xe0000, scoped, tag = 'input window, operand 1, single buffered']
    #allocation7 [shape = 's32[1]{0}', space=sflag, size = 0x4, scoped, tag = 'scoped memory for tpu_custom_call.1']
    #allocation8 [shape = 'u8[524288]{0}', space=vmem, size = 0x80000, scoped, tag = 'input window, operand 3, single buffered']
    #allocation9 [shape = 'u8[131072]{0}', space=vmem, size = 0x20000, scoped, tag = 'output window, operand 0']
    %13 = vsyncpa [#allocation4], 0
    %s14 = scalar_lea.sflag [#allocation4], 1
    %15 = vsyncpa %s14, 0
    %16 = vsyncpa [#allocation7], 0
    %17 = vsyncpa [#allocation5], 0
    %s18 = scalar_lea.sflag [#allocation5], 1
    %19 = vsyncpa %s18, 0
    loop: start=0, step=1, limit=4
    $region2: #{tpu_custom_call.1} parent=1 // loop_pre_header
      _
    $region3: #{tpu_custom_call.1} parent=1 // loop_header
      %s21 = sphi 0, %s25
      %p22 = scmp.ge.s32.totalorder %s21, 4
      %s31 = sphi 0, %s33
      %s34 = sphi 0, %s31
      %s35 = sphi 0, %s34
      %s51 = sphi 0, %s35
      %s55 = sphi 0, %s55
      %s57 = sphi 0, %s55
      %s58 = sphi 0, %s57
      %s72 = sphi 0, %s58
      %s76 = sphi 0, %s76
      %s78 = sphi 0, %s76
      %s79 = sphi 0, %s78
      %s93 = sphi 0, %s79
      %s97 = sphi 0, %s97
      %s99 = sphi 0, %s97
      %s100 = sphi 0, %s99
      %s114 = sphi 0, %s100
      %s118 = sphi 0, %s118
      %s120 = sphi 0, %s118
      %s121 = sphi 0, %s120
      %s135 = sphi 0, %s121
      %s139 = sphi 0, %s139
      %s141 = sphi 0, %s139
      %s142 = sphi 0, %s141
      %s156 = sphi 0, %s142
      %s160 = sphi 0, %s160
      %s162 = sphi 0, %s160
      %s163 = sphi 0, %s162
      %s177 = sphi 0, %s163
      %s183 = sphi 0, %s185
      %s186 = sphi 0, %s183
      %s187 = sphi 0, %s186
      %s203 = sphi 0, %s187
    $region4: #{tpu_custom_call.1} parent=1 // loop_header_branch
      %24 = sbr.rel (%p22) target = $region8
    $region5: #{tpu_custom_call.1} parent=1 // loop_body
      %s26 = ssub.s32 %s21, 1
      %s27 = ssub.s32 %s21, 2
      %s28 = sadd.s32 %s21, 1
      %s29 = ssub.s32 %s21, %s28
      %p30 = scmp.eq.s32.totalorder %s29, 0
      %s32 = sadd.s32 %s31, 1
      %s33 = scalar_select %p30, %s31, %s32
      %p36 = pneg %p30
      %p37 = scmp.eq.s32.totalorder %s21, 1
      %p38 = por %p36, %p37
      %p39 = scmp.ne.s32.totalorder %s31, %s34
      %p40 = scmp.eq.s32.totalorder %s21, 0
      %p41 = por %p39, %p40
      %p42 = scmp.ne.s32.totalorder %s31, %s34
      %p43 = scmp.eq.s32.totalorder %s26, 1
      %p44 = por %p42, %p43
      %p45 = scmp.ne.s32.totalorder %s34, %s35
      %p46 = scmp.eq.s32.totalorder %s26, 0
      %p47 = por %p45, %p46
      %p48 = scmp.ne.s32.totalorder %s34, %s35
      %p49 = scmp.eq.s32.totalorder %s27, 1
      %p50 = por %p48, %p49
      %p52 = scmp.ne.s32.totalorder %s35, %s51
      %p53 = scmp.eq.s32.totalorder %s27, 0
      %p54 = por %p52, %p53
      %s56 = sadd.s32 %s55, 1
      %p59 = scmp.eq.s32.totalorder %s21, 1
      %p60 = scmp.ne.s32.totalorder %s55, %s57
      %p61 = scmp.eq.s32.totalorder %s21, 0
      %p62 = por %p60, %p61
      %p63 = scmp.ne.s32.totalorder %s55, %s57
      %p64 = scmp.eq.s32.totalorder %s26, 1
      %p65 = por %p63, %p64
      %p66 = scmp.ne.s32.totalorder %s57, %s58
      %p67 = scmp.eq.s32.totalorder %s26, 0
      %p68 = por %p66, %p67
      %p69 = scmp.ne.s32.totalorder %s57, %s58
      %p70 = scmp.eq.s32.totalorder %s27, 1
      %p71 = por %p69, %p70
      %p73 = scmp.ne.s32.totalorder %s58, %s72
      %p74 = scmp.eq.s32.totalorder %s27, 0
      %p75 = por %p73, %p74
      %s77 = sadd.s32 %s76, 1
      %p80 = scmp.eq.s32.totalorder %s21, 1
      %p81 = scmp.ne.s32.totalorder %s76, %s78
      %p82 = scmp.eq.s32.totalorder %s21, 0
      %p83 = por %p81, %p82
      %p84 = scmp.ne.s32.totalorder %s76, %s78
      %p85 = scmp.eq.s32.totalorder %s26, 1
      %p86 = por %p84, %p85
      %p87 = scmp.ne.s32.totalorder %s78, %s79
      %p88 = scmp.eq.s32.totalorder %s26, 0
      %p89 = por %p87, %p88
      %p90 = scmp.ne.s32.totalorder %s78, %s79
      %p91 = scmp.eq.s32.totalorder %s27, 1
      %p92 = por %p90, %p91
      %p94 = scmp.ne.s32.totalorder %s79, %s93
      %p95 = scmp.eq.s32.totalorder %s27, 0
      %p96 = por %p94, %p95
      %s98 = sadd.s32 %s97, 1
      %p101 = scmp.eq.s32.totalorder %s21, 1
      %p102 = scmp.ne.s32.totalorder %s97, %s99
      %p103 = scmp.eq.s32.totalorder %s21, 0
      %p104 = por %p102, %p103
      %p105 = scmp.ne.s32.totalorder %s97, %s99
      %p106 = scmp.eq.s32.totalorder %s26, 1
      %p107 = por %p105, %p106
      %p108 = scmp.ne.s32.totalorder %s99, %s100
      %p109 = scmp.eq.s32.totalorder %s26, 0
      %p110 = por %p108, %p109
      %p111 = scmp.ne.s32.totalorder %s99, %s100
      %p112 = scmp.eq.s32.totalorder %s27, 1
      %p113 = por %p111, %p112
      %p115 = scmp.ne.s32.totalorder %s100, %s114
      %p116 = scmp.eq.s32.totalorder %s27, 0
      %p117 = por %p115, %p116
      %s119 = sadd.s32 %s118, 1
      %p122 = scmp.eq.s32.totalorder %s21, 1
      %p123 = scmp.ne.s32.totalorder %s118, %s120
      %p124 = scmp.eq.s32.totalorder %s21, 0
      %p125 = por %p123, %p124
      %p126 = scmp.ne.s32.totalorder %s118, %s120
      %p127 = scmp.eq.s32.totalorder %s26, 1
      %p128 = por %p126, %p127
      %p129 = scmp.ne.s32.totalorder %s120, %s121
      %p130 = scmp.eq.s32.totalorder %s26, 0
      %p131 = por %p129, %p130
      %p132 = scmp.ne.s32.totalorder %s120, %s121
      %p133 = scmp.eq.s32.totalorder %s27, 1
      %p134 = por %p132, %p133
      %p136 = scmp.ne.s32.totalorder %s121, %s135
      %p137 = scmp.eq.s32.totalorder %s27, 0
      %p138 = por %p136, %p137
      %s140 = sadd.s32 %s139, 1
      %p143 = scmp.eq.s32.totalorder %s21, 1
      %p144 = scmp.ne.s32.totalorder %s139, %s141
      %p145 = scmp.eq.s32.totalorder %s21, 0
      %p146 = por %p144, %p145
      %p147 = scmp.ne.s32.totalorder %s139, %s141
      %p148 = scmp.eq.s32.totalorder %s26, 1
      %p149 = por %p147, %p148
      %p150 = scmp.ne.s32.totalorder %s141, %s142
      %p151 = scmp.eq.s32.totalorder %s26, 0
      %p152 = por %p150, %p151
      %p153 = scmp.ne.s32.totalorder %s141, %s142
      %p154 = scmp.eq.s32.totalorder %s27, 1
      %p155 = por %p153, %p154
      %p157 = scmp.ne.s32.totalorder %s142, %s156
      %p158 = scmp.eq.s32.totalorder %s27, 0
      %p159 = por %p157, %p158
      %s161 = sadd.s32 %s160, 1
      %p164 = scmp.eq.s32.totalorder %s21, 1
      %p165 = scmp.ne.s32.totalorder %s160, %s162
      %p166 = scmp.eq.s32.totalorder %s21, 0
      %p167 = por %p165, %p166
      %p168 = scmp.ne.s32.totalorder %s160, %s162
      %p169 = scmp.eq.s32.totalorder %s26, 1
      %p170 = por %p168, %p169
      %p171 = scmp.ne.s32.totalorder %s162, %s163
      %p172 = scmp.eq.s32.totalorder %s26, 0
      %p173 = por %p171, %p172
      %p174 = scmp.ne.s32.totalorder %s162, %s163
      %p175 = scmp.eq.s32.totalorder %s27, 1
      %p176 = por %p174, %p175
      %p178 = scmp.ne.s32.totalorder %s163, %s177
      %p179 = scmp.eq.s32.totalorder %s27, 0
      %p180 = por %p178, %p179
      %s181 = ssub.s32 %s21, %s28
      %p182 = scmp.eq.s32.totalorder %s181, 0
      %s184 = sadd.s32 %s183, 1
      %s185 = scalar_select %p182, %s183, %s184
      %p188 = pneg %p182
      %p189 = scmp.eq.s32.totalorder %s21, 1
      %p190 = por %p188, %p189
      %p191 = scmp.ne.s32.totalorder %s183, %s186
      %p192 = scmp.eq.s32.totalorder %s21, 0
      %p193 = por %p191, %p192
      %p194 = scmp.ne.s32.totalorder %s183, %s186
      %p195 = scmp.eq.s32.totalorder %s26, 1
      %p196 = por %p194, %p195
      %p197 = scmp.ne.s32.totalorder %s186, %s187
      %p198 = scmp.eq.s32.totalorder %s26, 0
      %p199 = por %p197, %p198
      %p200 = scmp.ne.s32.totalorder %s186, %s187
      %p201 = scmp.eq.s32.totalorder %s27, 1
      %p202 = por %p200, %p201
      %p204 = scmp.ne.s32.totalorder %s187, %s203
      %p205 = scmp.eq.s32.totalorder %s27, 0
      %p206 = por %p204, %p205
      %p207 = scmp.le.s32.totalorder 1, %s21
      %p208 = scmp.lt.s32.totalorder %s21, 3
      %p209 = pnand %p207, %p208
      %p210 = pneg %p209
      // Predicated region
      $region9: #{tpu_custom_call.1} parent=5 // pred_check
        _
      $region10: #{tpu_custom_call.1} parent=5 // pred_check_branch
        %212 = sbr.rel (%p209) target = $region12
      $region11: #{tpu_custom_call.1} parent=5 // pred_region
        %s213 = ssub.s32 %s21, 1
        // Predicated region
        $region13: #{tpu_custom_call.1} parent=11 // pred_check
          %p214 = pneg %p68
        $region14: #{tpu_custom_call.1} parent=11 // pred_check_branch
          %216 = sbr.rel (%p214) target = $region16
        $region15: #{tpu_custom_call.1} parent=11 // pred_region
          %s218 = ssub.s32 28672, 28672
          %219 = vsyncadd [#allocation7], %s218
          %s220 = sshll.u32 [#allocation6], 4
          %s221 = int_to_ptr.vmem [resolvable:$true] %s220
          %226 = dma.hbm_to_vmem [thread:$0]  %s1, 28672, %s221, [#allocation7], 256, 256, 16
        $region16: #{tpu_custom_call.1} parent=11 // pred_fallthru
          _
        // Predicated region
        $region17: #{tpu_custom_call.1} parent=11 // pred_check
          %p227 = pneg %p89
        $region18: #{tpu_custom_call.1} parent=11 // pred_check_branch
          %229 = sbr.rel (%p227) target = $region20
        $region19: #{tpu_custom_call.1} parent=11 // pred_region
          _
        $region20: #{tpu_custom_call.1} parent=11 // pred_fallthru
          _
        // Predicated region
        $region21: #{tpu_custom_call.1} parent=11 // pred_check
          %p230 = pneg %p110
        $region22: #{tpu_custom_call.1} parent=11 // pred_check_branch
          %232 = sbr.rel (%p230) target = $region24
        $region23: #{tpu_custom_call.1} parent=11 // pred_region
          %s234 = ssub.s32 16384, 16384
          %235 = vsyncadd [#allocation7], %s234
          %s236 = sshll.u32 [#allocation8], 4
          %s237 = int_to_ptr.vmem [resolvable:$true] %s236
          %242 = dma.hbm_to_vmem [thread:$0]  %s3, 16384, %s237, [#allocation7], 256, 256, 16
        $region24: #{tpu_custom_call.1} parent=11 // pred_fallthru
          _
        // Predicated region
        $region25: #{tpu_custom_call.1} parent=11 // pred_check
          %p243 = pneg %p131
        $region26: #{tpu_custom_call.1} parent=11 // pred_check_branch
          %245 = sbr.rel (%p243) target = $region28
        $region27: #{tpu_custom_call.1} parent=11 // pred_region
          _
        $region28: #{tpu_custom_call.1} parent=11 // pred_fallthru
          _
        // Predicated region
        $region29: #{tpu_custom_call.1} parent=11 // pred_check
          %p246 = pneg %p152
        $region30: #{tpu_custom_call.1} parent=11 // pred_check_branch
          %248 = sbr.rel (%p246) target = $region32
        $region31: #{tpu_custom_call.1} parent=11 // pred_region
          _
        $region32: #{tpu_custom_call.1} parent=11 // pred_fallthru
          _
        // Predicated region
        $region33: #{tpu_custom_call.1} parent=11 // pred_check
          %p249 = pneg %p173
        $region34: #{tpu_custom_call.1} parent=11 // pred_check_branch
          %251 = sbr.rel (%p249) target = $region36
        $region35: #{tpu_custom_call.1} parent=11 // pred_region
          _
        $region36: #{tpu_custom_call.1} parent=11 // pred_fallthru
          _
      $region12: #{tpu_custom_call.1} parent=5 // pred_fallthru
        _
      %p252 = scmp.lt.s32.totalorder %s21, 2
      // Predicated region
      $region37: #{tpu_custom_call.1} parent=5 // pred_check
        %p253 = pneg %p252
      $region38: #{tpu_custom_call.1} parent=5 // pred_check_branch
        %255 = sbr.rel (%p253) target = $region40
      $region39: #{tpu_custom_call.1} parent=5 // pred_region
        // Predicated region
        $region41: #{tpu_custom_call.1} parent=39 // pred_check
          %p256 = pneg %p41
        $region42: #{tpu_custom_call.1} parent=39 // pred_check_branch
          %258 = sbr.rel (%p256) target = $region44
        $region43: #{tpu_custom_call.1} parent=39 // pred_region
          %s259 = sand.u32 %s31, 1
          %s260 = scalar_lea.sflag [#allocation4], %s259
          %s261 = sand.u32 %s31, 1
          %s262 = smul.addr %s261, 448
          %s263 = scalar_lea.vmem [#allocation3], %s262
          %s264 = smul.u32 16, %s21
          %s266 = ssub.s32 7168, 7168
          %267 = vsyncadd %s260, %s266
          %s268 = smul.addr %s264, 7
          %s269 = smul.addr %s268, 64
          %s270 = scalar_lea.hbm %s0, %s269
          %s271 = sshll.u32 %s263, 4
          %s272 = int_to_ptr.vmem [resolvable:$true] %s271
          %277 = dma.hbm_to_vmem [thread:$0]  %s270, 7168, %s272, %s260, 448, 448, 28
        $region44: #{tpu_custom_call.1} parent=39 // pred_fallthru
          _
      $region40: #{tpu_custom_call.1} parent=5 // pred_fallthru
        _
      %p278 = scmp.le.s32.totalorder 1, %s21
      %p279 = scmp.lt.s32.totalorder %s21, 3
      %p280 = pnand %p278, %p279
      %p281 = pneg %p280
      // Predicated region
      $region45: #{tpu_custom_call.1} parent=5 // pred_check
        _
      $region46: #{tpu_custom_call.1} parent=5 // pred_check_branch
        %283 = sbr.rel (%p280) target = $region48
      $region47: #{tpu_custom_call.1} parent=5 // pred_region
        %s284 = ssub.s32 %s21, 1
        %s285 = sand.u32 %s34, 1
        %s286 = scalar_lea.sflag [#allocation4], %s285
        %s287 = sand.u32 %s34, 1
        %s288 = smul.addr %s287, 448
        %s289 = scalar_lea.vmem [#allocation3], %s288
        // Predicated region
        $region49: #{tpu_custom_call.1} parent=47 // pred_check
          %p290 = pneg %p47
        $region50: #{tpu_custom_call.1} parent=47 // pred_check_branch
          %292 = sbr.rel (%p290) target = $region52
        $region51: #{tpu_custom_call.1} parent=47 // pred_region
          %293 = dma.done %s286, 7168
        $region52: #{tpu_custom_call.1} parent=47 // pred_fallthru
          _
        // Predicated region
        $region53: #{tpu_custom_call.1} parent=47 // pred_check
          %p294 = pneg %p68
        $region54: #{tpu_custom_call.1} parent=47 // pred_check_branch
          %296 = sbr.rel (%p294) target = $region56
        $region55: #{tpu_custom_call.1} parent=47 // pred_region
          %297 = dma.done [#allocation7], 28672
        $region56: #{tpu_custom_call.1} parent=47 // pred_fallthru
          _
        // Predicated region
        $region57: #{tpu_custom_call.1} parent=47 // pred_check
          %p298 = pneg %p110
        $region58: #{tpu_custom_call.1} parent=47 // pred_check_branch
          %300 = sbr.rel (%p298) target = $region60
        $region59: #{tpu_custom_call.1} parent=47 // pred_region
          %301 = dma.done [#allocation7], 16384
        $region60: #{tpu_custom_call.1} parent=47 // pred_fallthru
          _
        %s302 = sand.u32 %s34, 1
        %s303 = scalar_lea.sflag [#allocation4], %s302
        %s304 = sand.u32 %s34, 1
        %s305 = smul.addr %s304, 448
        %s306 = scalar_lea.vmem [#allocation3], %s305
        %p307 = pneg %p47
        %p308 = pneg %p44
        %p309 = pneg %p68
        %p310 = pneg %p65
        %p311 = pneg %p89
        %p312 = pneg %p86
        %p313 = pneg %p110
        %p314 = pneg %p107
        %p315 = pneg %p131
        %p316 = pneg %p128
        %p317 = pneg %p152
        %p318 = pneg %p149
        %p319 = pneg %p173
        %p320 = pneg %p170
        %p321 = pneg %p199
        %p322 = pneg %p196
        %s323 = sand.u32 %s186, 1
        %s324 = scalar_lea.sflag [#allocation5], %s323
        %s325 = sand.u32 %s186, 1
        %s326 = smul.addr %s325, 128
        %s327 = scalar_lea.vmem [#allocation9], %s326
        %s328 = smul.u32 16, %s26
        %s329 = smul.u32 16, %s26
        %v331 = vld [vmem:[%s289] sm:$0xff]
        %v332 = vld [vmem:[%s289 + $0x8] sm:$0xff]
        %v333 = vld [vmem:[%s289 + $0x10] sm:$0xff]
        %v334 = vld [vmem:[%s289 + $0x18] sm:$0xf]
        %v335 = vld [vmem:[%s289 + $0x1c] sm:$0xff]
        %v336 = vld [vmem:[%s289 + $0x24] sm:$0xff]
        %v337 = vld [vmem:[%s289 + $0x2c] sm:$0xff]
        %v338 = vld [vmem:[%s289 + $0x34] sm:$0xf]
        %v339 = vld [vmem:[%s289 + $0x38] sm:$0xff]
        %v340 = vld [vmem:[%s289 + $0x40] sm:$0xff]
        %v341 = vld [vmem:[%s289 + $0x48] sm:$0xff]
        %v342 = vld [vmem:[%s289 + $0x50] sm:$0xf]
        %v343 = vld [vmem:[%s289 + $0x54] sm:$0xff]
        %v344 = vld [vmem:[%s289 + $0x5c] sm:$0xff]
        %v345 = vld [vmem:[%s289 + $0x64] sm:$0xff]
        %v346 = vld [vmem:[%s289 + $0x6c] sm:$0xf]
        %v347 = vld [vmem:[%s289 + $0x70] sm:$0xff]
        %v348 = vld [vmem:[%s289 + $0x78] sm:$0xff]
        %v349 = vld [vmem:[%s289 + $0x80] sm:$0xff]
        %v350 = vld [vmem:[%s289 + $0x88] sm:$0xf]
        %v351 = vld [vmem:[%s289 + $0x8c] sm:$0xff]
        %v352 = vld [vmem:[%s289 + $0x94] sm:$0xff]
        %v353 = vld [vmem:[%s289 + $0x9c] sm:$0xff]
        %v354 = vld [vmem:[%s289 + $0xa4] sm:$0xf]
        %v355 = vld [vmem:[%s289 + $0xa8] sm:$0xff]
        %v356 = vld [vmem:[%s289 + $0xb0] sm:$0xff]
        %v357 = vld [vmem:[%s289 + $0xb8] sm:$0xff]
        %v358 = vld [vmem:[%s289 + $0xc0] sm:$0xf]
        %v359 = vld [vmem:[%s289 + $0xc4] sm:$0xff]
        %v360 = vld [vmem:[%s289 + $0xcc] sm:$0xff]
        %v361 = vld [vmem:[%s289 + $0xd4] sm:$0xff]
        %v362 = vld [vmem:[%s289 + $0xdc] sm:$0xf]
        %v363 = vld [vmem:[%s289 + $0xe0] sm:$0xff]
        %v364 = vld [vmem:[%s289 + $0xe8] sm:$0xff]
        %v365 = vld [vmem:[%s289 + $0xf0] sm:$0xff]
        %v366 = vld [vmem:[%s289 + $0xf8] sm:$0xf]
        %v367 = vld [vmem:[%s289 + $0xfc] sm:$0xff]
        %v368 = vld [vmem:[%s289 + $0x104] sm:$0xff]
        %v369 = vld [vmem:[%s289 + $0x10c] sm:$0xff]
        %v370 = vld [vmem:[%s289 + $0x114] sm:$0xf]
        %v371 = vld [vmem:[%s289 + $0x118] sm:$0xff]
        %v372 = vld [vmem:[%s289 + $0x120] sm:$0xff]
        %v373 = vld [vmem:[%s289 + $0x128] sm:$0xff]
        %v374 = vld [vmem:[%s289 + $0x130] sm:$0xf]
        %v375 = vld [vmem:[%s289 + $0x134] sm:$0xff]
        %v376 = vld [vmem:[%s289 + $0x13c] sm:$0xff]
        %v377 = vld [vmem:[%s289 + $0x144] sm:$0xff]
        %v378 = vld [vmem:[%s289 + $0x14c] sm:$0xf]
        %v379 = vld [vmem:[%s289 + $0x150] sm:$0xff]
        %v380 = vld [vmem:[%s289 + $0x158] sm:$0xff]
        %v381 = vld [vmem:[%s289 + $0x160] sm:$0xff]
        %v382 = vld [vmem:[%s289 + $0x168] sm:$0xf]
        %v383 = vld [vmem:[%s289 + $0x16c] sm:$0xff]
        %v384 = vld [vmem:[%s289 + $0x174] sm:$0xff]
        %v385 = vld [vmem:[%s289 + $0x17c] sm:$0xff]
        %v386 = vld [vmem:[%s289 + $0x184] sm:$0xf]
        %v387 = vld [vmem:[%s289 + $0x188] sm:$0xff]
        %v388 = vld [vmem:[%s289 + $0x190] sm:$0xff]
        %v389 = vld [vmem:[%s289 + $0x198] sm:$0xff]
        %v390 = vld [vmem:[%s289 + $0x1a0] sm:$0xf]
        %v391 = vld [vmem:[%s289 + $0x1a4] sm:$0xff]
        %v392 = vld [vmem:[%s289 + $0x1ac] sm:$0xff]
        %v393 = vld [vmem:[%s289 + $0x1b4] sm:$0xff]
        %v394 = vld [vmem:[%s289 + $0x1bc] sm:$0xf]
        %v395 = vld [vmem:[#allocation6] sm:$0xff]
        %v396 = vld [vmem:[#allocation6 + $0x8] sm:$0xff]
        %v397 = vld [vmem:[#allocation6 + $0x10] sm:$0xff]
        %v398 = vld [vmem:[#allocation6 + $0x18] sm:$0xff]
        %v399 = vld [vmem:[#allocation6 + $0x20] sm:$0xff]
        %v400 = vld [vmem:[#allocation6 + $0x28] sm:$0xff]
        %v401 = vld [vmem:[#allocation6 + $0x30] sm:$0xff]
        %v402 = vld [vmem:[#allocation6 + $0x38] sm:$0xff]
        %v403 = vld [vmem:[#allocation6 + $0x40] sm:$0xff]
        %v404 = vld [vmem:[#allocation6 + $0x48] sm:$0xff]
        %v405 = vld [vmem:[#allocation6 + $0x50] sm:$0xff]
        %v406 = vld [vmem:[#allocation6 + $0x58] sm:$0xff]
        %v407 = vld [vmem:[#allocation6 + $0x60] sm:$0xff]
        %v408 = vld [vmem:[#allocation6 + $0x68] sm:$0xff]
        %v409 = vld [vmem:[#allocation6 + $0x70] sm:$0xff]
        %v410 = vld [vmem:[#allocation6 + $0x78] sm:$0xff]
        %v411 = vld [vmem:[#allocation6 + $0x80] sm:$0xff]
        %v412 = vld [vmem:[#allocation6 + $0x88] sm:$0xff]
        %v413 = vld [vmem:[#allocation6 + $0x90] sm:$0xff]
        %v414 = vld [vmem:[#allocation6 + $0x98] sm:$0xff]
        %v415 = vld [vmem:[#allocation6 + $0xa0] sm:$0xff]
        %v416 = vld [vmem:[#allocation6 + $0xa8] sm:$0xff]
        %v417 = vld [vmem:[#allocation6 + $0xb0] sm:$0xff]
        %v418 = vld [vmem:[#allocation6 + $0xb8] sm:$0xff]
        %v419 = vld [vmem:[#allocation6 + $0xc0] sm:$0xff]
        %v420 = vld [vmem:[#allocation6 + $0xc8] sm:$0xff]
        %v421 = vld [vmem:[#allocation6 + $0xd0] sm:$0xff]
        %v422 = vld [vmem:[#allocation6 + $0xd8] sm:$0xff]
        %v423 = vld [vmem:[#allocation6 + $0xe0] sm:$0xff]
        %v424 = vld [vmem:[#allocation6 + $0xe8] sm:$0xff]
        %v425 = vld [vmem:[#allocation6 + $0xf0] sm:$0xff]
        %v426 = vld [vmem:[#allocation6 + $0xf8] sm:$0xff]
        %v427 = vld [vmem:[#allocation6 + $0x100] sm:$0xff]
        %v428 = vld [vmem:[#allocation6 + $0x108] sm:$0xff]
        %v429 = vld [vmem:[#allocation6 + $0x110] sm:$0xff]
        %v430 = vld [vmem:[#allocation6 + $0x118] sm:$0xff]
        %v431 = vld [vmem:[#allocation6 + $0x120] sm:$0xff]
        %v432 = vld [vmem:[#allocation6 + $0x128] sm:$0xff]
        %v433 = vld [vmem:[#allocation6 + $0x130] sm:$0xff]
        %v434 = vld [vmem:[#allocation6 + $0x138] sm:$0xff]
        %v435 = vld [vmem:[#allocation6 + $0x140] sm:$0xff]
        %v436 = vld [vmem:[#allocation6 + $0x148] sm:$0xff]
        %v437 = vld [vmem:[#allocation6 + $0x150] sm:$0xff]
        %v438 = vld [vmem:[#allocation6 + $0x158] sm:$0xff]
        %v439 = vld [vmem:[#allocation6 + $0x160] sm:$0xff]
        %v440 = vld [vmem:[#allocation6 + $0x168] sm:$0xff]
        %v441 = vld [vmem:[#allocation6 + $0x170] sm:$0xff]
        %v442 = vld [vmem:[#allocation6 + $0x178] sm:$0xff]
        %v443 = vld [vmem:[#allocation6 + $0x180] sm:$0xff]
        %v444 = vld [vmem:[#allocation6 + $0x188] sm:$0xff]
        %v445 = vld [vmem:[#allocation6 + $0x190] sm:$0xff]
        %v446 = vld [vmem:[#allocation6 + $0x198] sm:$0xff]
        %v447 = vld [vmem:[#allocation6 + $0x1a0] sm:$0xff]
        %v448 = vld [vmem:[#allocation6 + $0x1a8] sm:$0xff]
        %v449 = vld [vmem:[#allocation6 + $0x1b0] sm:$0xff]
        %v450 = vld [vmem:[#allocation6 + $0x1b8] sm:$0xff]
        %v451 = vld [vmem:[#allocation6 + $0x1c0] sm:$0xff]
        %v452 = vld [vmem:[#allocation6 + $0x1c8] sm:$0xff]
        %v453 = vld [vmem:[#allocation6 + $0x1d0] sm:$0xff]
        %v454 = vld [vmem:[#allocation6 + $0x1d8] sm:$0xff]
        %v455 = vld [vmem:[#allocation6 + $0x1e0] sm:$0xff]
        %v456 = vld [vmem:[#allocation6 + $0x1e8] sm:$0xff]
        %v457 = vld [vmem:[#allocation6 + $0x1f0] sm:$0xff]
        %v458 = vld [vmem:[#allocation6 + $0x1f8] sm:$0xff]
        %v459 = vld [vmem:[#allocation6 + $0x200] sm:$0xff]
        %v460 = vld [vmem:[#allocation6 + $0x208] sm:$0xff]
        %v461 = vld [vmem:[#allocation6 + $0x210] sm:$0xff]
        %v462 = vld [vmem:[#allocation6 + $0x218] sm:$0xff]
        %v463 = vld [vmem:[#allocation6 + $0x220] sm:$0xff]
        %v464 = vld [vmem:[#allocation6 + $0x228] sm:$0xff]
        %v465 = vld [vmem:[#allocation6 + $0x230] sm:$0xff]
        %v466 = vld [vmem:[#allocation6 + $0x238] sm:$0xff]
        %v467 = vld [vmem:[#allocation6 + $0x240] sm:$0xff]
        %v468 = vld [vmem:[#allocation6 + $0x248] sm:$0xff]
        %v469 = vld [vmem:[#allocation6 + $0x250] sm:$0xff]
        %v470 = vld [vmem:[#allocation6 + $0x258] sm:$0xff]
        %v471 = vld [vmem:[#allocation6 + $0x260] sm:$0xff]
        %v472 = vld [vmem:[#allocation6 + $0x268] sm:$0xff]
        %v473 = vld [vmem:[#allocation6 + $0x270] sm:$0xff]
        %v474 = vld [vmem:[#allocation6 + $0x278] sm:$0xff]
        %v475 = vld [vmem:[#allocation6 + $0x280] sm:$0xff]
        %v476 = vld [vmem:[#allocation6 + $0x288] sm:$0xff]
        %v477 = vld [vmem:[#allocation6 + $0x290] sm:$0xff]
        %v478 = vld [vmem:[#allocation6 + $0x298] sm:$0xff]
        %v479 = vld [vmem:[#allocation6 + $0x2a0] sm:$0xff]
        %v480 = vld [vmem:[#allocation6 + $0x2a8] sm:$0xff]
        %v481 = vld [vmem:[#allocation6 + $0x2b0] sm:$0xff]
        %v482 = vld [vmem:[#allocation6 + $0x2b8] sm:$0xff]
        %v483 = vld [vmem:[#allocation6 + $0x2c0] sm:$0xff]
        %v484 = vld [vmem:[#allocation6 + $0x2c8] sm:$0xff]
        %v485 = vld [vmem:[#allocation6 + $0x2d0] sm:$0xff]
        %v486 = vld [vmem:[#allocation6 + $0x2d8] sm:$0xff]
        %v487 = vld [vmem:[#allocation6 + $0x2e0] sm:$0xff]
        %v488 = vld [vmem:[#allocation6 + $0x2e8] sm:$0xff]
        %v489 = vld [vmem:[#allocation6 + $0x2f0] sm:$0xff]
        %v490 = vld [vmem:[#allocation6 + $0x2f8] sm:$0xff]
        %v491 = vld [vmem:[#allocation6 + $0x300] sm:$0xff]
        %v492 = vld [vmem:[#allocation6 + $0x308] sm:$0xff]
        %v493 = vld [vmem:[#allocation6 + $0x310] sm:$0xff]
        %v494 = vld [vmem:[#allocation6 + $0x318] sm:$0xff]
        %v495 = vld [vmem:[#allocation6 + $0x320] sm:$0xff]
        %v496 = vld [vmem:[#allocation6 + $0x328] sm:$0xff]
        %v497 = vld [vmem:[#allocation6 + $0x330] sm:$0xff]
        %v498 = vld [vmem:[#allocation6 + $0x338] sm:$0xff]
        %v499 = vld [vmem:[#allocation6 + $0x340] sm:$0xff]
        %v500 = vld [vmem:[#allocation6 + $0x348] sm:$0xff]
        %v501 = vld [vmem:[#allocation6 + $0x350] sm:$0xff]
        %v502 = vld [vmem:[#allocation6 + $0x358] sm:$0xff]
        %v503 = vld [vmem:[#allocation6 + $0x360] sm:$0xff]
        %v504 = vld [vmem:[#allocation6 + $0x368] sm:$0xff]
        %v505 = vld [vmem:[#allocation6 + $0x370] sm:$0xff]
        %v506 = vld [vmem:[#allocation6 + $0x378] sm:$0xff]
        %v507 = vld [vmem:[#allocation6 + $0x380] sm:$0xff]
        %v508 = vld [vmem:[#allocation6 + $0x388] sm:$0xff]
        %v509 = vld [vmem:[#allocation6 + $0x390] sm:$0xff]
        %v510 = vld [vmem:[#allocation6 + $0x398] sm:$0xff]
        %v511 = vld [vmem:[#allocation6 + $0x3a0] sm:$0xff]
        %v512 = vld [vmem:[#allocation6 + $0x3a8] sm:$0xff]
        %v513 = vld [vmem:[#allocation6 + $0x3b0] sm:$0xff]
        %v514 = vld [vmem:[#allocation6 + $0x3b8] sm:$0xff]
        %v515 = vld [vmem:[#allocation6 + $0x3c0] sm:$0xff]
        %v516 = vld [vmem:[#allocation6 + $0x3c8] sm:$0xff]
        %v517 = vld [vmem:[#allocation6 + $0x3d0] sm:$0xff]
        %v518 = vld [vmem:[#allocation6 + $0x3d8] sm:$0xff]
        %v519 = vld [vmem:[#allocation6 + $0x3e0] sm:$0xff]
        %v520 = vld [vmem:[#allocation6 + $0x3e8] sm:$0xff]
        %v521 = vld [vmem:[#allocation6 + $0x3f0] sm:$0xff]
        %v522 = vld [vmem:[#allocation6 + $0x3f8] sm:$0xff]
        %v523 = vld [vmem:[#allocation6 + $0x400] sm:$0xff]
        %v524 = vld [vmem:[#allocation6 + $0x408] sm:$0xff]
        %v525 = vld [vmem:[#allocation6 + $0x410] sm:$0xff]
        %v526 = vld [vmem:[#allocation6 + $0x418] sm:$0xff]
        %v527 = vld [vmem:[#allocation6 + $0x420] sm:$0xff]
        %v528 = vld [vmem:[#allocation6 + $0x428] sm:$0xff]
        %v529 = vld [vmem:[#allocation6 + $0x430] sm:$0xff]
        %v530 = vld [vmem:[#allocation6 + $0x438] sm:$0xff]
        %v531 = vld [vmem:[#allocation6 + $0x440] sm:$0xff]
        %v532 = vld [vmem:[#allocation6 + $0x448] sm:$0xff]
        %v533 = vld [vmem:[#allocation6 + $0x450] sm:$0xff]
        %v534 = vld [vmem:[#allocation6 + $0x458] sm:$0xff]
        %v535 = vld [vmem:[#allocation6 + $0x460] sm:$0xff]
        %v536 = vld [vmem:[#allocation6 + $0x468] sm:$0xff]
        %v537 = vld [vmem:[#allocation6 + $0x470] sm:$0xff]
        %v538 = vld [vmem:[#allocation6 + $0x478] sm:$0xff]
        %v539 = vld [vmem:[#allocation6 + $0x480] sm:$0xff]
        %v540 = vld [vmem:[#allocation6 + $0x488] sm:$0xff]
        %v541 = vld [vmem:[#allocation6 + $0x490] sm:$0xff]
        %v542 = vld [vmem:[#allocation6 + $0x498] sm:$0xff]
        %v543 = vld [vmem:[#allocation6 + $0x4a0] sm:$0xff]
        %v544 = vld [vmem:[#allocation6 + $0x4a8] sm:$0xff]
        %v545 = vld [vmem:[#allocation6 + $0x4b0] sm:$0xff]
        %v546 = vld [vmem:[#allocation6 + $0x4b8] sm:$0xff]
        %v547 = vld [vmem:[#allocation6 + $0x4c0] sm:$0xff]
        %v548 = vld [vmem:[#allocation6 + $0x4c8] sm:$0xff]
        %v549 = vld [vmem:[#allocation6 + $0x4d0] sm:$0xff]
        %v550 = vld [vmem:[#allocation6 + $0x4d8] sm:$0xff]
        %v551 = vld [vmem:[#allocation6 + $0x4e0] sm:$0xff]
        %v552 = vld [vmem:[#allocation6 + $0x4e8] sm:$0xff]
        %v553 = vld [vmem:[#allocation6 + $0x4f0] sm:$0xff]
        %v554 = vld [vmem:[#allocation6 + $0x4f8] sm:$0xff]
        %v555 = vld [vmem:[#allocation6 + $0x500] sm:$0xff]
        %v556 = vld [vmem:[#allocation6 + $0x508] sm:$0xff]
        %v557 = vld [vmem:[#allocation6 + $0x510] sm:$0xff]
        %v558 = vld [vmem:[#allocation6 + $0x518] sm:$0xff]
        %v559 = vld [vmem:[#allocation6 + $0x520] sm:$0xff]
        %v560 = vld [vmem:[#allocation6 + $0x528] sm:$0xff]
        %v561 = vld [vmem:[#allocation6 + $0x530] sm:$0xff]
        %v562 = vld [vmem:[#allocation6 + $0x538] sm:$0xff]
        %v563 = vld [vmem:[#allocation6 + $0x540] sm:$0xff]
        %v564 = vld [vmem:[#allocation6 + $0x548] sm:$0xff]
        %v565 = vld [vmem:[#allocation6 + $0x550] sm:$0xff]
        %v566 = vld [vmem:[#allocation6 + $0x558] sm:$0xff]
        %v567 = vld [vmem:[#allocation6 + $0x560] sm:$0xff]
        %v568 = vld [vmem:[#allocation6 + $0x568] sm:$0xff]
        %v569 = vld [vmem:[#allocation6 + $0x570] sm:$0xff]
        %v570 = vld [vmem:[#allocation6 + $0x578] sm:$0xff]
        %v571 = vld [vmem:[#allocation6 + $0x580] sm:$0xff]
        %v572 = vld [vmem:[#allocation6 + $0x588] sm:$0xff]
        %v573 = vld [vmem:[#allocation6 + $0x590] sm:$0xff]
        %v574 = vld [vmem:[#allocation6 + $0x598] sm:$0xff]
        %v575 = vld [vmem:[#allocation6 + $0x5a0] sm:$0xff]
        %v576 = vld [vmem:[#allocation6 + $0x5a8] sm:$0xff]
        %v577 = vld [vmem:[#allocation6 + $0x5b0] sm:$0xff]
        %v578 = vld [vmem:[#allocation6 + $0x5b8] sm:$0xff]
        %v579 = vld [vmem:[#allocation6 + $0x5c0] sm:$0xff]
        %v580 = vld [vmem:[#allocation6 + $0x5c8] sm:$0xff]
        %v581 = vld [vmem:[#allocation6 + $0x5d0] sm:$0xff]
        %v582 = vld [vmem:[#allocation6 + $0x5d8] sm:$0xff]
        %v583 = vld [vmem:[#allocation6 + $0x5e0] sm:$0xff]
        %v584 = vld [vmem:[#allocation6 + $0x5e8] sm:$0xff]
        %v585 = vld [vmem:[#allocation6 + $0x5f0] sm:$0xff]
        %v586 = vld [vmem:[#allocation6 + $0x5f8] sm:$0xff]
        %v587 = vld [vmem:[#allocation6 + $0x600] sm:$0xff]
        %v588 = vld [vmem:[#allocation6 + $0x608] sm:$0xff]
        %v589 = vld [vmem:[#allocation6 + $0x610] sm:$0xff]
        %v590 = vld [vmem:[#allocation6 + $0x618] sm:$0xff]
        %v591 = vld [vmem:[#allocation6 + $0x620] sm:$0xff]
        %v592 = vld [vmem:[#allocation6 + $0x628] sm:$0xff]
        %v593 = vld [vmem:[#allocation6 + $0x630] sm:$0xff]
        %v594 = vld [vmem:[#allocation6 + $0x638] sm:$0xff]
        %v595 = vld [vmem:[#allocation6 + $0x640] sm:$0xff]
        %v596 = vld [vmem:[#allocation6 + $0x648] sm:$0xff]
        %v597 = vld [vmem:[#allocation6 + $0x650] sm:$0xff]
        %v598 = vld [vmem:[#allocation6 + $0x658] sm:$0xff]
        %v599 = vld [vmem:[#allocation6 + $0x660] sm:$0xff]
        %v600 = vld [vmem:[#allocation6 + $0x668] sm:$0xff]
        %v601 = vld [vmem:[#allocation6 + $0x670] sm:$0xff]
        %v602 = vld [vmem:[#allocation6 + $0x678] sm:$0xff]
        %v603 = vld [vmem:[#allocation6 + $0x680] sm:$0xff]
        %v604 = vld [vmem:[#allocation6 + $0x688] sm:$0xff]
        %v605 = vld [vmem:[#allocation6 + $0x690] sm:$0xff]
        %v606 = vld [vmem:[#allocation6 + $0x698] sm:$0xff]
        %v607 = vld [vmem:[#allocation6 + $0x6a0] sm:$0xff]
        %v608 = vld [vmem:[#allocation6 + $0x6a8] sm:$0xff]
        %v609 = vld [vmem:[#allocation6 + $0x6b0] sm:$0xff]
        %v610 = vld [vmem:[#allocation6 + $0x6b8] sm:$0xff]
        %v611 = vld [vmem:[#allocation6 + $0x6c0] sm:$0xff]
        %v612 = vld [vmem:[#allocation6 + $0x6c8] sm:$0xff]
        %v613 = vld [vmem:[#allocation6 + $0x6d0] sm:$0xff]
        %v614 = vld [vmem:[#allocation6 + $0x6d8] sm:$0xff]
        %v615 = vld [vmem:[#allocation6 + $0x6e0] sm:$0xff]
        %v616 = vld [vmem:[#allocation6 + $0x6e8] sm:$0xff]
        %v617 = vld [vmem:[#allocation6 + $0x6f0] sm:$0xff]
        %v618 = vld [vmem:[#allocation6 + $0x6f8] sm:$0xff]
        %v619 = vld [vmem:[%s2] sm:$0xf]
        %v621 = vlaneseq
        %v622 = vshrl.u32 %v621, 7
        %v623 = vsub.s32 0, %v622
        %v624 = vrot.slane %v619, %v623
        %v625 = vlaneseq
        %v626 = vshrl.u32 %v625, 7
        %v627 = vsub.s32 1, %v626
        %v628 = vrot.slane %v619, %v627
        %v629 = vlaneseq
        %v630 = vshrl.u32 %v629, 7
        %v631 = vsub.s32 2, %v630
        %v632 = vrot.slane %v619, %v631
        %v633 = vlaneseq
        %v634 = vshrl.u32 %v633, 7
        %v635 = vsub.s32 3, %v634
        %v636 = vrot.slane %v619, %v635
        %v705 = vunpack.c.l.b16 %v331
        %v706 = vunpack.c.h.b16 %v331
        %v707 = vunpack.c.l.b16 %v332
        %v708 = vunpack.c.h.b16 %v332
        %v709 = vunpack.c.l.b16 %v333
        %v710 = vunpack.c.h.b16 %v333
        %v711 = vunpack.c.l.b16 %v334
        %v712 = vunpack.c.l.b16 %v335
        %v713 = vunpack.c.h.b16 %v335
        %v714 = vunpack.c.l.b16 %v336
        %v715 = vunpack.c.h.b16 %v336
        %v716 = vunpack.c.l.b16 %v337
        %v717 = vunpack.c.h.b16 %v337
        %v718 = vunpack.c.l.b16 %v338
        %v719 = vunpack.c.l.b16 %v339
        %v720 = vunpack.c.h.b16 %v339
        %v721 = vunpack.c.l.b16 %v340
        %v722 = vunpack.c.h.b16 %v340
        %v723 = vunpack.c.l.b16 %v341
        %v724 = vunpack.c.h.b16 %v341
        %v725 = vunpack.c.l.b16 %v342
        %v726 = vunpack.c.l.b16 %v343
        %v727 = vunpack.c.h.b16 %v343
        %v728 = vunpack.c.l.b16 %v344
        %v729 = vunpack.c.h.b16 %v344
        %v730 = vunpack.c.l.b16 %v345
        %v731 = vunpack.c.h.b16 %v345
        %v732 = vunpack.c.l.b16 %v346
        %v733 = vunpack.c.l.b16 %v347
        %v734 = vunpack.c.h.b16 %v347
        %v735 = vunpack.c.l.b16 %v348
        %v736 = vunpack.c.h.b16 %v348
        %v737 = vunpack.c.l.b16 %v349
        %v738 = vunpack.c.h.b16 %v349
        %v739 = vunpack.c.l.b16 %v350
        %v740 = vunpack.c.l.b16 %v351
        %v741 = vunpack.c.h.b16 %v351
        %v742 = vunpack.c.l.b16 %v352
        %v743 = vunpack.c.h.b16 %v352
        %v744 = vunpack.c.l.b16 %v353
        %v745 = vunpack.c.h.b16 %v353
        %v746 = vunpack.c.l.b16 %v354
        %v747 = vunpack.c.l.b16 %v355
        %v748 = vunpack.c.h.b16 %v355
        %v749 = vunpack.c.l.b16 %v356
        %v750 = vunpack.c.h.b16 %v356
        %v751 = vunpack.c.l.b16 %v357
        %v752 = vunpack.c.h.b16 %v357
        %v753 = vunpack.c.l.b16 %v358
        %v754 = vunpack.c.l.b16 %v359
        %v755 = vunpack.c.h.b16 %v359
        %v756 = vunpack.c.l.b16 %v360
        %v757 = vunpack.c.h.b16 %v360
        %v758 = vunpack.c.l.b16 %v361
        %v759 = vunpack.c.h.b16 %v361
        %v760 = vunpack.c.l.b16 %v362
        %v761 = vunpack.c.l.b16 %v363
        %v762 = vunpack.c.h.b16 %v363
        %v763 = vunpack.c.l.b16 %v364
        %v764 = vunpack.c.h.b16 %v364
        %v765 = vunpack.c.l.b16 %v365
        %v766 = vunpack.c.h.b16 %v365
        %v767 = vunpack.c.l.b16 %v366
        %v768 = vunpack.c.l.b16 %v367
        %v769 = vunpack.c.h.b16 %v367
        %v770 = vunpack.c.l.b16 %v368
        %v771 = vunpack.c.h.b16 %v368
        %v772 = vunpack.c.l.b16 %v369
        %v773 = vunpack.c.h.b16 %v369
        %v774 = vunpack.c.l.b16 %v370
        %v775 = vunpack.c.l.b16 %v371
        %v776 = vunpack.c.h.b16 %v371
        %v777 = vunpack.c.l.b16 %v372
        %v778 = vunpack.c.h.b16 %v372
        %v779 = vunpack.c.l.b16 %v373
        %v780 = vunpack.c.h.b16 %v373
        %v781 = vunpack.c.l.b16 %v374
        %v782 = vunpack.c.l.b16 %v375
        %v783 = vunpack.c.h.b16 %v375
        %v784 = vunpack.c.l.b16 %v376
        %v785 = vunpack.c.h.b16 %v376
        %v786 = vunpack.c.l.b16 %v377
        %v787 = vunpack.c.h.b16 %v377
        %v788 = vunpack.c.l.b16 %v378
        %v789 = vunpack.c.l.b16 %v379
        %v790 = vunpack.c.h.b16 %v379
        %v791 = vunpack.c.l.b16 %v380
        %v792 = vunpack.c.h.b16 %v380
        %v793 = vunpack.c.l.b16 %v381
        %v794 = vunpack.c.h.b16 %v381
        %v795 = vunpack.c.l.b16 %v382
        %v796 = vunpack.c.l.b16 %v383
        %v797 = vunpack.c.h.b16 %v383
        %v798 = vunpack.c.l.b16 %v384
        %v799 = vunpack.c.h.b16 %v384
        %v800 = vunpack.c.l.b16 %v385
        %v801 = vunpack.c.h.b16 %v385
        %v802 = vunpack.c.l.b16 %v386
        %v803 = vunpack.c.l.b16 %v387
        %v804 = vunpack.c.h.b16 %v387
        %v805 = vunpack.c.l.b16 %v388
        %v806 = vunpack.c.h.b16 %v388
        %v807 = vunpack.c.l.b16 %v389
        %v808 = vunpack.c.h.b16 %v389
        %v809 = vunpack.c.l.b16 %v390
        %v810 = vunpack.c.l.b16 %v391
        %v811 = vunpack.c.h.b16 %v391
        %v812 = vunpack.c.l.b16 %v392
        %v813 = vunpack.c.h.b16 %v392
        %v814 = vunpack.c.l.b16 %v393
        %v815 = vunpack.c.h.b16 %v393
        %v816 = vunpack.c.l.b16 %v394
        %v817 = vpack.c.b16 %v712, %v705
        %v818 = vpack.c.b16 %v713, %v706
        %v819 = vpack.c.b16 %v714, %v707
        %v820 = vpack.c.b16 %v715, %v708
        %v821 = vpack.c.b16 %v716, %v709
        %v822 = vpack.c.b16 %v717, %v710
        %v823 = vpack.c.b16 %v718, %v711
        %v824 = vpack.c.b16 %v726, %v719
        %v825 = vpack.c.b16 %v727, %v720
        %v826 = vpack.c.b16 %v728, %v721
        %v827 = vpack.c.b16 %v729, %v722
        %v828 = vpack.c.b16 %v730, %v723
        %v829 = vpack.c.b16 %v731, %v724
        %v830 = vpack.c.b16 %v732, %v725
        %v831 = vpack.c.b16 %v740, %v733
        %v832 = vpack.c.b16 %v741, %v734
        %v833 = vpack.c.b16 %v742, %v735
        %v834 = vpack.c.b16 %v743, %v736
        %v835 = vpack.c.b16 %v744, %v737
        %v836 = vpack.c.b16 %v745, %v738
        %v837 = vpack.c.b16 %v746, %v739
        %v838 = vpack.c.b16 %v754, %v747
        %v839 = vpack.c.b16 %v755, %v748
        %v840 = vpack.c.b16 %v756, %v749
        %v841 = vpack.c.b16 %v757, %v750
        %v842 = vpack.c.b16 %v758, %v751
        %v843 = vpack.c.b16 %v759, %v752
        %v844 = vpack.c.b16 %v760, %v753
        %v845 = vpack.c.b16 %v768, %v761
        %v846 = vpack.c.b16 %v769, %v762
        %v847 = vpack.c.b16 %v770, %v763
        %v848 = vpack.c.b16 %v771, %v764
        %v849 = vpack.c.b16 %v772, %v765
        %v850 = vpack.c.b16 %v773, %v766
        %v851 = vpack.c.b16 %v774, %v767
        %v852 = vpack.c.b16 %v782, %v775
        %v853 = vpack.c.b16 %v783, %v776
        %v854 = vpack.c.b16 %v784, %v777
        %v855 = vpack.c.b16 %v785, %v778
        %v856 = vpack.c.b16 %v786, %v779
        %v857 = vpack.c.b16 %v787, %v780
        %v858 = vpack.c.b16 %v788, %v781
        %v859 = vpack.c.b16 %v796, %v789
        %v860 = vpack.c.b16 %v797, %v790
        %v861 = vpack.c.b16 %v798, %v791
        %v862 = vpack.c.b16 %v799, %v792
        %v863 = vpack.c.b16 %v800, %v793
        %v864 = vpack.c.b16 %v801, %v794
        %v865 = vpack.c.b16 %v802, %v795
        %v866 = vpack.c.b16 %v810, %v803
        %v867 = vpack.c.b16 %v811, %v804
        %v868 = vpack.c.b16 %v812, %v805
        %v869 = vpack.c.b16 %v813, %v806
        %v870 = vpack.c.b16 %v814, %v807
        %v871 = vpack.c.b16 %v815, %v808
        %v872 = vpack.c.b16 %v816, %v809
        %v1153 = vunpack.c.l.b16 %v395
        %v1154 = vunpack.c.h.b16 %v395
        %v1155 = vunpack.c.l.b16 %v396
        %v1156 = vunpack.c.h.b16 %v396
        %v1157 = vunpack.c.l.b16 %v397
        %v1158 = vunpack.c.h.b16 %v397
        %v1159 = vunpack.c.l.b16 %v398
        %v1160 = vunpack.c.h.b16 %v398
        %v1161 = vunpack.c.l.b16 %v399
        %v1162 = vunpack.c.h.b16 %v399
        %v1163 = vunpack.c.l.b16 %v400
        %v1164 = vunpack.c.h.b16 %v400
        %v1165 = vunpack.c.l.b16 %v401
        %v1166 = vunpack.c.h.b16 %v401
        %v1167 = vunpack.c.l.b16 %v402
        %v1168 = vunpack.c.h.b16 %v402
        %v1169 = vunpack.c.l.b16 %v403
        %v1170 = vunpack.c.h.b16 %v403
        %v1171 = vunpack.c.l.b16 %v404
        %v1172 = vunpack.c.h.b16 %v404
        %v1173 = vunpack.c.l.b16 %v405
        %v1174 = vunpack.c.h.b16 %v405
        %v1175 = vunpack.c.l.b16 %v406
        %v1176 = vunpack.c.h.b16 %v406
        %v1177 = vunpack.c.l.b16 %v407
        %v1178 = vunpack.c.h.b16 %v407
        %v1179 = vunpack.c.l.b16 %v408
        %v1180 = vunpack.c.h.b16 %v408
        %v1181 = vunpack.c.l.b16 %v409
        %v1182 = vunpack.c.h.b16 %v409
        %v1183 = vunpack.c.l.b16 %v410
        %v1184 = vunpack.c.h.b16 %v410
        %v1185 = vunpack.c.l.b16 %v411
        %v1186 = vunpack.c.h.b16 %v411
        %v1187 = vunpack.c.l.b16 %v412
        %v1188 = vunpack.c.h.b16 %v412
        %v1189 = vunpack.c.l.b16 %v413
        %v1190 = vunpack.c.h.b16 %v413
        %v1191 = vunpack.c.l.b16 %v414
        %v1192 = vunpack.c.h.b16 %v414
        %v1193 = vunpack.c.l.b16 %v415
        %v1194 = vunpack.c.h.b16 %v415
        %v1195 = vunpack.c.l.b16 %v416
        %v1196 = vunpack.c.h.b16 %v416
        %v1197 = vunpack.c.l.b16 %v417
        %v1198 = vunpack.c.h.b16 %v417
        %v1199 = vunpack.c.l.b16 %v418
        %v1200 = vunpack.c.h.b16 %v418
        %v1201 = vunpack.c.l.b16 %v419
        %v1202 = vunpack.c.h.b16 %v419
        %v1203 = vunpack.c.l.b16 %v420
        %v1204 = vunpack.c.h.b16 %v420
        %v1205 = vunpack.c.l.b16 %v421
        %v1206 = vunpack.c.h.b16 %v421
        %v1207 = vunpack.c.l.b16 %v422
        %v1208 = vunpack.c.h.b16 %v422
        %v1209 = vunpack.c.l.b16 %v423
        %v1210 = vunpack.c.h.b16 %v423
        %v1211 = vunpack.c.l.b16 %v424
        %v1212 = vunpack.c.h.b16 %v424
        %v1213 = vunpack.c.l.b16 %v425
        %v1214 = vunpack.c.h.b16 %v425
        %v1215 = vunpack.c.l.b16 %v426
        %v1216 = vunpack.c.h.b16 %v426
        %v1217 = vunpack.c.l.b16 %v427
        %v1218 = vunpack.c.h.b16 %v427
        %v1219 = vunpack.c.l.b16 %v428
        %v1220 = vunpack.c.h.b16 %v428
        %v1221 = vunpack.c.l.b16 %v429
        %v1222 = vunpack.c.h.b16 %v429
        %v1223 = vunpack.c.l.b16 %v430
        %v1224 = vunpack.c.h.b16 %v430
        %v1225 = vunpack.c.l.b16 %v431
        %v1226 = vunpack.c.h.b16 %v431
        %v1227 = vunpack.c.l.b16 %v432
        %v1228 = vunpack.c.h.b16 %v432
        %v1229 = vunpack.c.l.b16 %v433
        %v1230 = vunpack.c.h.b16 %v433
        %v1231 = vunpack.c.l.b16 %v434
        %v1232 = vunpack.c.h.b16 %v434
        %v1233 = vunpack.c.l.b16 %v435
        %v1234 = vunpack.c.h.b16 %v435
        %v1235 = vunpack.c.l.b16 %v436
        %v1236 = vunpack.c.h.b16 %v436
        %v1237 = vunpack.c.l.b16 %v437
        %v1238 = vunpack.c.h.b16 %v437
        %v1239 = vunpack.c.l.b16 %v438
        %v1240 = vunpack.c.h.b16 %v438
        %v1241 = vunpack.c.l.b16 %v439
        %v1242 = vunpack.c.h.b16 %v439
        %v1243 = vunpack.c.l.b16 %v440
        %v1244 = vunpack.c.h.b16 %v440
        %v1245 = vunpack.c.l.b16 %v441
        %v1246 = vunpack.c.h.b16 %v441
        %v1247 = vunpack.c.l.b16 %v442
        %v1248 = vunpack.c.h.b16 %v442
        %v1249 = vunpack.c.l.b16 %v443
        %v1250 = vunpack.c.h.b16 %v443
        %v1251 = vunpack.c.l.b16 %v444
        %v1252 = vunpack.c.h.b16 %v444
        %v1253 = vunpack.c.l.b16 %v445
        %v1254 = vunpack.c.h.b16 %v445
        %v1255 = vunpack.c.l.b16 %v446
        %v1256 = vunpack.c.h.b16 %v446
        %v1257 = vunpack.c.l.b16 %v447
        %v1258 = vunpack.c.h.b16 %v447
        %v1259 = vunpack.c.l.b16 %v448
        %v1260 = vunpack.c.h.b16 %v448
        %v1261 = vunpack.c.l.b16 %v449
        %v1262 = vunpack.c.h.b16 %v449
        %v1263 = vunpack.c.l.b16 %v450
        %v1264 = vunpack.c.h.b16 %v450
        %v1265 = vunpack.c.l.b16 %v451
        %v1266 = vunpack.c.h.b16 %v451
        %v1267 = vunpack.c.l.b16 %v452
        %v1268 = vunpack.c.h.b16 %v452
        %v1269 = vunpack.c.l.b16 %v453
        %v1270 = vunpack.c.h.b16 %v453
        %v1271 = vunpack.c.l.b16 %v454
        %v1272 = vunpack.c.h.b16 %v454
        %v1273 = vunpack.c.l.b16 %v455
        %v1274 = vunpack.c.h.b16 %v455
        %v1275 = vunpack.c.l.b16 %v456
        %v1276 = vunpack.c.h.b16 %v456
        %v1277 = vunpack.c.l.b16 %v457
        %v1278 = vunpack.c.h.b16 %v457
        %v1279 = vunpack.c.l.b16 %v458
        %v1280 = vunpack.c.h.b16 %v458
        %v1281 = vunpack.c.l.b16 %v459
        %v1282 = vunpack.c.h.b16 %v459
        %v1283 = vunpack.c.l.b16 %v460
        %v1284 = vunpack.c.h.b16 %v460
        %v1285 = vunpack.c.l.b16 %v461
        %v1286 = vunpack.c.h.b16 %v461
        %v1287 = vunpack.c.l.b16 %v462
        %v1288 = vunpack.c.h.b16 %v462
        %v1289 = vunpack.c.l.b16 %v463
        %v1290 = vunpack.c.h.b16 %v463
        %v1291 = vunpack.c.l.b16 %v464
        %v1292 = vunpack.c.h.b16 %v464
        %v1293 = vunpack.c.l.b16 %v465
        %v1294 = vunpack.c.h.b16 %v465
        %v1295 = vunpack.c.l.b16 %v466
        %v1296 = vunpack.c.h.b16 %v466
        %v1297 = vunpack.c.l.b16 %v467
        %v1298 = vunpack.c.h.b16 %v467
        %v1299 = vunpack.c.l.b16 %v468
        %v1300 = vunpack.c.h.b16 %v468
        %v1301 = vunpack.c.l.b16 %v469
        %v1302 = vunpack.c.h.b16 %v469
        %v1303 = vunpack.c.l.b16 %v470
        %v1304 = vunpack.c.h.b16 %v470
        %v1305 = vunpack.c.l.b16 %v471
        %v1306 = vunpack.c.h.b16 %v471
        %v1307 = vunpack.c.l.b16 %v472
        %v1308 = vunpack.c.h.b16 %v472
        %v1309 = vunpack.c.l.b16 %v473
        %v1310 = vunpack.c.h.b16 %v473
        %v1311 = vunpack.c.l.b16 %v474
        %v1312 = vunpack.c.h.b16 %v474
        %v1313 = vunpack.c.l.b16 %v475
        %v1314 = vunpack.c.h.b16 %v475
        %v1315 = vunpack.c.l.b16 %v476
        %v1316 = vunpack.c.h.b16 %v476
        %v1317 = vunpack.c.l.b16 %v477
        %v1318 = vunpack.c.h.b16 %v477
        %v1319 = vunpack.c.l.b16 %v478
        %v1320 = vunpack.c.h.b16 %v478
        %v1321 = vunpack.c.l.b16 %v479
        %v1322 = vunpack.c.h.b16 %v479
        %v1323 = vunpack.c.l.b16 %v480
        %v1324 = vunpack.c.h.b16 %v480
        %v1325 = vunpack.c.l.b16 %v481
        %v1326 = vunpack.c.h.b16 %v481
        %v1327 = vunpack.c.l.b16 %v482
        %v1328 = vunpack.c.h.b16 %v482
        %v1329 = vunpack.c.l.b16 %v483
        %v1330 = vunpack.c.h.b16 %v483
        %v1331 = vunpack.c.l.b16 %v484
        %v1332 = vunpack.c.h.b16 %v484
        %v1333 = vunpack.c.l.b16 %v485
        %v1334 = vunpack.c.h.b16 %v485
        %v1335 = vunpack.c.l.b16 %v486
        %v1336 = vunpack.c.h.b16 %v486
        %v1337 = vunpack.c.l.b16 %v487
        %v1338 = vunpack.c.h.b16 %v487
        %v1339 = vunpack.c.l.b16 %v488
        %v1340 = vunpack.c.h.b16 %v488
        %v1341 = vunpack.c.l.b16 %v489
        %v1342 = vunpack.c.h.b16 %v489
        %v1343 = vunpack.c.l.b16 %v490
        %v1344 = vunpack.c.h.b16 %v490
        %v1345 = vunpack.c.l.b16 %v491
        %v1346 = vunpack.c.h.b16 %v491
        %v1347 = vunpack.c.l.b16 %v492
        %v1348 = vunpack.c.h.b16 %v492
        %v1349 = vunpack.c.l.b16 %v493
        %v1350 = vunpack.c.h.b16 %v493
        %v1351 = vunpack.c.l.b16 %v494
        %v1352 = vunpack.c.h.b16 %v494
        %v1353 = vunpack.c.l.b16 %v495
        %v1354 = vunpack.c.h.b16 %v495
        %v1355 = vunpack.c.l.b16 %v496
        %v1356 = vunpack.c.h.b16 %v496
        %v1357 = vunpack.c.l.b16 %v497
        %v1358 = vunpack.c.h.b16 %v497
        %v1359 = vunpack.c.l.b16 %v498
        %v1360 = vunpack.c.h.b16 %v498
        %v1361 = vunpack.c.l.b16 %v499
        %v1362 = vunpack.c.h.b16 %v499
        %v1363 = vunpack.c.l.b16 %v500
        %v1364 = vunpack.c.h.b16 %v500
        %v1365 = vunpack.c.l.b16 %v501
        %v1366 = vunpack.c.h.b16 %v501
        %v1367 = vunpack.c.l.b16 %v502
        %v1368 = vunpack.c.h.b16 %v502
        %v1369 = vunpack.c.l.b16 %v503
        %v1370 = vunpack.c.h.b16 %v503
        %v1371 = vunpack.c.l.b16 %v504
        %v1372 = vunpack.c.h.b16 %v504
        %v1373 = vunpack.c.l.b16 %v505
        %v1374 = vunpack.c.h.b16 %v505
        %v1375 = vunpack.c.l.b16 %v506
        %v1376 = vunpack.c.h.b16 %v506
        %v1377 = vunpack.c.l.b16 %v507
        %v1378 = vunpack.c.h.b16 %v507
        %v1379 = vunpack.c.l.b16 %v508
        %v1380 = vunpack.c.h.b16 %v508
        %v1381 = vunpack.c.l.b16 %v509
        %v1382 = vunpack.c.h.b16 %v509
        %v1383 = vunpack.c.l.b16 %v510
        %v1384 = vunpack.c.h.b16 %v510
        %v1385 = vunpack.c.l.b16 %v511
        %v1386 = vunpack.c.h.b16 %v511
        %v1387 = vunpack.c.l.b16 %v512
        %v1388 = vunpack.c.h.b16 %v512
        %v1389 = vunpack.c.l.b16 %v513
        %v1390 = vunpack.c.h.b16 %v513
        %v1391 = vunpack.c.l.b16 %v514
        %v1392 = vunpack.c.h.b16 %v514
        %v1393 = vunpack.c.l.b16 %v515
        %v1394 = vunpack.c.h.b16 %v515
        %v1395 = vunpack.c.l.b16 %v516
        %v1396 = vunpack.c.h.b16 %v516
        %v1397 = vunpack.c.l.b16 %v517
        %v1398 = vunpack.c.h.b16 %v517
        %v1399 = vunpack.c.l.b16 %v518
        %v1400 = vunpack.c.h.b16 %v518
        %v1401 = vunpack.c.l.b16 %v519
        %v1402 = vunpack.c.h.b16 %v519
        %v1403 = vunpack.c.l.b16 %v520
        %v1404 = vunpack.c.h.b16 %v520
        %v1405 = vunpack.c.l.b16 %v521
        %v1406 = vunpack.c.h.b16 %v521
        %v1407 = vunpack.c.l.b16 %v522
        %v1408 = vunpack.c.h.b16 %v522
        %v1409 = vunpack.c.l.b16 %v523
        %v1410 = vunpack.c.h.b16 %v523
        %v1411 = vunpack.c.l.b16 %v524
        %v1412 = vunpack.c.h.b16 %v524
        %v1413 = vunpack.c.l.b16 %v525
        %v1414 = vunpack.c.h.b16 %v525
        %v1415 = vunpack.c.l.b16 %v526
        %v1416 = vunpack.c.h.b16 %v526
        %v1417 = vunpack.c.l.b16 %v527
        %v1418 = vunpack.c.h.b16 %v527
        %v1419 = vunpack.c.l.b16 %v528
        %v1420 = vunpack.c.h.b16 %v528
        %v1421 = vunpack.c.l.b16 %v529
        %v1422 = vunpack.c.h.b16 %v529
        %v1423 = vunpack.c.l.b16 %v530
        %v1424 = vunpack.c.h.b16 %v530
        %v1425 = vunpack.c.l.b16 %v531
        %v1426 = vunpack.c.h.b16 %v531
        %v1427 = vunpack.c.l.b16 %v532
        %v1428 = vunpack.c.h.b16 %v532
        %v1429 = vunpack.c.l.b16 %v533
        %v1430 = vunpack.c.h.b16 %v533
        %v1431 = vunpack.c.l.b16 %v534
        %v1432 = vunpack.c.h.b16 %v534
        %v1433 = vunpack.c.l.b16 %v535
        %v1434 = vunpack.c.h.b16 %v535
        %v1435 = vunpack.c.l.b16 %v536
        %v1436 = vunpack.c.h.b16 %v536
        %v1437 = vunpack.c.l.b16 %v537
        %v1438 = vunpack.c.h.b16 %v537
        %v1439 = vunpack.c.l.b16 %v538
        %v1440 = vunpack.c.h.b16 %v538
        %v1441 = vunpack.c.l.b16 %v539
        %v1442 = vunpack.c.h.b16 %v539
        %v1443 = vunpack.c.l.b16 %v540
        %v1444 = vunpack.c.h.b16 %v540
        %v1445 = vunpack.c.l.b16 %v541
        %v1446 = vunpack.c.h.b16 %v541
        %v1447 = vunpack.c.l.b16 %v542
        %v1448 = vunpack.c.h.b16 %v542
        %v1449 = vunpack.c.l.b16 %v543
        %v1450 = vunpack.c.h.b16 %v543
        %v1451 = vunpack.c.l.b16 %v544
        %v1452 = vunpack.c.h.b16 %v544
        %v1453 = vunpack.c.l.b16 %v545
        %v1454 = vunpack.c.h.b16 %v545
        %v1455 = vunpack.c.l.b16 %v546
        %v1456 = vunpack.c.h.b16 %v546
        %v1457 = vunpack.c.l.b16 %v547
        %v1458 = vunpack.c.h.b16 %v547
        %v1459 = vunpack.c.l.b16 %v548
        %v1460 = vunpack.c.h.b16 %v548
        %v1461 = vunpack.c.l.b16 %v549
        %v1462 = vunpack.c.h.b16 %v549
        %v1463 = vunpack.c.l.b16 %v550
        %v1464 = vunpack.c.h.b16 %v550
        %v1465 = vunpack.c.l.b16 %v551
        %v1466 = vunpack.c.h.b16 %v551
        %v1467 = vunpack.c.l.b16 %v552
        %v1468 = vunpack.c.h.b16 %v552
        %v1469 = vunpack.c.l.b16 %v553
        %v1470 = vunpack.c.h.b16 %v553
        %v1471 = vunpack.c.l.b16 %v554
        %v1472 = vunpack.c.h.b16 %v554
        %v1473 = vunpack.c.l.b16 %v555
        %v1474 = vunpack.c.h.b16 %v555
        %v1475 = vunpack.c.l.b16 %v556
        %v1476 = vunpack.c.h.b16 %v556
        %v1477 = vunpack.c.l.b16 %v557
        %v1478 = vunpack.c.h.b16 %v557
        %v1479 = vunpack.c.l.b16 %v558
        %v1480 = vunpack.c.h.b16 %v558
        %v1481 = vunpack.c.l.b16 %v559
        %v1482 = vunpack.c.h.b16 %v559
        %v1483 = vunpack.c.l.b16 %v560
        %v1484 = vunpack.c.h.b16 %v560
        %v1485 = vunpack.c.l.b16 %v561
        %v1486 = vunpack.c.h.b16 %v561
        %v1487 = vunpack.c.l.b16 %v562
        %v1488 = vunpack.c.h.b16 %v562
        %v1489 = vunpack.c.l.b16 %v563
        %v1490 = vunpack.c.h.b16 %v563
        %v1491 = vunpack.c.l.b16 %v564
        %v1492 = vunpack.c.h.b16 %v564
        %v1493 = vunpack.c.l.b16 %v565
        %v1494 = vunpack.c.h.b16 %v565
        %v1495 = vunpack.c.l.b16 %v566
        %v1496 = vunpack.c.h.b16 %v566
        %v1497 = vunpack.c.l.b16 %v567
        %v1498 = vunpack.c.h.b16 %v567
        %v1499 = vunpack.c.l.b16 %v568
        %v1500 = vunpack.c.h.b16 %v568
        %v1501 = vunpack.c.l.b16 %v569
        %v1502 = vunpack.c.h.b16 %v569
        %v1503 = vunpack.c.l.b16 %v570
        %v1504 = vunpack.c.h.b16 %v570
        %v1505 = vunpack.c.l.b16 %v571
        %v1506 = vunpack.c.h.b16 %v571
        %v1507 = vunpack.c.l.b16 %v572
        %v1508 = vunpack.c.h.b16 %v572
        %v1509 = vunpack.c.l.b16 %v573
        %v1510 = vunpack.c.h.b16 %v573
        %v1511 = vunpack.c.l.b16 %v574
        %v1512 = vunpack.c.h.b16 %v574
        %v1513 = vunpack.c.l.b16 %v575
        %v1514 = vunpack.c.h.b16 %v575
        %v1515 = vunpack.c.l.b16 %v576
        %v1516 = vunpack.c.h.b16 %v576
        %v1517 = vunpack.c.l.b16 %v577
        %v1518 = vunpack.c.h.b16 %v577
        %v1519 = vunpack.c.l.b16 %v578
        %v1520 = vunpack.c.h.b16 %v578
        %v1521 = vunpack.c.l.b16 %v579
        %v1522 = vunpack.c.h.b16 %v579
        %v1523 = vunpack.c.l.b16 %v580
        %v1524 = vunpack.c.h.b16 %v580
        %v1525 = vunpack.c.l.b16 %v581
        %v1526 = vunpack.c.h.b16 %v581
        %v1527 = vunpack.c.l.b16 %v582
        %v1528 = vunpack.c.h.b16 %v582
        %v1529 = vunpack.c.l.b16 %v583
        %v1530 = vunpack.c.h.b16 %v583
        %v1531 = vunpack.c.l.b16 %v584
        %v1532 = vunpack.c.h.b16 %v584
        %v1533 = vunpack.c.l.b16 %v585
        %v1534 = vunpack.c.h.b16 %v585
        %v1535 = vunpack.c.l.b16 %v586
        %v1536 = vunpack.c.h.b16 %v586
        %v1537 = vunpack.c.l.b16 %v587
        %v1538 = vunpack.c.h.b16 %v587
        %v1539 = vunpack.c.l.b16 %v588
        %v1540 = vunpack.c.h.b16 %v588
        %v1541 = vunpack.c.l.b16 %v589
        %v1542 = vunpack.c.h.b16 %v589
        %v1543 = vunpack.c.l.b16 %v590
        %v1544 = vunpack.c.h.b16 %v590
        %v1545 = vunpack.c.l.b16 %v591
        %v1546 = vunpack.c.h.b16 %v591
        %v1547 = vunpack.c.l.b16 %v592
        %v1548 = vunpack.c.h.b16 %v592
        %v1549 = vunpack.c.l.b16 %v593
        %v1550 = vunpack.c.h.b16 %v593
        %v1551 = vunpack.c.l.b16 %v594
        %v1552 = vunpack.c.h.b16 %v594
        %v1553 = vunpack.c.l.b16 %v595
        %v1554 = vunpack.c.h.b16 %v595
        %v1555 = vunpack.c.l.b16 %v596
        %v1556 = vunpack.c.h.b16 %v596
        %v1557 = vunpack.c.l.b16 %v597
        %v1558 = vunpack.c.h.b16 %v597
        %v1559 = vunpack.c.l.b16 %v598
        %v1560 = vunpack.c.h.b16 %v598
        %v1561 = vunpack.c.l.b16 %v599
        %v1562 = vunpack.c.h.b16 %v599
        %v1563 = vunpack.c.l.b16 %v600
        %v1564 = vunpack.c.h.b16 %v600
        %v1565 = vunpack.c.l.b16 %v601
        %v1566 = vunpack.c.h.b16 %v601
        %v1567 = vunpack.c.l.b16 %v602
        %v1568 = vunpack.c.h.b16 %v602
        %v1569 = vunpack.c.l.b16 %v603
        %v1570 = vunpack.c.h.b16 %v603
        %v1571 = vunpack.c.l.b16 %v604
        %v1572 = vunpack.c.h.b16 %v604
        %v1573 = vunpack.c.l.b16 %v605
        %v1574 = vunpack.c.h.b16 %v605
        %v1575 = vunpack.c.l.b16 %v606
        %v1576 = vunpack.c.h.b16 %v606
        %v1577 = vunpack.c.l.b16 %v607
        %v1578 = vunpack.c.h.b16 %v607
        %v1579 = vunpack.c.l.b16 %v608
        %v1580 = vunpack.c.h.b16 %v608
        %v1581 = vunpack.c.l.b16 %v609
        %v1582 = vunpack.c.h.b16 %v609
        %v1583 = vunpack.c.l.b16 %v610
        %v1584 = vunpack.c.h.b16 %v610
        %v1585 = vunpack.c.l.b16 %v611
        %v1586 = vunpack.c.h.b16 %v611
        %v1587 = vunpack.c.l.b16 %v612
        %v1588 = vunpack.c.h.b16 %v612
        %v1589 = vunpack.c.l.b16 %v613
        %v1590 = vunpack.c.h.b16 %v613
        %v1591 = vunpack.c.l.b16 %v614
        %v1592 = vunpack.c.h.b16 %v614
        %v1593 = vunpack.c.l.b16 %v615
        %v1594 = vunpack.c.h.b16 %v615
        %v1595 = vunpack.c.l.b16 %v616
        %v1596 = vunpack.c.h.b16 %v616
        %v1597 = vunpack.c.l.b16 %v617
        %v1598 = vunpack.c.h.b16 %v617
        %v1599 = vunpack.c.l.b16 %v618
        %v1600 = vunpack.c.h.b16 %v618
        %v1601 = vpack.c.b16 %v1157, %v1153
        %v1602 = vpack.c.b16 %v1158, %v1154
        %v1603 = vpack.c.b16 %v1159, %v1155
        %v1604 = vpack.c.b16 %v1160, %v1156
        %v1605 = vpack.c.b16 %v1165, %v1161
        %v1606 = vpack.c.b16 %v1166, %v1162
        %v1607 = vpack.c.b16 %v1167, %v1163
        %v1608 = vpack.c.b16 %v1168, %v1164
        %v1609 = vpack.c.b16 %v1173, %v1169
        %v1610 = vpack.c.b16 %v1174, %v1170
        %v1611 = vpack.c.b16 %v1175, %v1171
        %v1612 = vpack.c.b16 %v1176, %v1172
        %v1613 = vpack.c.b16 %v1181, %v1177
        %v1614 = vpack.c.b16 %v1182, %v1178
        %v1615 = vpack.c.b16 %v1183, %v1179
        %v1616 = vpack.c.b16 %v1184, %v1180
        %v1617 = vpack.c.b16 %v1189, %v1185
        %v1618 = vpack.c.b16 %v1190, %v1186
        %v1619 = vpack.c.b16 %v1191, %v1187
        %v1620 = vpack.c.b16 %v1192, %v1188
        %v1621 = vpack.c.b16 %v1197, %v1193
        %v1622 = vpack.c.b16 %v1198, %v1194
        %v1623 = vpack.c.b16 %v1199, %v1195
        %v1624 = vpack.c.b16 %v1200, %v1196
        %v1625 = vpack.c.b16 %v1205, %v1201
        %v1626 = vpack.c.b16 %v1206, %v1202
        %v1627 = vpack.c.b16 %v1207, %v1203
        %v1628 = vpack.c.b16 %v1208, %v1204
        %v1629 = vpack.c.b16 %v1213, %v1209
        %v1630 = vpack.c.b16 %v1214, %v1210
        %v1631 = vpack.c.b16 %v1215, %v1211
        %v1632 = vpack.c.b16 %v1216, %v1212
        %v1633 = vpack.c.b16 %v1221, %v1217
        %v1634 = vpack.c.b16 %v1222, %v1218
        %v1635 = vpack.c.b16 %v1223, %v1219
        %v1636 = vpack.c.b16 %v1224, %v1220
        %v1637 = vpack.c.b16 %v1229, %v1225
        %v1638 = vpack.c.b16 %v1230, %v1226
        %v1639 = vpack.c.b16 %v1231, %v1227
        %v1640 = vpack.c.b16 %v1232, %v1228
        %v1641 = vpack.c.b16 %v1237, %v1233
        %v1642 = vpack.c.b16 %v1238, %v1234
        %v1643 = vpack.c.b16 %v1239, %v1235
        %v1644 = vpack.c.b16 %v1240, %v1236
        %v1645 = vpack.c.b16 %v1245, %v1241
        %v1646 = vpack.c.b16 %v1246, %v1242
        %v1647 = vpack.c.b16 %v1247, %v1243
        %v1648 = vpack.c.b16 %v1248, %v1244
        %v1649 = vpack.c.b16 %v1253, %v1249
        %v1650 = vpack.c.b16 %v1254, %v1250
        %v1651 = vpack.c.b16 %v1255, %v1251
        %v1652 = vpack.c.b16 %v1256, %v1252
        %v1653 = vpack.c.b16 %v1261, %v1257
        %v1654 = vpack.c.b16 %v1262, %v1258
        %v1655 = vpack.c.b16 %v1263, %v1259
        %v1656 = vpack.c.b16 %v1264, %v1260
        %v1657 = vpack.c.b16 %v1269, %v1265
        %v1658 = vpack.c.b16 %v1270, %v1266
        %v1659 = vpack.c.b16 %v1271, %v1267
        %v1660 = vpack.c.b16 %v1272, %v1268
        %v1661 = vpack.c.b16 %v1277, %v1273
        %v1662 = vpack.c.b16 %v1278, %v1274
        %v1663 = vpack.c.b16 %v1279, %v1275
        %v1664 = vpack.c.b16 %v1280, %v1276
        %v1665 = vpack.c.b16 %v1285, %v1281
        %v1666 = vpack.c.b16 %v1286, %v1282
        %v1667 = vpack.c.b16 %v1287, %v1283
        %v1668 = vpack.c.b16 %v1288, %v1284
        %v1669 = vpack.c.b16 %v1293, %v1289
        %v1670 = vpack.c.b16 %v1294, %v1290
        %v1671 = vpack.c.b16 %v1295, %v1291
        %v1672 = vpack.c.b16 %v1296, %v1292
        %v1673 = vpack.c.b16 %v1301, %v1297
        %v1674 = vpack.c.b16 %v1302, %v1298
        %v1675 = vpack.c.b16 %v1303, %v1299
        %v1676 = vpack.c.b16 %v1304, %v1300
        %v1677 = vpack.c.b16 %v1309, %v1305
        %v1678 = vpack.c.b16 %v1310, %v1306
        %v1679 = vpack.c.b16 %v1311, %v1307
        %v1680 = vpack.c.b16 %v1312, %v1308
        %v1681 = vpack.c.b16 %v1317, %v1313
        %v1682 = vpack.c.b16 %v1318, %v1314
        %v1683 = vpack.c.b16 %v1319, %v1315
        %v1684 = vpack.c.b16 %v1320, %v1316
        %v1685 = vpack.c.b16 %v1325, %v1321
        %v1686 = vpack.c.b16 %v1326, %v1322
        %v1687 = vpack.c.b16 %v1327, %v1323
        %v1688 = vpack.c.b16 %v1328, %v1324
        %v1689 = vpack.c.b16 %v1333, %v1329
        %v1690 = vpack.c.b16 %v1334, %v1330
        %v1691 = vpack.c.b16 %v1335, %v1331
        %v1692 = vpack.c.b16 %v1336, %v1332
        %v1693 = vpack.c.b16 %v1341, %v1337
        %v1694 = vpack.c.b16 %v1342, %v1338
        %v1695 = vpack.c.b16 %v1343, %v1339
        %v1696 = vpack.c.b16 %v1344, %v1340
        %v1697 = vpack.c.b16 %v1349, %v1345
        %v1698 = vpack.c.b16 %v1350, %v1346
        %v1699 = vpack.c.b16 %v1351, %v1347
        %v1700 = vpack.c.b16 %v1352, %v1348
        %v1701 = vpack.c.b16 %v1357, %v1353
        %v1702 = vpack.c.b16 %v1358, %v1354
        %v1703 = vpack.c.b16 %v1359, %v1355
        %v1704 = vpack.c.b16 %v1360, %v1356
        %v1705 = vpack.c.b16 %v1365, %v1361
        %v1706 = vpack.c.b16 %v1366, %v1362
        %v1707 = vpack.c.b16 %v1367, %v1363
        %v1708 = vpack.c.b16 %v1368, %v1364
        %v1709 = vpack.c.b16 %v1373, %v1369
        %v1710 = vpack.c.b16 %v1374, %v1370
        %v1711 = vpack.c.b16 %v1375, %v1371
        %v1712 = vpack.c.b16 %v1376, %v1372
        %v1713 = vpack.c.b16 %v1381, %v1377
        %v1714 = vpack.c.b16 %v1382, %v1378
        %v1715 = vpack.c.b16 %v1383, %v1379
        %v1716 = vpack.c.b16 %v1384, %v1380
        %v1717 = vpack.c.b16 %v1389, %v1385
        %v1718 = vpack.c.b16 %v1390, %v1386
        %v1719 = vpack.c.b16 %v1391, %v1387
        %v1720 = vpack.c.b16 %v1392, %v1388
        %v1721 = vpack.c.b16 %v1397, %v1393
        %v1722 = vpack.c.b16 %v1398, %v1394
        %v1723 = vpack.c.b16 %v1399, %v1395
        %v1724 = vpack.c.b16 %v1400, %v1396
        %v1725 = vpack.c.b16 %v1405, %v1401
        %v1726 = vpack.c.b16 %v1406, %v1402
        %v1727 = vpack.c.b16 %v1407, %v1403
        %v1728 = vpack.c.b16 %v1408, %v1404
        %v1729 = vpack.c.b16 %v1413, %v1409
        %v1730 = vpack.c.b16 %v1414, %v1410
        %v1731 = vpack.c.b16 %v1415, %v1411
        %v1732 = vpack.c.b16 %v1416, %v1412
        %v1733 = vpack.c.b16 %v1421, %v1417
        %v1734 = vpack.c.b16 %v1422, %v1418
        %v1735 = vpack.c.b16 %v1423, %v1419
        %v1736 = vpack.c.b16 %v1424, %v1420
        %v1737 = vpack.c.b16 %v1429, %v1425
        %v1738 = vpack.c.b16 %v1430, %v1426
        %v1739 = vpack.c.b16 %v1431, %v1427
        %v1740 = vpack.c.b16 %v1432, %v1428
        %v1741 = vpack.c.b16 %v1437, %v1433
        %v1742 = vpack.c.b16 %v1438, %v1434
        %v1743 = vpack.c.b16 %v1439, %v1435
        %v1744 = vpack.c.b16 %v1440, %v1436
        %v1745 = vpack.c.b16 %v1445, %v1441
        %v1746 = vpack.c.b16 %v1446, %v1442
        %v1747 = vpack.c.b16 %v1447, %v1443
        %v1748 = vpack.c.b16 %v1448, %v1444
        %v1749 = vpack.c.b16 %v1453, %v1449
        %v1750 = vpack.c.b16 %v1454, %v1450
        %v1751 = vpack.c.b16 %v1455, %v1451
        %v1752 = vpack.c.b16 %v1456, %v1452
        %v1753 = vpack.c.b16 %v1461, %v1457
        %v1754 = vpack.c.b16 %v1462, %v1458
        %v1755 = vpack.c.b16 %v1463, %v1459
        %v1756 = vpack.c.b16 %v1464, %v1460
        %v1757 = vpack.c.b16 %v1469, %v1465
        %v1758 = vpack.c.b16 %v1470, %v1466
        %v1759 = vpack.c.b16 %v1471, %v1467
        %v1760 = vpack.c.b16 %v1472, %v1468
        %v1761 = vpack.c.b16 %v1477, %v1473
        %v1762 = vpack.c.b16 %v1478, %v1474
        %v1763 = vpack.c.b16 %v1479, %v1475
        %v1764 = vpack.c.b16 %v1480, %v1476
        %v1765 = vpack.c.b16 %v1485, %v1481
        %v1766 = vpack.c.b16 %v1486, %v1482
        %v1767 = vpack.c.b16 %v1487, %v1483
        %v1768 = vpack.c.b16 %v1488, %v1484
        %v1769 = vpack.c.b16 %v1493, %v1489
        %v1770 = vpack.c.b16 %v1494, %v1490
        %v1771 = vpack.c.b16 %v1495, %v1491
        %v1772 = vpack.c.b16 %v1496, %v1492
        %v1773 = vpack.c.b16 %v1501, %v1497
        %v1774 = vpack.c.b16 %v1502, %v1498
        %v1775 = vpack.c.b16 %v1503, %v1499
        %v1776 = vpack.c.b16 %v1504, %v1500
        %v1777 = vpack.c.b16 %v1509, %v1505
        %v1778 = vpack.c.b16 %v1510, %v1506
        %v1779 = vpack.c.b16 %v1511, %v1507
        %v1780 = vpack.c.b16 %v1512, %v1508
        %v1781 = vpack.c.b16 %v1517, %v1513
        %v1782 = vpack.c.b16 %v1518, %v1514
        %v1783 = vpack.c.b16 %v1519, %v1515
        %v1784 = vpack.c.b16 %v1520, %v1516
        %v1785 = vpack.c.b16 %v1525, %v1521
        %v1786 = vpack.c.b16 %v1526, %v1522
        %v1787 = vpack.c.b16 %v1527, %v1523
        %v1788 = vpack.c.b16 %v1528, %v1524
        %v1789 = vpack.c.b16 %v1533, %v1529
        %v1790 = vpack.c.b16 %v1534, %v1530
        %v1791 = vpack.c.b16 %v1535, %v1531
        %v1792 = vpack.c.b16 %v1536, %v1532
        %v1793 = vpack.c.b16 %v1541, %v1537
        %v1794 = vpack.c.b16 %v1542, %v1538
        %v1795 = vpack.c.b16 %v1543, %v1539
        %v1796 = vpack.c.b16 %v1544, %v1540
        %v1797 = vpack.c.b16 %v1549, %v1545
        %v1798 = vpack.c.b16 %v1550, %v1546
        %v1799 = vpack.c.b16 %v1551, %v1547
        %v1800 = vpack.c.b16 %v1552, %v1548
        %v1801 = vpack.c.b16 %v1557, %v1553
        %v1802 = vpack.c.b16 %v1558, %v1554
        %v1803 = vpack.c.b16 %v1559, %v1555
        %v1804 = vpack.c.b16 %v1560, %v1556
        %v1805 = vpack.c.b16 %v1565, %v1561
        %v1806 = vpack.c.b16 %v1566, %v1562
        %v1807 = vpack.c.b16 %v1567, %v1563
        %v1808 = vpack.c.b16 %v1568, %v1564
        %v1809 = vpack.c.b16 %v1573, %v1569
        %v1810 = vpack.c.b16 %v1574, %v1570
        %v1811 = vpack.c.b16 %v1575, %v1571
        %v1812 = vpack.c.b16 %v1576, %v1572
        %v1813 = vpack.c.b16 %v1581, %v1577
        %v1814 = vpack.c.b16 %v1582, %v1578
        %v1815 = vpack.c.b16 %v1583, %v1579
        %v1816 = vpack.c.b16 %v1584, %v1580
        %v1817 = vpack.c.b16 %v1589, %v1585
        %v1818 = vpack.c.b16 %v1590, %v1586
        %v1819 = vpack.c.b16 %v1591, %v1587
        %v1820 = vpack.c.b16 %v1592, %v1588
        %v1821 = vpack.c.b16 %v1597, %v1593
        %v1822 = vpack.c.b16 %v1598, %v1594
        %v1823 = vpack.c.b16 %v1599, %v1595
        %v1824 = vpack.c.b16 %v1600, %v1596
        %2049 = vmatprep.subr.bf16.mxu0 %v1602
        %2050 = vmatpush1.bf16.msra.mxu0 %v1601
        %2051 = vmatprep.subr.bf16.mxu0 %v1606
        %2052 = vmatpush1.bf16.msra.mxu0 %v1605
        %2053 = vmatprep.subr.bf16.mxu0 %v1610
        %2054 = vmatpush1.bf16.msra.mxu0 %v1609
        %2055 = vmatprep.subr.bf16.mxu0 %v1614
        %2056 = vmatpush1.bf16.msra.mxu0 %v1613
        %2057 = vmatprep.subr.bf16.mxu0 %v1618
        %2058 = vmatpush1.bf16.msra.mxu0 %v1617
        %2059 = vmatprep.subr.bf16.mxu0 %v1622
        %2060 = vmatpush1.bf16.msra.mxu0 %v1621
        %2061 = vmatprep.subr.bf16.mxu0 %v1626
        %2062 = vmatpush1.bf16.msra.mxu0 %v1625
        %2063 = vmatprep.subr.bf16.mxu0 %v1630
        %2064 = vmatpush1.bf16.msra.mxu0 %v1629
        %2065 = vmatprep.subr.bf16.mxu0 %v1634
        %2066 = vmatpush1.bf16.msra.mxu0 %v1633
        %2067 = vmatprep.subr.bf16.mxu0 %v1638
        %2068 = vmatpush1.bf16.msra.mxu0 %v1637
        %2069 = vmatprep.subr.bf16.mxu0 %v1642
        %2070 = vmatpush1.bf16.msra.mxu0 %v1641
        %2071 = vmatprep.subr.bf16.mxu0 %v1646
        %2072 = vmatpush1.bf16.msra.mxu0 %v1645
        %2073 = vmatprep.subr.bf16.mxu0 %v1650
        %2074 = vmatpush1.bf16.msra.mxu0 %v1649
        %2075 = vmatprep.subr.bf16.mxu0 %v1654
        %2076 = vmatpush1.bf16.msra.mxu0 %v1653
        %2077 = vmatprep.subr.bf16.mxu0 %v1658
        %2078 = vmatpush1.bf16.msra.mxu0 %v1657
        %2079 = vmatprep.subr.bf16.mxu0 %v1662
        %2080 = vmatpush1.bf16.msra.mxu0 %v1661
        %2081 = vmatprep.mubr.bf16.mxu0 %v818
        %2082 = vmatmul.mubr.bf16.gmra.mrb[0].mxu0 %v817
        %v2083 = vpop.f32.mrb[0].mxu0
        %v2084 = vadd.f32 %v624, %v2083
        %v2085 = vpop.f32.mrb[0].mxu0
        %v2086 = vadd.f32 %v628, %v2085
        %v2087 = vpop.f32.mrb[0].mxu0
        %v2088 = vadd.f32 %v624, %v2087
        %v2089 = vpop.f32.mrb[0].mxu0
        %v2090 = vadd.f32 %v628, %v2089
        %2091 = vmatprep.mubr.bf16.mxu0 %v825
        %2092 = vmatmul.mubr.bf16.gmra.mrb[0].mxu0 %v824
        %v2093 = vpop.f32.mrb[0].mxu0
        %v2094 = vadd.f32 %v624, %v2093
        %v2095 = vpop.f32.mrb[0].mxu0
        %v2096 = vadd.f32 %v628, %v2095
        %v2097 = vpop.f32.mrb[0].mxu0
        %v2098 = vadd.f32 %v624, %v2097
        %v2099 = vpop.f32.mrb[0].mxu0
        %v2100 = vadd.f32 %v628, %v2099
        %2101 = vmatprep.mubr.bf16.mxu0 %v832
        %2102 = vmatmul.mubr.bf16.gmra.mrb[0].mxu0 %v831
        %v2103 = vpop.f32.mrb[0].mxu0
        %v2104 = vadd.f32 %v624, %v2103
        %v2105 = vpop.f32.mrb[0].mxu0
        %v2106 = vadd.f32 %v628, %v2105
        %v2107 = vpop.f32.mrb[0].mxu0
        %v2108 = vadd.f32 %v624, %v2107
        %v2109 = vpop.f32.mrb[0].mxu0
        %v2110 = vadd.f32 %v628, %v2109
        %2111 = vmatprep.mubr.bf16.mxu0 %v839
        %2112 = vmatmul.mubr.bf16.gmra.mrb[0].mxu0 %v838
        %v2113 = vpop.f32.mrb[0].mxu0
        %v2114 = vadd.f32 %v624, %v2113
        %v2115 = vpop.f32.mrb[0].mxu0
        %v2116 = vadd.f32 %v628, %v2115
        %v2117 = vpop.f32.mrb[0].mxu0
        %v2118 = vadd.f32 %v624, %v2117
        %v2119 = vpop.f32.mrb[0].mxu0
        %v2120 = vadd.f32 %v628, %v2119
        %2121 = vmatprep.mubr.bf16.mxu0 %v846
        %2122 = vmatmul.mubr.bf16.gmra.mrb[0].mxu0 %v845
        %v2123 = vpop.f32.mrb[0].mxu0
        %v2124 = vadd.f32 %v624, %v2123
        %v2125 = vpop.f32.mrb[0].mxu0
        %v2126 = vadd.f32 %v628, %v2125
        %v2127 = vpop.f32.mrb[0].mxu0
        %v2128 = vadd.f32 %v624, %v2127
        %v2129 = vpop.f32.mrb[0].mxu0
        %v2130 = vadd.f32 %v628, %v2129
        %2131 = vmatprep.mubr.bf16.mxu0 %v853
        %2132 = vmatmul.mubr.bf16.gmra.mrb[0].mxu0 %v852
        %v2133 = vpop.f32.mrb[0].mxu0
        %v2134 = vadd.f32 %v624, %v2133
        %v2135 = vpop.f32.mrb[0].mxu0
        %v2136 = vadd.f32 %v628, %v2135
        %v2137 = vpop.f32.mrb[0].mxu0
        %v2138 = vadd.f32 %v624, %v2137
        %v2139 = vpop.f32.mrb[0].mxu0
        %v2140 = vadd.f32 %v628, %v2139
        %2141 = vmatprep.mubr.bf16.mxu0 %v860
        %2142 = vmatmul.mubr.bf16.gmra.mrb[0].mxu0 %v859
        %v2143 = vpop.f32.mrb[0].mxu0
        %v2144 = vadd.f32 %v624, %v2143
        %v2145 = vpop.f32.mrb[0].mxu0
        %v2146 = vadd.f32 %v628, %v2145
        %v2147 = vpop.f32.mrb[0].mxu0
        %v2148 = vadd.f32 %v624, %v2147
        %v2149 = vpop.f32.mrb[0].mxu0
        %v2150 = vadd.f32 %v628, %v2149
        %2151 = vmatprep.mubr.bf16.mxu0 %v867
        %2152 = vmatmul.mubr.bf16.gmra.mrb[0].mxu0 %v866
        %v2153 = vpop.f32.mrb[0].mxu0
        %v2154 = vadd.f32 %v624, %v2153
        %v2155 = vpop.f32.mrb[0].mxu0
        %v2156 = vadd.f32 %v628, %v2155
        %v2157 = vpop.f32.mrb[0].mxu0
        %v2158 = vadd.f32 %v624, %v2157
        %v2159 = vpop.f32.mrb[0].mxu0
        %v2160 = vadd.f32 %v628, %v2159
        %2161 = vdwg.mxu0
        %2162 = vmatprep.subr.bf16.mxu0 %v1666
        %2163 = vmatpush1.bf16.msra.mxu0 %v1665
        %2164 = vmatprep.subr.bf16.mxu0 %v1670
        %2165 = vmatpush1.bf16.msra.mxu0 %v1669
        %2166 = vmatprep.subr.bf16.mxu0 %v1674
        %2167 = vmatpush1.bf16.msra.mxu0 %v1673
        %2168 = vmatprep.subr.bf16.mxu0 %v1678
        %2169 = vmatpush1.bf16.msra.mxu0 %v1677
        %2170 = vmatprep.subr.bf16.mxu0 %v1682
        %2171 = vmatpush1.bf16.msra.mxu0 %v1681
        %2172 = vmatprep.subr.bf16.mxu0 %v1686
        %2173 = vmatpush1.bf16.msra.mxu0 %v1685
        %2174 = vmatprep.subr.bf16.mxu0 %v1690
        %2175 = vmatpush1.bf16.msra.mxu0 %v1689
        %2176 = vmatprep.subr.bf16.mxu0 %v1694
        %2177 = vmatpush1.bf16.msra.mxu0 %v1693
        %2178 = vmatprep.subr.bf16.mxu0 %v1698
        %2179 = vmatpush1.bf16.msra.mxu0 %v1697
        %2180 = vmatprep.subr.bf16.mxu0 %v1702
        %2181 = vmatpush1.bf16.msra.mxu0 %v1701
        %2182 = vmatprep.subr.bf16.mxu0 %v1706
        %2183 = vmatpush1.bf16.msra.mxu0 %v1705
        %2184 = vmatprep.subr.bf16.mxu0 %v1710
        %2185 = vmatpush1.bf16.msra.mxu0 %v1709
        %2186 = vmatprep.subr.bf16.mxu0 %v1714
        %2187 = vmatpush1.bf16.msra.mxu0 %v1713
        %2188 = vmatprep.subr.bf16.mxu0 %v1718
        %2189 = vmatpush1.bf16.msra.mxu0 %v1717
        %2190 = vmatprep.subr.bf16.mxu0 %v1722
        %2191 = vmatpush1.bf16.msra.mxu0 %v1721
        %2192 = vmatprep.subr.bf16.mxu0 %v1726
        %2193 = vmatpush1.bf16.msra.mxu0 %v1725
        %2194 = vmatprep.mubr.bf16.mxu0 %v820
        %2195 = vmatmul.mubr.bf16.gmra.mrb[0].mxu0 %v819
        %v2196 = vpop.f32.mrb[0].mxu0
        %v2197 = vadd.f32 %v2084, %v2196
        %v2198 = vpop.f32.mrb[0].mxu0
        %v2199 = vadd.f32 %v2086, %v2198
        %v2200 = vpop.f32.mrb[0].mxu0
        %v2201 = vadd.f32 %v2088, %v2200
        %v2202 = vpop.f32.mrb[0].mxu0
        %v2203 = vadd.f32 %v2090, %v2202
        %2204 = vmatprep.mubr.bf16.mxu0 %v827
        %2205 = vmatmul.mubr.bf16.gmra.mrb[0].mxu0 %v826
        %v2206 = vpop.f32.mrb[0].mxu0
        %v2207 = vadd.f32 %v2094, %v2206
        %v2208 = vpop.f32.mrb[0].mxu0
        %v2209 = vadd.f32 %v2096, %v2208
        %v2210 = vpop.f32.mrb[0].mxu0
        %v2211 = vadd.f32 %v2098, %v2210
        %v2212 = vpop.f32.mrb[0].mxu0
        %v2213 = vadd.f32 %v2100, %v2212
        %2214 = vmatprep.mubr.bf16.mxu0 %v834
        %2215 = vmatmul.mubr.bf16.gmra.mrb[0].mxu0 %v833
        %v2216 = vpop.f32.mrb[0].mxu0
        %v2217 = vadd.f32 %v2104, %v2216
        %v2218 = vpop.f32.mrb[0].mxu0
        %v2219 = vadd.f32 %v2106, %v2218
        %v2220 = vpop.f32.mrb[0].mxu0
        %v2221 = vadd.f32 %v2108, %v2220
        %v2222 = vpop.f32.mrb[0].mxu0
        %v2223 = vadd.f32 %v2110, %v2222
        %2224 = vmatprep.mubr.bf16.mxu0 %v841
        %2225 = vmatmul.mubr.bf16.gmra.mrb[0].mxu0 %v840
        %v2226 = vpop.f32.mrb[0].mxu0
        %v2227 = vadd.f32 %v2114, %v2226
        %v2228 = vpop.f32.mrb[0].mxu0
        %v2229 = vadd.f32 %v2116, %v2228
        %v2230 = vpop.f32.mrb[0].mxu0
        %v2231 = vadd.f32 %v2118, %v2230
        %v2232 = vpop.f32.mrb[0].mxu0
        %v2233 = vadd.f32 %v2120, %v2232
        %2234 = vmatprep.mubr.bf16.mxu0 %v848
        %2235 = vmatmul.mubr.bf16.gmra.mrb[0].mxu0 %v847
        %v2236 = vpop.f32.mrb[0].mxu0
        %v2237 = vadd.f32 %v2124, %v2236
        %v2238 = vpop.f32.mrb[0].mxu0
        %v2239 = vadd.f32 %v2126, %v2238
        %v2240 = vpop.f32.mrb[0].mxu0
        %v2241 = vadd.f32 %v2128, %v2240
        %v2242 = vpop.f32.mrb[0].mxu0
        %v2243 = vadd.f32 %v2130, %v2242
        %2244 = vmatprep.mubr.bf16.mxu0 %v855
        %2245 = vmatmul.mubr.bf16.gmra.mrb[0].mxu0 %v854
        %v2246 = vpop.f32.mrb[0].mxu0
        %v2247 = vadd.f32 %v2134, %v2246
        %v2248 = vpop.f32.mrb[0].mxu0
        %v2249 = vadd.f32 %v2136, %v2248
        %v2250 = vpop.f32.mrb[0].mxu0
        %v2251 = vadd.f32 %v2138, %v2250
        %v2252 = vpop.f32.mrb[0].mxu0
        %v2253 = vadd.f32 %v2140, %v2252
        %2254 = vmatprep.mubr.bf16.mxu0 %v862
        %2255 = vmatmul.mubr.bf16.gmra.mrb[0].mxu0 %v861
        %v2256 = vpop.f32.mrb[0].mxu0
        %v2257 = vadd.f32 %v2144, %v2256
        %v2258 = vpop.f32.mrb[0].mxu0
        %v2259 = vadd.f32 %v2146, %v2258
        %v2260 = vpop.f32.mrb[0].mxu0
        %v2261 = vadd.f32 %v2148, %v2260
        %v2262 = vpop.f32.mrb[0].mxu0
        %v2263 = vadd.f32 %v2150, %v2262
        %2264 = vmatprep.mubr.bf16.mxu0 %v869
        %2265 = vmatmul.mubr.bf16.gmra.mrb[0].mxu0 %v868
        %v2266 = vpop.f32.mrb[0].mxu0
        %v2267 = vadd.f32 %v2154, %v2266
        %v2268 = vpop.f32.mrb[0].mxu0
        %v2269 = vadd.f32 %v2156, %v2268
        %v2270 = vpop.f32.mrb[0].mxu0
        %v2271 = vadd.f32 %v2158, %v2270
        %v2272 = vpop.f32.mrb[0].mxu0
        %v2273 = vadd.f32 %v2160, %v2272
        %2274 = vdwg.mxu0
        %2275 = vmatprep.subr.bf16.mxu0 %v1730
        %2276 = vmatpush1.bf16.msra.mxu0 %v1729
        %2277 = vmatprep.subr.bf16.mxu0 %v1734
        %2278 = vmatpush1.bf16.msra.mxu0 %v1733
        %2279 = vmatprep.subr.bf16.mxu0 %v1738
        %2280 = vmatpush1.bf16.msra.mxu0 %v1737
        %2281 = vmatprep.subr.bf16.mxu0 %v1742
        %2282 = vmatpush1.bf16.msra.mxu0 %v1741
        %2283 = vmatprep.subr.bf16.mxu0 %v1746
        %2284 = vmatpush1.bf16.msra.mxu0 %v1745
        %2285 = vmatprep.subr.bf16.mxu0 %v1750
        %2286 = vmatpush1.bf16.msra.mxu0 %v1749
        %2287 = vmatprep.subr.bf16.mxu0 %v1754
        %2288 = vmatpush1.bf16.msra.mxu0 %v1753
        %2289 = vmatprep.subr.bf16.mxu0 %v1758
        %2290 = vmatpush1.bf16.msra.mxu0 %v1757
        %2291 = vmatprep.subr.bf16.mxu0 %v1762
        %2292 = vmatpush1.bf16.msra.mxu0 %v1761
        %2293 = vmatprep.subr.bf16.mxu0 %v1766
        %2294 = vmatpush1.bf16.msra.mxu0 %v1765
        %2295 = vmatprep.subr.bf16.mxu0 %v1770
        %2296 = vmatpush1.bf16.msra.mxu0 %v1769
        %2297 = vmatprep.subr.bf16.mxu0 %v1774
        %2298 = vmatpush1.bf16.msra.mxu0 %v1773
        %2299 = vmatprep.subr.bf16.mxu0 %v1778
        %2300 = vmatpush1.bf16.msra.mxu0 %v1777
        %2301 = vmatprep.subr.bf16.mxu0 %v1782
        %2302 = vmatpush1.bf16.msra.mxu0 %v1781
        %2303 = vmatprep.subr.bf16.mxu0 %v1786
        %2304 = vmatpush1.bf16.msra.mxu0 %v1785
        %2305 = vmatprep.subr.bf16.mxu0 %v1790
        %2306 = vmatpush1.bf16.msra.mxu0 %v1789
        %2307 = vmatprep.mubr.bf16.mxu0 %v822
        %2308 = vmatmul.mubr.bf16.gmra.mrb[0].mxu0 %v821
        %v2309 = vpop.f32.mrb[0].mxu0
        %v2310 = vadd.f32 %v2197, %v2309
        %v2311 = vpop.f32.mrb[0].mxu0
        %v2312 = vadd.f32 %v2199, %v2311
        %v2313 = vpop.f32.mrb[0].mxu0
        %v2314 = vadd.f32 %v2201, %v2313
        %v2315 = vpop.f32.mrb[0].mxu0
        %v2316 = vadd.f32 %v2203, %v2315
        %2317 = vmatprep.mubr.bf16.mxu0 %v829
        %2318 = vmatmul.mubr.bf16.gmra.mrb[0].mxu0 %v828
        %v2319 = vpop.f32.mrb[0].mxu0
        %v2320 = vadd.f32 %v2207, %v2319
        %v2321 = vpop.f32.mrb[0].mxu0
        %v2322 = vadd.f32 %v2209, %v2321
        %v2323 = vpop.f32.mrb[0].mxu0
        %v2324 = vadd.f32 %v2211, %v2323
        %v2325 = vpop.f32.mrb[0].mxu0
        %v2326 = vadd.f32 %v2213, %v2325
        %2327 = vmatprep.mubr.bf16.mxu0 %v836
        %2328 = vmatmul.mubr.bf16.gmra.mrb[0].mxu0 %v835
        %v2329 = vpop.f32.mrb[0].mxu0
        %v2330 = vadd.f32 %v2217, %v2329
        %v2331 = vpop.f32.mrb[0].mxu0
        %v2332 = vadd.f32 %v2219, %v2331
        %v2333 = vpop.f32.mrb[0].mxu0
        %v2334 = vadd.f32 %v2221, %v2333
        %v2335 = vpop.f32.mrb[0].mxu0
        %v2336 = vadd.f32 %v2223, %v2335
        %2337 = vmatprep.mubr.bf16.mxu0 %v843
        %2338 = vmatmul.mubr.bf16.gmra.mrb[0].mxu0 %v842
        %v2339 = vpop.f32.mrb[0].mxu0
        %v2340 = vadd.f32 %v2227, %v2339
        %v2341 = vpop.f32.mrb[0].mxu0
        %v2342 = vadd.f32 %v2229, %v2341
        %v2343 = vpop.f32.mrb[0].mxu0
        %v2344 = vadd.f32 %v2231, %v2343
        %v2345 = vpop.f32.mrb[0].mxu0
        %v2346 = vadd.f32 %v2233, %v2345
        %2347 = vmatprep.mubr.bf16.mxu0 %v850
        %2348 = vmatmul.mubr.bf16.gmra.mrb[0].mxu0 %v849
        %v2349 = vpop.f32.mrb[0].mxu0
        %v2350 = vadd.f32 %v2237, %v2349
        %v2351 = vpop.f32.mrb[0].mxu0
        %v2352 = vadd.f32 %v2239, %v2351
        %v2353 = vpop.f32.mrb[0].mxu0
        %v2354 = vadd.f32 %v2241, %v2353
        %v2355 = vpop.f32.mrb[0].mxu0
        %v2356 = vadd.f32 %v2243, %v2355
        %2357 = vmatprep.mubr.bf16.mxu0 %v857
        %2358 = vmatmul.mubr.bf16.gmra.mrb[0].mxu0 %v856
        %v2359 = vpop.f32.mrb[0].mxu0
        %v2360 = vadd.f32 %v2247, %v2359
        %v2361 = vpop.f32.mrb[0].mxu0
        %v2362 = vadd.f32 %v2249, %v2361
        %v2363 = vpop.f32.mrb[0].mxu0
        %v2364 = vadd.f32 %v2251, %v2363
        %v2365 = vpop.f32.mrb[0].mxu0
        %v2366 = vadd.f32 %v2253, %v2365
        %2367 = vmatprep.mubr.bf16.mxu0 %v864
        %2368 = vmatmul.mubr.bf16.gmra.mrb[0].mxu0 %v863
        %v2369 = vpop.f32.mrb[0].mxu0
        %v2370 = vadd.f32 %v2257, %v2369
        %v2371 = vpop.f32.mrb[0].mxu0
        %v2372 = vadd.f32 %v2259, %v2371
        %v2373 = vpop.f32.mrb[0].mxu0
        %v2374 = vadd.f32 %v2261, %v2373
        %v2375 = vpop.f32.mrb[0].mxu0
        %v2376 = vadd.f32 %v2263, %v2375
        %2377 = vmatprep.mubr.bf16.mxu0 %v871
        %2378 = vmatmul.mubr.bf16.gmra.mrb[0].mxu0 %v870
        %v2379 = vpop.f32.mrb[0].mxu0
        %v2380 = vadd.f32 %v2267, %v2379
        %v2381 = vpop.f32.mrb[0].mxu0
        %v2382 = vadd.f32 %v2269, %v2381
        %v2383 = vpop.f32.mrb[0].mxu0
        %v2384 = vadd.f32 %v2271, %v2383
        %v2385 = vpop.f32.mrb[0].mxu0
        %v2386 = vadd.f32 %v2273, %v2385
        %2387 = vdwg.mxu0
        %2388 = vmatprep.subr.bf16.mxu0 %v1794
        %2389 = vmatpush1.bf16.msra.mxu0 %v1793
        %2390 = vmatprep.subr.bf16.mxu0 %v1798
        %2391 = vmatpush1.bf16.msra.mxu0 %v1797
        %2392 = vmatprep.subr.bf16.mxu0 %v1802
        %2393 = vmatpush1.bf16.msra.mxu0 %v1801
        %2394 = vmatprep.subr.bf16.mxu0 %v1806
        %2395 = vmatpush1.bf16.msra.mxu0 %v1805
        %2396 = vmatprep.subr.bf16.mxu0 %v1810
        %2397 = vmatpush1.bf16.msra.mxu0 %v1809
        %2398 = vmatprep.subr.bf16.mxu0 %v1814
        %2399 = vmatpush1.bf16.msra.mxu0 %v1813
        %2400 = vmatprep.subr.bf16.mxu0 %v1818
        %2401 = vmatpush1.bf16.msra.mxu0 %v1817
        %2402 = vmatprep.subr.bf16.mxu0 %v1822
        %2403 = vmatpush1.bf16.msra.mxu0 %v1821
        %2404 = vmatprep.subr.bf16.mxu0 0
        %2405 = vmatpush1.bf16.msra.mxu0 0
        %2406 = vmatprep.subr.bf16.mxu0 0
        %2407 = vmatpush1.bf16.msra.mxu0 0
        %2408 = vmatprep.subr.bf16.mxu0 0
        %2409 = vmatpush1.bf16.msra.mxu0 0
        %2410 = vmatprep.subr.bf16.mxu0 0
        %2411 = vmatpush1.bf16.msra.mxu0 0
        %2412 = vmatprep.subr.bf16.mxu0 0
        %2413 = vmatpush1.bf16.msra.mxu0 0
        %2414 = vmatprep.subr.bf16.mxu0 0
        %2415 = vmatpush1.bf16.msra.mxu0 0
        %2416 = vmatprep.subr.bf16.mxu0 0
        %2417 = vmatpush1.bf16.msra.mxu0 0
        %2418 = vmatprep.subr.bf16.mxu0 0
        %2419 = vmatpush1.bf16.msra.mxu0 0
        %2420 = vmatprep.mubr.bf16.mxu0 0
        %2421 = vmatmul.mubr.bf16.gmra.mrb[0].mxu0 %v823
        %v2422 = vpop.f32.mrb[0].mxu0
        %v2423 = vadd.f32 %v2310, %v2422
        %v2424 = vpop.f32.mrb[0].mxu0
        %v2425 = vadd.f32 %v2312, %v2424
        %v2426 = vpop.f32.mrb[0].mxu0
        %v2427 = vadd.f32 %v2314, %v2426
        %v2428 = vpop.f32.mrb[0].mxu0
        %v2429 = vadd.f32 %v2316, %v2428
        %2430 = vmatprep.mubr.bf16.mxu0 0
        %2431 = vmatmul.mubr.bf16.gmra.mrb[0].mxu0 %v830
        %v2432 = vpop.f32.mrb[0].mxu0
        %v2433 = vadd.f32 %v2320, %v2432
        %v2434 = vpop.f32.mrb[0].mxu0
        %v2435 = vadd.f32 %v2322, %v2434
        %v2436 = vpop.f32.mrb[0].mxu0
        %v2437 = vadd.f32 %v2324, %v2436
        %v2438 = vpop.f32.mrb[0].mxu0
        %v2439 = vadd.f32 %v2326, %v2438
        %2440 = vmatprep.mubr.bf16.mxu0 0
        %2441 = vmatmul.mubr.bf16.gmra.mrb[0].mxu0 %v837
        %v2442 = vpop.f32.mrb[0].mxu0
        %v2443 = vadd.f32 %v2330, %v2442
        %v2444 = vpop.f32.mrb[0].mxu0
        %v2445 = vadd.f32 %v2332, %v2444
        %v2446 = vpop.f32.mrb[0].mxu0
        %v2447 = vadd.f32 %v2334, %v2446
        %v2448 = vpop.f32.mrb[0].mxu0
        %v2449 = vadd.f32 %v2336, %v2448
        %2450 = vmatprep.mubr.bf16.mxu0 0
        %2451 = vmatmul.mubr.bf16.gmra.mrb[0].mxu0 %v844
        %v2452 = vpop.f32.mrb[0].mxu0
        %v2453 = vadd.f32 %v2340, %v2452
        %v2454 = vpop.f32.mrb[0].mxu0
        %v2455 = vadd.f32 %v2342, %v2454
        %v2456 = vpop.f32.mrb[0].mxu0
        %v2457 = vadd.f32 %v2344, %v2456
        %v2458 = vpop.f32.mrb[0].mxu0
        %v2459 = vadd.f32 %v2346, %v2458
        %2460 = vmatprep.mubr.bf16.mxu0 0
        %2461 = vmatmul.mubr.bf16.gmra.mrb[0].mxu0 %v851
        %v2462 = vpop.f32.mrb[0].mxu0
        %v2463 = vadd.f32 %v2350, %v2462
        %v2464 = vpop.f32.mrb[0].mxu0
        %v2465 = vadd.f32 %v2352, %v2464
        %v2466 = vpop.f32.mrb[0].mxu0
        %v2467 = vadd.f32 %v2354, %v2466
        %v2468 = vpop.f32.mrb[0].mxu0
        %v2469 = vadd.f32 %v2356, %v2468
        %2470 = vmatprep.mubr.bf16.mxu0 0
        %2471 = vmatmul.mubr.bf16.gmra.mrb[0].mxu0 %v858
        %v2472 = vpop.f32.mrb[0].mxu0
        %v2473 = vadd.f32 %v2360, %v2472
        %v2474 = vpop.f32.mrb[0].mxu0
        %v2475 = vadd.f32 %v2362, %v2474
        %v2476 = vpop.f32.mrb[0].mxu0
        %v2477 = vadd.f32 %v2364, %v2476
        %v2478 = vpop.f32.mrb[0].mxu0
        %v2479 = vadd.f32 %v2366, %v2478
        %2480 = vmatprep.mubr.bf16.mxu0 0
        %2481 = vmatmul.mubr.bf16.gmra.mrb[0].mxu0 %v865
        %v2482 = vpop.f32.mrb[0].mxu0
        %v2483 = vadd.f32 %v2370, %v2482
        %v2484 = vpop.f32.mrb[0].mxu0
        %v2485 = vadd.f32 %v2372, %v2484
        %v2486 = vpop.f32.mrb[0].mxu0
        %v2487 = vadd.f32 %v2374, %v2486
        %v2488 = vpop.f32.mrb[0].mxu0
        %v2489 = vadd.f32 %v2376, %v2488
        %2490 = vmatprep.mubr.bf16.mxu0 0
        %2491 = vmatmul.mubr.bf16.gmra.mrb[0].mxu0 %v872
        %v2492 = vpop.f32.mrb[0].mxu0
        %v2493 = vadd.f32 %v2380, %v2492
        %v2494 = vpop.f32.mrb[0].mxu0
        %v2495 = vadd.f32 %v2382, %v2494
        %v2496 = vpop.f32.mrb[0].mxu0
        %v2497 = vadd.f32 %v2384, %v2496
        %v2498 = vpop.f32.mrb[0].mxu0
        %v2499 = vadd.f32 %v2386, %v2498
        %2500 = vdwg.mxu0
        %2501 = vmatprep.subr.bf16.mxu0 %v1604
        %2502 = vmatpush1.bf16.msra.mxu0 %v1603
        %2503 = vmatprep.subr.bf16.mxu0 %v1608
        %2504 = vmatpush1.bf16.msra.mxu0 %v1607
        %2505 = vmatprep.subr.bf16.mxu0 %v1612
        %2506 = vmatpush1.bf16.msra.mxu0 %v1611
        %2507 = vmatprep.subr.bf16.mxu0 %v1616
        %2508 = vmatpush1.bf16.msra.mxu0 %v1615
        %2509 = vmatprep.subr.bf16.mxu0 %v1620
        %2510 = vmatpush1.bf16.msra.mxu0 %v1619
        %2511 = vmatprep.subr.bf16.mxu0 %v1624
        %2512 = vmatpush1.bf16.msra.mxu0 %v1623
        %2513 = vmatprep.subr.bf16.mxu0 %v1628
        %2514 = vmatpush1.bf16.msra.mxu0 %v1627
        %2515 = vmatprep.subr.bf16.mxu0 %v1632
        %2516 = vmatpush1.bf16.msra.mxu0 %v1631
        %2517 = vmatprep.subr.bf16.mxu0 %v1636
        %2518 = vmatpush1.bf16.msra.mxu0 %v1635
        %2519 = vmatprep.subr.bf16.mxu0 %v1640
        %2520 = vmatpush1.bf16.msra.mxu0 %v1639
        %2521 = vmatprep.subr.bf16.mxu0 %v1644
        %2522 = vmatpush1.bf16.msra.mxu0 %v1643
        %2523 = vmatprep.subr.bf16.mxu0 %v1648
        %2524 = vmatpush1.bf16.msra.mxu0 %v1647
        %2525 = vmatprep.subr.bf16.mxu0 %v1652
        %2526 = vmatpush1.bf16.msra.mxu0 %v1651
        %2527 = vmatprep.subr.bf16.mxu0 %v1656
        %2528 = vmatpush1.bf16.msra.mxu0 %v1655
        %2529 = vmatprep.subr.bf16.mxu0 %v1660
        %2530 = vmatpush1.bf16.msra.mxu0 %v1659
        %2531 = vmatprep.subr.bf16.mxu0 %v1664
        %2532 = vmatpush1.bf16.msra.mxu0 %v1663
        %2533 = vmatprep.mubr.bf16.mxu0 %v818
        %2534 = vmatmul.mubr.bf16.gmra.mrb[0].mxu0 %v817
        %v2535 = vpop.f32.mrb[0].mxu0
        %v2536 = vadd.f32 %v632, %v2535
        %v2537 = vpop.f32.mrb[0].mxu0
        %v2538 = vadd.f32 %v636, %v2537
        %v2539 = vpop.f32.mrb[0].mxu0
        %v2540 = vadd.f32 %v632, %v2539
        %v2541 = vpop.f32.mrb[0].mxu0
        %v2542 = vadd.f32 %v636, %v2541
        %2543 = vmatprep.mubr.bf16.mxu0 %v825
        %2544 = vmatmul.mubr.bf16.gmra.mrb[0].mxu0 %v824
        %v2545 = vpop.f32.mrb[0].mxu0
        %v2546 = vadd.f32 %v632, %v2545
        %v2547 = vpop.f32.mrb[0].mxu0
        %v2548 = vadd.f32 %v636, %v2547
        %v2549 = vpop.f32.mrb[0].mxu0
        %v2550 = vadd.f32 %v632, %v2549
        %v2551 = vpop.f32.mrb[0].mxu0
        %v2552 = vadd.f32 %v636, %v2551
        %2553 = vmatprep.mubr.bf16.mxu0 %v832
        %2554 = vmatmul.mubr.bf16.gmra.mrb[0].mxu0 %v831
        %v2555 = vpop.f32.mrb[0].mxu0
        %v2556 = vadd.f32 %v632, %v2555
        %v2557 = vpop.f32.mrb[0].mxu0
        %v2558 = vadd.f32 %v636, %v2557
        %v2559 = vpop.f32.mrb[0].mxu0
        %v2560 = vadd.f32 %v632, %v2559
        %v2561 = vpop.f32.mrb[0].mxu0
        %v2562 = vadd.f32 %v636, %v2561
        %2563 = vmatprep.mubr.bf16.mxu0 %v839
        %2564 = vmatmul.mubr.bf16.gmra.mrb[0].mxu0 %v838
        %v2565 = vpop.f32.mrb[0].mxu0
        %v2566 = vadd.f32 %v632, %v2565
        %v2567 = vpop.f32.mrb[0].mxu0
        %v2568 = vadd.f32 %v636, %v2567
        %v2569 = vpop.f32.mrb[0].mxu0
        %v2570 = vadd.f32 %v632, %v2569
        %v2571 = vpop.f32.mrb[0].mxu0
        %v2572 = vadd.f32 %v636, %v2571
        %2573 = vmatprep.mubr.bf16.mxu0 %v846
        %2574 = vmatmul.mubr.bf16.gmra.mrb[0].mxu0 %v845
        %v2575 = vpop.f32.mrb[0].mxu0
        %v2576 = vadd.f32 %v632, %v2575
        %v2577 = vpop.f32.mrb[0].mxu0
        %v2578 = vadd.f32 %v636, %v2577
        %v2579 = vpop.f32.mrb[0].mxu0
        %v2580 = vadd.f32 %v632, %v2579
        %v2581 = vpop.f32.mrb[0].mxu0
        %v2582 = vadd.f32 %v636, %v2581
        %2583 = vmatprep.mubr.bf16.mxu0 %v853
        %2584 = vmatmul.mubr.bf16.gmra.mrb[0].mxu0 %v852
        %v2585 = vpop.f32.mrb[0].mxu0
        %v2586 = vadd.f32 %v632, %v2585
        %v2587 = vpop.f32.mrb[0].mxu0
        %v2588 = vadd.f32 %v636, %v2587
        %v2589 = vpop.f32.mrb[0].mxu0
        %v2590 = vadd.f32 %v632, %v2589
        %v2591 = vpop.f32.mrb[0].mxu0
        %v2592 = vadd.f32 %v636, %v2591
        %2593 = vmatprep.mubr.bf16.mxu0 %v860
        %2594 = vmatmul.mubr.bf16.gmra.mrb[0].mxu0 %v859
        %v2595 = vpop.f32.mrb[0].mxu0
        %v2596 = vadd.f32 %v632, %v2595
        %v2597 = vpop.f32.mrb[0].mxu0
        %v2598 = vadd.f32 %v636, %v2597
        %v2599 = vpop.f32.mrb[0].mxu0
        %v2600 = vadd.f32 %v632, %v2599
        %v2601 = vpop.f32.mrb[0].mxu0
        %v2602 = vadd.f32 %v636, %v2601
        %2603 = vmatprep.mubr.bf16.mxu0 %v867
        %2604 = vmatmul.mubr.bf16.gmra.mrb[0].mxu0 %v866
        %v2605 = vpop.f32.mrb[0].mxu0
        %v2606 = vadd.f32 %v632, %v2605
        %v2607 = vpop.f32.mrb[0].mxu0
        %v2608 = vadd.f32 %v636, %v2607
        %v2609 = vpop.f32.mrb[0].mxu0
        %v2610 = vadd.f32 %v632, %v2609
        %v2611 = vpop.f32.mrb[0].mxu0
        %v2612 = vadd.f32 %v636, %v2611
        %2613 = vdwg.mxu0
        %2614 = vmatprep.subr.bf16.mxu0 %v1668
        %2615 = vmatpush1.bf16.msra.mxu0 %v1667
        %2616 = vmatprep.subr.bf16.mxu0 %v1672
        %2617 = vmatpush1.bf16.msra.mxu0 %v1671
        %2618 = vmatprep.subr.bf16.mxu0 %v1676
        %2619 = vmatpush1.bf16.msra.mxu0 %v1675
        %2620 = vmatprep.subr.bf16.mxu0 %v1680
        %2621 = vmatpush1.bf16.msra.mxu0 %v1679
        %2622 = vmatprep.subr.bf16.mxu0 %v1684
        %2623 = vmatpush1.bf16.msra.mxu0 %v1683
        %2624 = vmatprep.subr.bf16.mxu0 %v1688
        %2625 = vmatpush1.bf16.msra.mxu0 %v1687
        %2626 = vmatprep.subr.bf16.mxu0 %v1692
        %2627 = vmatpush1.bf16.msra.mxu0 %v1691
        %2628 = vmatprep.subr.bf16.mxu0 %v1696
        %2629 = vmatpush1.bf16.msra.mxu0 %v1695
        %2630 = vmatprep.subr.bf16.mxu0 %v1700
        %2631 = vmatpush1.bf16.msra.mxu0 %v1699
        %2632 = vmatprep.subr.bf16.mxu0 %v1704
        %2633 = vmatpush1.bf16.msra.mxu0 %v1703
        %2634 = vmatprep.subr.bf16.mxu0 %v1708
        %2635 = vmatpush1.bf16.msra.mxu0 %v1707
        %2636 = vmatprep.subr.bf16.mxu0 %v1712
        %2637 = vmatpush1.bf16.msra.mxu0 %v1711
        %2638 = vmatprep.subr.bf16.mxu0 %v1716
        %2639 = vmatpush1.bf16.msra.mxu0 %v1715
        %2640 = vmatprep.subr.bf16.mxu0 %v1720
        %2641 = vmatpush1.bf16.msra.mxu0 %v1719
        %2642 = vmatprep.subr.bf16.mxu0 %v1724
        %2643 = vmatpush1.bf16.msra.mxu0 %v1723
        %2644 = vmatprep.subr.bf16.mxu0 %v1728
        %2645 = vmatpush1.bf16.msra.mxu0 %v1727
        %2646 = vmatprep.mubr.bf16.mxu0 %v820
        %2647 = vmatmul.mubr.bf16.gmra.mrb[0].mxu0 %v819
        %v2648 = vpop.f32.mrb[0].mxu0
        %v2649 = vadd.f32 %v2536, %v2648
        %v2650 = vpop.f32.mrb[0].mxu0
        %v2651 = vadd.f32 %v2538, %v2650
        %v2652 = vpop.f32.mrb[0].mxu0
        %v2653 = vadd.f32 %v2540, %v2652
        %v2654 = vpop.f32.mrb[0].mxu0
        %v2655 = vadd.f32 %v2542, %v2654
        %2656 = vmatprep.mubr.bf16.mxu0 %v827
        %2657 = vmatmul.mubr.bf16.gmra.mrb[0].mxu0 %v826
        %v2658 = vpop.f32.mrb[0].mxu0
        %v2659 = vadd.f32 %v2546, %v2658
        %v2660 = vpop.f32.mrb[0].mxu0
        %v2661 = vadd.f32 %v2548, %v2660
        %v2662 = vpop.f32.mrb[0].mxu0
        %v2663 = vadd.f32 %v2550, %v2662
        %v2664 = vpop.f32.mrb[0].mxu0
        %v2665 = vadd.f32 %v2552, %v2664
        %2666 = vmatprep.mubr.bf16.mxu0 %v834
        %2667 = vmatmul.mubr.bf16.gmra.mrb[0].mxu0 %v833
        %v2668 = vpop.f32.mrb[0].mxu0
        %v2669 = vadd.f32 %v2556, %v2668
        %v2670 = vpop.f32.mrb[0].mxu0
        %v2671 = vadd.f32 %v2558, %v2670
        %v2672 = vpop.f32.mrb[0].mxu0
        %v2673 = vadd.f32 %v2560, %v2672
        %v2674 = vpop.f32.mrb[0].mxu0
        %v2675 = vadd.f32 %v2562, %v2674
        %2676 = vmatprep.mubr.bf16.mxu0 %v841
        %2677 = vmatmul.mubr.bf16.gmra.mrb[0].mxu0 %v840
        %v2678 = vpop.f32.mrb[0].mxu0
        %v2679 = vadd.f32 %v2566, %v2678
        %v2680 = vpop.f32.mrb[0].mxu0
        %v2681 = vadd.f32 %v2568, %v2680
        %v2682 = vpop.f32.mrb[0].mxu0
        %v2683 = vadd.f32 %v2570, %v2682
        %v2684 = vpop.f32.mrb[0].mxu0
        %v2685 = vadd.f32 %v2572, %v2684
        %2686 = vmatprep.mubr.bf16.mxu0 %v848
        %2687 = vmatmul.mubr.bf16.gmra.mrb[0].mxu0 %v847
        %v2688 = vpop.f32.mrb[0].mxu0
        %v2689 = vadd.f32 %v2576, %v2688
        %v2690 = vpop.f32.mrb[0].mxu0
        %v2691 = vadd.f32 %v2578, %v2690
        %v2692 = vpop.f32.mrb[0].mxu0
        %v2693 = vadd.f32 %v2580, %v2692
        %v2694 = vpop.f32.mrb[0].mxu0
        %v2695 = vadd.f32 %v2582, %v2694
        %2696 = vmatprep.mubr.bf16.mxu0 %v855
        %2697 = vmatmul.mubr.bf16.gmra.mrb[0].mxu0 %v854
        %v2698 = vpop.f32.mrb[0].mxu0
        %v2699 = vadd.f32 %v2586, %v2698
        %v2700 = vpop.f32.mrb[0].mxu0
        %v2701 = vadd.f32 %v2588, %v2700
        %v2702 = vpop.f32.mrb[0].mxu0
        %v2703 = vadd.f32 %v2590, %v2702
        %v2704 = vpop.f32.mrb[0].mxu0
        %v2705 = vadd.f32 %v2592, %v2704
        %2706 = vmatprep.mubr.bf16.mxu0 %v862
        %2707 = vmatmul.mubr.bf16.gmra.mrb[0].mxu0 %v861
        %v2708 = vpop.f32.mrb[0].mxu0
        %v2709 = vadd.f32 %v2596, %v2708
        %v2710 = vpop.f32.mrb[0].mxu0
        %v2711 = vadd.f32 %v2598, %v2710
        %v2712 = vpop.f32.mrb[0].mxu0
        %v2713 = vadd.f32 %v2600, %v2712
        %v2714 = vpop.f32.mrb[0].mxu0
        %v2715 = vadd.f32 %v2602, %v2714
        %2716 = vmatprep.mubr.bf16.mxu0 %v869
        %2717 = vmatmul.mubr.bf16.gmra.mrb[0].mxu0 %v868
        %v2718 = vpop.f32.mrb[0].mxu0
        %v2719 = vadd.f32 %v2606, %v2718
        %v2720 = vpop.f32.mrb[0].mxu0
        %v2721 = vadd.f32 %v2608, %v2720
        %v2722 = vpop.f32.mrb[0].mxu0
        %v2723 = vadd.f32 %v2610, %v2722
        %v2724 = vpop.f32.mrb[0].mxu0
        %v2725 = vadd.f32 %v2612, %v2724
        %2726 = vdwg.mxu0
        %2727 = vmatprep.subr.bf16.mxu0 %v1732
        %2728 = vmatpush1.bf16.msra.mxu0 %v1731
        %2729 = vmatprep.subr.bf16.mxu0 %v1736
        %2730 = vmatpush1.bf16.msra.mxu0 %v1735
        %2731 = vmatprep.subr.bf16.mxu0 %v1740
        %2732 = vmatpush1.bf16.msra.mxu0 %v1739
        %2733 = vmatprep.subr.bf16.mxu0 %v1744
        %2734 = vmatpush1.bf16.msra.mxu0 %v1743
        %2735 = vmatprep.subr.bf16.mxu0 %v1748
        %2736 = vmatpush1.bf16.msra.mxu0 %v1747
        %2737 = vmatprep.subr.bf16.mxu0 %v1752
        %2738 = vmatpush1.bf16.msra.mxu0 %v1751
        %2739 = vmatprep.subr.bf16.mxu0 %v1756
        %2740 = vmatpush1.bf16.msra.mxu0 %v1755
        %2741 = vmatprep.subr.bf16.mxu0 %v1760
        %2742 = vmatpush1.bf16.msra.mxu0 %v1759
        %2743 = vmatprep.subr.bf16.mxu0 %v1764
        %2744 = vmatpush1.bf16.msra.mxu0 %v1763
        %2745 = vmatprep.subr.bf16.mxu0 %v1768
        %2746 = vmatpush1.bf16.msra.mxu0 %v1767
        %2747 = vmatprep.subr.bf16.mxu0 %v1772
        %2748 = vmatpush1.bf16.msra.mxu0 %v1771
        %2749 = vmatprep.subr.bf16.mxu0 %v1776
        %2750 = vmatpush1.bf16.msra.mxu0 %v1775
        %2751 = vmatprep.subr.bf16.mxu0 %v1780
        %2752 = vmatpush1.bf16.msra.mxu0 %v1779
        %2753 = vmatprep.subr.bf16.mxu0 %v1784
        %2754 = vmatpush1.bf16.msra.mxu0 %v1783
        %2755 = vmatprep.subr.bf16.mxu0 %v1788
        %2756 = vmatpush1.bf16.msra.mxu0 %v1787
        %2757 = vmatprep.subr.bf16.mxu0 %v1792
        %2758 = vmatpush1.bf16.msra.mxu0 %v1791
        %2759 = vmatprep.mubr.bf16.mxu0 %v822
        %2760 = vmatmul.mubr.bf16.gmra.mrb[0].mxu0 %v821
        %v2761 = vpop.f32.mrb[0].mxu0
        %v2762 = vadd.f32 %v2649, %v2761
        %v2763 = vpop.f32.mrb[0].mxu0
        %v2764 = vadd.f32 %v2651, %v2763
        %v2765 = vpop.f32.mrb[0].mxu0
        %v2766 = vadd.f32 %v2653, %v2765
        %v2767 = vpop.f32.mrb[0].mxu0
        %v2768 = vadd.f32 %v2655, %v2767
        %2769 = vmatprep.mubr.bf16.mxu0 %v829
        %2770 = vmatmul.mubr.bf16.gmra.mrb[0].mxu0 %v828
        %v2771 = vpop.f32.mrb[0].mxu0
        %v2772 = vadd.f32 %v2659, %v2771
        %v2773 = vpop.f32.mrb[0].mxu0
        %v2774 = vadd.f32 %v2661, %v2773
        %v2775 = vpop.f32.mrb[0].mxu0
        %v2776 = vadd.f32 %v2663, %v2775
        %v2777 = vpop.f32.mrb[0].mxu0
        %v2778 = vadd.f32 %v2665, %v2777
        %2779 = vmatprep.mubr.bf16.mxu0 %v836
        %2780 = vmatmul.mubr.bf16.gmra.mrb[0].mxu0 %v835
        %v2781 = vpop.f32.mrb[0].mxu0
        %v2782 = vadd.f32 %v2669, %v2781
        %v2783 = vpop.f32.mrb[0].mxu0
        %v2784 = vadd.f32 %v2671, %v2783
        %v2785 = vpop.f32.mrb[0].mxu0
        %v2786 = vadd.f32 %v2673, %v2785
        %v2787 = vpop.f32.mrb[0].mxu0
        %v2788 = vadd.f32 %v2675, %v2787
        %2789 = vmatprep.mubr.bf16.mxu0 %v843
        %2790 = vmatmul.mubr.bf16.gmra.mrb[0].mxu0 %v842
        %v2791 = vpop.f32.mrb[0].mxu0
        %v2792 = vadd.f32 %v2679, %v2791
        %v2793 = vpop.f32.mrb[0].mxu0
        %v2794 = vadd.f32 %v2681, %v2793
        %v2795 = vpop.f32.mrb[0].mxu0
        %v2796 = vadd.f32 %v2683, %v2795
        %v2797 = vpop.f32.mrb[0].mxu0
        %v2798 = vadd.f32 %v2685, %v2797
        %2799 = vmatprep.mubr.bf16.mxu0 %v850
        %2800 = vmatmul.mubr.bf16.gmra.mrb[0].mxu0 %v849
        %v2801 = vpop.f32.mrb[0].mxu0
        %v2802 = vadd.f32 %v2689, %v2801
        %v2803 = vpop.f32.mrb[0].mxu0
        %v2804 = vadd.f32 %v2691, %v2803
        %v2805 = vpop.f32.mrb[0].mxu0
        %v2806 = vadd.f32 %v2693, %v2805
        %v2807 = vpop.f32.mrb[0].mxu0
        %v2808 = vadd.f32 %v2695, %v2807
        %2809 = vmatprep.mubr.bf16.mxu0 %v857
        %2810 = vmatmul.mubr.bf16.gmra.mrb[0].mxu0 %v856
        %v2811 = vpop.f32.mrb[0].mxu0
        %v2812 = vadd.f32 %v2699, %v2811
        %v2813 = vpop.f32.mrb[0].mxu0
        %v2814 = vadd.f32 %v2701, %v2813
        %v2815 = vpop.f32.mrb[0].mxu0
        %v2816 = vadd.f32 %v2703, %v2815
        %v2817 = vpop.f32.mrb[0].mxu0
        %v2818 = vadd.f32 %v2705, %v2817
        %2819 = vmatprep.mubr.bf16.mxu0 %v864
        %2820 = vmatmul.mubr.bf16.gmra.mrb[0].mxu0 %v863
        %v2821 = vpop.f32.mrb[0].mxu0
        %v2822 = vadd.f32 %v2709, %v2821
        %v2823 = vpop.f32.mrb[0].mxu0
        %v2824 = vadd.f32 %v2711, %v2823
        %v2825 = vpop.f32.mrb[0].mxu0
        %v2826 = vadd.f32 %v2713, %v2825
        %v2827 = vpop.f32.mrb[0].mxu0
        %v2828 = vadd.f32 %v2715, %v2827
        %2829 = vmatprep.mubr.bf16.mxu0 %v871
        %2830 = vmatmul.mubr.bf16.gmra.mrb[0].mxu0 %v870
        %v2831 = vpop.f32.mrb[0].mxu0
        %v2832 = vadd.f32 %v2719, %v2831
        %v2833 = vpop.f32.mrb[0].mxu0
        %v2834 = vadd.f32 %v2721, %v2833
        %v2835 = vpop.f32.mrb[0].mxu0
        %v2836 = vadd.f32 %v2723, %v2835
        %v2837 = vpop.f32.mrb[0].mxu0
        %v2838 = vadd.f32 %v2725, %v2837
        %2839 = vdwg.mxu0
        %2840 = vmatprep.subr.bf16.mxu0 %v1796
        %2841 = vmatpush1.bf16.msra.mxu0 %v1795
        %2842 = vmatprep.subr.bf16.mxu0 %v1800
        %2843 = vmatpush1.bf16.msra.mxu0 %v1799
        %2844 = vmatprep.subr.bf16.mxu0 %v1804
        %2845 = vmatpush1.bf16.msra.mxu0 %v1803
        %2846 = vmatprep.subr.bf16.mxu0 %v1808
        %2847 = vmatpush1.bf16.msra.mxu0 %v1807
        %2848 = vmatprep.subr.bf16.mxu0 %v1812
        %2849 = vmatpush1.bf16.msra.mxu0 %v1811
        %2850 = vmatprep.subr.bf16.mxu0 %v1816
        %2851 = vmatpush1.bf16.msra.mxu0 %v1815
        %2852 = vmatprep.subr.bf16.mxu0 %v1820
        %2853 = vmatpush1.bf16.msra.mxu0 %v1819
        %2854 = vmatprep.subr.bf16.mxu0 %v1824
        %2855 = vmatpush1.bf16.msra.mxu0 %v1823
        %2856 = vmatprep.subr.bf16.mxu0 0
        %2857 = vmatpush1.bf16.msra.mxu0 0
        %2858 = vmatprep.subr.bf16.mxu0 0
        %2859 = vmatpush1.bf16.msra.mxu0 0
        %2860 = vmatprep.subr.bf16.mxu0 0
        %2861 = vmatpush1.bf16.msra.mxu0 0
        %2862 = vmatprep.subr.bf16.mxu0 0
        %2863 = vmatpush1.bf16.msra.mxu0 0
        %2864 = vmatprep.subr.bf16.mxu0 0
        %2865 = vmatpush1.bf16.msra.mxu0 0
        %2866 = vmatprep.subr.bf16.mxu0 0
        %2867 = vmatpush1.bf16.msra.mxu0 0
        %2868 = vmatprep.subr.bf16.mxu0 0
        %2869 = vmatpush1.bf16.msra.mxu0 0
        %2870 = vmatprep.subr.bf16.mxu0 0
        %2871 = vmatpush1.bf16.msra.mxu0 0
        %2872 = vmatprep.mubr.bf16.mxu0 0
        %2873 = vmatmul.mubr.bf16.gmra.mrb[0].mxu0 %v823
        %v2874 = vpop.f32.mrb[0].mxu0
        %v2875 = vadd.f32 %v2762, %v2874
        %v2876 = vpop.f32.mrb[0].mxu0
        %v2877 = vadd.f32 %v2764, %v2876
        %v2878 = vpop.f32.mrb[0].mxu0
        %v2879 = vadd.f32 %v2766, %v2878
        %v2880 = vpop.f32.mrb[0].mxu0
        %v2881 = vadd.f32 %v2768, %v2880
        %2882 = vmatprep.mubr.bf16.mxu0 0
        %2883 = vmatmul.mubr.bf16.gmra.mrb[0].mxu0 %v830
        %v2884 = vpop.f32.mrb[0].mxu0
        %v2885 = vadd.f32 %v2772, %v2884
        %v2886 = vpop.f32.mrb[0].mxu0
        %v2887 = vadd.f32 %v2774, %v2886
        %v2888 = vpop.f32.mrb[0].mxu0
        %v2889 = vadd.f32 %v2776, %v2888
        %v2890 = vpop.f32.mrb[0].mxu0
        %v2891 = vadd.f32 %v2778, %v2890
        %2892 = vmatprep.mubr.bf16.mxu0 0
        %2893 = vmatmul.mubr.bf16.gmra.mrb[0].mxu0 %v837
        %v2894 = vpop.f32.mrb[0].mxu0
        %v2895 = vadd.f32 %v2782, %v2894
        %v2896 = vpop.f32.mrb[0].mxu0
        %v2897 = vadd.f32 %v2784, %v2896
        %v2898 = vpop.f32.mrb[0].mxu0
        %v2899 = vadd.f32 %v2786, %v2898
        %v2900 = vpop.f32.mrb[0].mxu0
        %v2901 = vadd.f32 %v2788, %v2900
        %2902 = vmatprep.mubr.bf16.mxu0 0
        %2903 = vmatmul.mubr.bf16.gmra.mrb[0].mxu0 %v844
        %v2904 = vpop.f32.mrb[0].mxu0
        %v2905 = vadd.f32 %v2792, %v2904
        %v2906 = vpop.f32.mrb[0].mxu0
        %v2907 = vadd.f32 %v2794, %v2906
        %v2908 = vpop.f32.mrb[0].mxu0
        %v2909 = vadd.f32 %v2796, %v2908
        %v2910 = vpop.f32.mrb[0].mxu0
        %v2911 = vadd.f32 %v2798, %v2910
        %2912 = vmatprep.mubr.bf16.mxu0 0
        %2913 = vmatmul.mubr.bf16.gmra.mrb[0].mxu0 %v851
        %v2914 = vpop.f32.mrb[0].mxu0
        %v2915 = vadd.f32 %v2802, %v2914
        %v2916 = vpop.f32.mrb[0].mxu0
        %v2917 = vadd.f32 %v2804, %v2916
        %v2918 = vpop.f32.mrb[0].mxu0
        %v2919 = vadd.f32 %v2806, %v2918
        %v2920 = vpop.f32.mrb[0].mxu0
        %v2921 = vadd.f32 %v2808, %v2920
        %2922 = vmatprep.mubr.bf16.mxu0 0
        %2923 = vmatmul.mubr.bf16.gmra.mrb[0].mxu0 %v858
        %v2924 = vpop.f32.mrb[0].mxu0
        %v2925 = vadd.f32 %v2812, %v2924
        %v2926 = vpop.f32.mrb[0].mxu0
        %v2927 = vadd.f32 %v2814, %v2926
        %v2928 = vpop.f32.mrb[0].mxu0
        %v2929 = vadd.f32 %v2816, %v2928
        %v2930 = vpop.f32.mrb[0].mxu0
        %v2931 = vadd.f32 %v2818, %v2930
        %2932 = vmatprep.mubr.bf16.mxu0 0
        %2933 = vmatmul.mubr.bf16.gmra.mrb[0].mxu0 %v865
        %v2934 = vpop.f32.mrb[0].mxu0
        %v2935 = vadd.f32 %v2822, %v2934
        %v2936 = vpop.f32.mrb[0].mxu0
        %v2937 = vadd.f32 %v2824, %v2936
        %v2938 = vpop.f32.mrb[0].mxu0
        %v2939 = vadd.f32 %v2826, %v2938
        %v2940 = vpop.f32.mrb[0].mxu0
        %v2941 = vadd.f32 %v2828, %v2940
        %2942 = vmatprep.mubr.bf16.mxu0 0
        %2943 = vmatmul.mubr.bf16.gmra.mrb[0].mxu0 %v872
        %v2944 = vpop.f32.mrb[0].mxu0
        %v2945 = vadd.f32 %v2832, %v2944
        %v2946 = vpop.f32.mrb[0].mxu0
        %v2947 = vadd.f32 %v2834, %v2946
        %v2948 = vpop.f32.mrb[0].mxu0
        %v2949 = vadd.f32 %v2836, %v2948
        %v2950 = vpop.f32.mrb[0].mxu0
        %v2951 = vadd.f32 %v2838, %v2950
        %2952 = vdwg.mxu0
        %vm2953 = vcmp.gt.f32.partialorder %v2423, 0.0
        %vm2954 = vcmp.gt.f32.partialorder %v2425, 0.0
        %vm2955 = vcmp.gt.f32.partialorder %v2875, 0.0
        %vm2956 = vcmp.gt.f32.partialorder %v2877, 0.0
        %vm2957 = vcmp.gt.f32.partialorder %v2427, 0.0
        %vm2958 = vcmp.gt.f32.partialorder %v2429, 0.0
        %vm2959 = vcmp.gt.f32.partialorder %v2879, 0.0
        %vm2960 = vcmp.gt.f32.partialorder %v2881, 0.0
        %vm2961 = vcmp.gt.f32.partialorder %v2433, 0.0
        %vm2962 = vcmp.gt.f32.partialorder %v2435, 0.0
        %vm2963 = vcmp.gt.f32.partialorder %v2885, 0.0
        %vm2964 = vcmp.gt.f32.partialorder %v2887, 0.0
        %vm2965 = vcmp.gt.f32.partialorder %v2437, 0.0
        %vm2966 = vcmp.gt.f32.partialorder %v2439, 0.0
        %vm2967 = vcmp.gt.f32.partialorder %v2889, 0.0
        %vm2968 = vcmp.gt.f32.partialorder %v2891, 0.0
        %vm2969 = vcmp.gt.f32.partialorder %v2443, 0.0
        %vm2970 = vcmp.gt.f32.partialorder %v2445, 0.0
        %vm2971 = vcmp.gt.f32.partialorder %v2895, 0.0
        %vm2972 = vcmp.gt.f32.partialorder %v2897, 0.0
        %vm2973 = vcmp.gt.f32.partialorder %v2447, 0.0
        %vm2974 = vcmp.gt.f32.partialorder %v2449, 0.0
        %vm2975 = vcmp.gt.f32.partialorder %v2899, 0.0
        %vm2976 = vcmp.gt.f32.partialorder %v2901, 0.0
        %vm2977 = vcmp.gt.f32.partialorder %v2453, 0.0
        %vm2978 = vcmp.gt.f32.partialorder %v2455, 0.0
        %vm2979 = vcmp.gt.f32.partialorder %v2905, 0.0
        %vm2980 = vcmp.gt.f32.partialorder %v2907, 0.0
        %vm2981 = vcmp.gt.f32.partialorder %v2457, 0.0
        %vm2982 = vcmp.gt.f32.partialorder %v2459, 0.0
        %vm2983 = vcmp.gt.f32.partialorder %v2909, 0.0
        %vm2984 = vcmp.gt.f32.partialorder %v2911, 0.0
        %vm2985 = vcmp.gt.f32.partialorder %v2463, 0.0
        %vm2986 = vcmp.gt.f32.partialorder %v2465, 0.0
        %vm2987 = vcmp.gt.f32.partialorder %v2915, 0.0
        %vm2988 = vcmp.gt.f32.partialorder %v2917, 0.0
        %vm2989 = vcmp.gt.f32.partialorder %v2467, 0.0
        %vm2990 = vcmp.gt.f32.partialorder %v2469, 0.0
        %vm2991 = vcmp.gt.f32.partialorder %v2919, 0.0
        %vm2992 = vcmp.gt.f32.partialorder %v2921, 0.0
        %vm2993 = vcmp.gt.f32.partialorder %v2473, 0.0
        %vm2994 = vcmp.gt.f32.partialorder %v2475, 0.0
        %vm2995 = vcmp.gt.f32.partialorder %v2925, 0.0
        %vm2996 = vcmp.gt.f32.partialorder %v2927, 0.0
        %vm2997 = vcmp.gt.f32.partialorder %v2477, 0.0
        %vm2998 = vcmp.gt.f32.partialorder %v2479, 0.0
        %vm2999 = vcmp.gt.f32.partialorder %v2929, 0.0
        %vm3000 = vcmp.gt.f32.partialorder %v2931, 0.0
        %vm3001 = vcmp.gt.f32.partialorder %v2483, 0.0
        %vm3002 = vcmp.gt.f32.partialorder %v2485, 0.0
        %vm3003 = vcmp.gt.f32.partialorder %v2935, 0.0
        %vm3004 = vcmp.gt.f32.partialorder %v2937, 0.0
        %vm3005 = vcmp.gt.f32.partialorder %v2487, 0.0
        %vm3006 = vcmp.gt.f32.partialorder %v2489, 0.0
        %vm3007 = vcmp.gt.f32.partialorder %v2939, 0.0
        %vm3008 = vcmp.gt.f32.partialorder %v2941, 0.0
        %vm3009 = vcmp.gt.f32.partialorder %v2493, 0.0
        %vm3010 = vcmp.gt.f32.partialorder %v2495, 0.0
        %vm3011 = vcmp.gt.f32.partialorder %v2945, 0.0
        %vm3012 = vcmp.gt.f32.partialorder %v2947, 0.0
        %vm3013 = vcmp.gt.f32.partialorder %v2497, 0.0
        %vm3014 = vcmp.gt.f32.partialorder %v2499, 0.0
        %vm3015 = vcmp.gt.f32.partialorder %v2949, 0.0
        %vm3016 = vcmp.gt.f32.partialorder %v2951, 0.0
        %v3017 = vmul.f32 %v2423, 0.2
        %v3018 = vmul.f32 %v2425, 0.2
        %v3019 = vmul.f32 %v2875, 0.2
        %v3020 = vmul.f32 %v2877, 0.2
        %v3021 = vmul.f32 %v2427, 0.2
        %v3022 = vmul.f32 %v2429, 0.2
        %v3023 = vmul.f32 %v2879, 0.2
        %v3024 = vmul.f32 %v2881, 0.2
        %v3025 = vmul.f32 %v2433, 0.2
        %v3026 = vmul.f32 %v2435, 0.2
        %v3027 = vmul.f32 %v2885, 0.2
        %v3028 = vmul.f32 %v2887, 0.2
        %v3029 = vmul.f32 %v2437, 0.2
        %v3030 = vmul.f32 %v2439, 0.2
        %v3031 = vmul.f32 %v2889, 0.2
        %v3032 = vmul.f32 %v2891, 0.2
        %v3033 = vmul.f32 %v2443, 0.2
        %v3034 = vmul.f32 %v2445, 0.2
        %v3035 = vmul.f32 %v2895, 0.2
        %v3036 = vmul.f32 %v2897, 0.2
        %v3037 = vmul.f32 %v2447, 0.2
        %v3038 = vmul.f32 %v2449, 0.2
        %v3039 = vmul.f32 %v2899, 0.2
        %v3040 = vmul.f32 %v2901, 0.2
        %v3041 = vmul.f32 %v2453, 0.2
        %v3042 = vmul.f32 %v2455, 0.2
        %v3043 = vmul.f32 %v2905, 0.2
        %v3044 = vmul.f32 %v2907, 0.2
        %v3045 = vmul.f32 %v2457, 0.2
        %v3046 = vmul.f32 %v2459, 0.2
        %v3047 = vmul.f32 %v2909, 0.2
        %v3048 = vmul.f32 %v2911, 0.2
        %v3049 = vmul.f32 %v2463, 0.2
        %v3050 = vmul.f32 %v2465, 0.2
        %v3051 = vmul.f32 %v2915, 0.2
        %v3052 = vmul.f32 %v2917, 0.2
        %v3053 = vmul.f32 %v2467, 0.2
        %v3054 = vmul.f32 %v2469, 0.2
        %v3055 = vmul.f32 %v2919, 0.2
        %v3056 = vmul.f32 %v2921, 0.2
        %v3057 = vmul.f32 %v2473, 0.2
        %v3058 = vmul.f32 %v2475, 0.2
        %v3059 = vmul.f32 %v2925, 0.2
        %v3060 = vmul.f32 %v2927, 0.2
        %v3061 = vmul.f32 %v2477, 0.2
        %v3062 = vmul.f32 %v2479, 0.2
        %v3063 = vmul.f32 %v2929, 0.2
        %v3064 = vmul.f32 %v2931, 0.2
        %v3065 = vmul.f32 %v2483, 0.2
        %v3066 = vmul.f32 %v2485, 0.2
        %v3067 = vmul.f32 %v2935, 0.2
        %v3068 = vmul.f32 %v2937, 0.2
        %v3069 = vmul.f32 %v2487, 0.2
        %v3070 = vmul.f32 %v2489, 0.2
        %v3071 = vmul.f32 %v2939, 0.2
        %v3072 = vmul.f32 %v2941, 0.2
        %v3073 = vmul.f32 %v2493, 0.2
        %v3074 = vmul.f32 %v2495, 0.2
        %v3075 = vmul.f32 %v2945, 0.2
        %v3076 = vmul.f32 %v2947, 0.2
        %v3077 = vmul.f32 %v2497, 0.2
        %v3078 = vmul.f32 %v2499, 0.2
        %v3079 = vmul.f32 %v2949, 0.2
        %v3080 = vmul.f32 %v2951, 0.2
        %v3081 = vsel %vm2953, %v2423, %v3017
        %v3082 = vsel %vm2954, %v2425, %v3018
        %v3083 = vsel %vm2955, %v2875, %v3019
        %v3084 = vsel %vm2956, %v2877, %v3020
        %v3085 = vsel %vm2957, %v2427, %v3021
        %v3086 = vsel %vm2958, %v2429, %v3022
        %v3087 = vsel %vm2959, %v2879, %v3023
        %v3088 = vsel %vm2960, %v2881, %v3024
        %v3089 = vsel %vm2961, %v2433, %v3025
        %v3090 = vsel %vm2962, %v2435, %v3026
        %v3091 = vsel %vm2963, %v2885, %v3027
        %v3092 = vsel %vm2964, %v2887, %v3028
        %v3093 = vsel %vm2965, %v2437, %v3029
        %v3094 = vsel %vm2966, %v2439, %v3030
        %v3095 = vsel %vm2967, %v2889, %v3031
        %v3096 = vsel %vm2968, %v2891, %v3032
        %v3097 = vsel %vm2969, %v2443, %v3033
        %v3098 = vsel %vm2970, %v2445, %v3034
        %v3099 = vsel %vm2971, %v2895, %v3035
        %v3100 = vsel %vm2972, %v2897, %v3036
        %v3101 = vsel %vm2973, %v2447, %v3037
        %v3102 = vsel %vm2974, %v2449, %v3038
        %v3103 = vsel %vm2975, %v2899, %v3039
        %v3104 = vsel %vm2976, %v2901, %v3040
        %v3105 = vsel %vm2977, %v2453, %v3041
        %v3106 = vsel %vm2978, %v2455, %v3042
        %v3107 = vsel %vm2979, %v2905, %v3043
        %v3108 = vsel %vm2980, %v2907, %v3044
        %v3109 = vsel %vm2981, %v2457, %v3045
        %v3110 = vsel %vm2982, %v2459, %v3046
        %v3111 = vsel %vm2983, %v2909, %v3047
        %v3112 = vsel %vm2984, %v2911, %v3048
        %v3113 = vsel %vm2985, %v2463, %v3049
        %v3114 = vsel %vm2986, %v2465, %v3050
        %v3115 = vsel %vm2987, %v2915, %v3051
        %v3116 = vsel %vm2988, %v2917, %v3052
        %v3117 = vsel %vm2989, %v2467, %v3053
        %v3118 = vsel %vm2990, %v2469, %v3054
        %v3119 = vsel %vm2991, %v2919, %v3055
        %v3120 = vsel %vm2992, %v2921, %v3056
        %v3121 = vsel %vm2993, %v2473, %v3057
        %v3122 = vsel %vm2994, %v2475, %v3058
        %v3123 = vsel %vm2995, %v2925, %v3059
        %v3124 = vsel %vm2996, %v2927, %v3060
        %v3125 = vsel %vm2997, %v2477, %v3061
        %v3126 = vsel %vm2998, %v2479, %v3062
        %v3127 = vsel %vm2999, %v2929, %v3063
        %v3128 = vsel %vm3000, %v2931, %v3064
        %v3129 = vsel %vm3001, %v2483, %v3065
        %v3130 = vsel %vm3002, %v2485, %v3066
        %v3131 = vsel %vm3003, %v2935, %v3067
        %v3132 = vsel %vm3004, %v2937, %v3068
        %v3133 = vsel %vm3005, %v2487, %v3069
        %v3134 = vsel %vm3006, %v2489, %v3070
        %v3135 = vsel %vm3007, %v2939, %v3071
        %v3136 = vsel %vm3008, %v2941, %v3072
        %v3137 = vsel %vm3009, %v2493, %v3073
        %v3138 = vsel %vm3010, %v2495, %v3074
        %v3139 = vsel %vm3011, %v2945, %v3075
        %v3140 = vsel %vm3012, %v2947, %v3076
        %v3141 = vsel %vm3013, %v2497, %v3077
        %v3142 = vsel %vm3014, %v2499, %v3078
        %v3143 = vsel %vm3015, %v2949, %v3079
        %v3144 = vsel %vm3016, %v2951, %v3080
        %v3145 = vpack.c.bf16 %v3085, %v3081
        %v3146 = vpack.c.bf16 %v3086, %v3082
        %v3147 = vpack.c.bf16 %v3087, %v3083
        %v3148 = vpack.c.bf16 %v3088, %v3084
        %v3149 = vpack.c.bf16 %v3093, %v3089
        %v3150 = vpack.c.bf16 %v3094, %v3090
        %v3151 = vpack.c.bf16 %v3095, %v3091
        %v3152 = vpack.c.bf16 %v3096, %v3092
        %v3153 = vpack.c.bf16 %v3101, %v3097
        %v3154 = vpack.c.bf16 %v3102, %v3098
        %v3155 = vpack.c.bf16 %v3103, %v3099
        %v3156 = vpack.c.bf16 %v3104, %v3100
        %v3157 = vpack.c.bf16 %v3109, %v3105
        %v3158 = vpack.c.bf16 %v3110, %v3106
        %v3159 = vpack.c.bf16 %v3111, %v3107
        %v3160 = vpack.c.bf16 %v3112, %v3108
        %v3161 = vpack.c.bf16 %v3117, %v3113
        %v3162 = vpack.c.bf16 %v3118, %v3114
        %v3163 = vpack.c.bf16 %v3119, %v3115
        %v3164 = vpack.c.bf16 %v3120, %v3116
        %v3165 = vpack.c.bf16 %v3125, %v3121
        %v3166 = vpack.c.bf16 %v3126, %v3122
        %v3167 = vpack.c.bf16 %v3127, %v3123
        %v3168 = vpack.c.bf16 %v3128, %v3124
        %v3169 = vpack.c.bf16 %v3133, %v3129
        %v3170 = vpack.c.bf16 %v3134, %v3130
        %v3171 = vpack.c.bf16 %v3135, %v3131
        %v3172 = vpack.c.bf16 %v3136, %v3132
        %v3173 = vpack.c.bf16 %v3141, %v3137
        %v3174 = vpack.c.bf16 %v3142, %v3138
        %v3175 = vpack.c.bf16 %v3143, %v3139
        %v3176 = vpack.c.bf16 %v3144, %v3140
        %v3177 = vld [vmem:[#allocation8] sm:$0xff]
        %v3178 = vld [vmem:[#allocation8 + $0x8] sm:$0xff]
        %v3179 = vld [vmem:[#allocation8 + $0x10] sm:$0xff]
        %v3180 = vld [vmem:[#allocation8 + $0x18] sm:$0xff]
        %v3181 = vld [vmem:[#allocation8 + $0x20] sm:$0xff]
        %v3182 = vld [vmem:[#allocation8 + $0x28] sm:$0xff]
        %v3183 = vld [vmem:[#allocation8 + $0x30] sm:$0xff]
        %v3184 = vld [vmem:[#allocation8 + $0x38] sm:$0xff]
        %v3185 = vld [vmem:[#allocation8 + $0x40] sm:$0xff]
        %v3186 = vld [vmem:[#allocation8 + $0x48] sm:$0xff]
        %v3187 = vld [vmem:[#allocation8 + $0x50] sm:$0xff]
        %v3188 = vld [vmem:[#allocation8 + $0x58] sm:$0xff]
        %v3189 = vld [vmem:[#allocation8 + $0x60] sm:$0xff]
        %v3190 = vld [vmem:[#allocation8 + $0x68] sm:$0xff]
        %v3191 = vld [vmem:[#allocation8 + $0x70] sm:$0xff]
        %v3192 = vld [vmem:[#allocation8 + $0x78] sm:$0xff]
        %v3193 = vld [vmem:[#allocation8 + $0x80] sm:$0xff]
        %v3194 = vld [vmem:[#allocation8 + $0x88] sm:$0xff]
        %v3195 = vld [vmem:[#allocation8 + $0x90] sm:$0xff]
        %v3196 = vld [vmem:[#allocation8 + $0x98] sm:$0xff]
        %v3197 = vld [vmem:[#allocation8 + $0xa0] sm:$0xff]
        %v3198 = vld [vmem:[#allocation8 + $0xa8] sm:$0xff]
        %v3199 = vld [vmem:[#allocation8 + $0xb0] sm:$0xff]
        %v3200 = vld [vmem:[#allocation8 + $0xb8] sm:$0xff]
        %v3201 = vld [vmem:[#allocation8 + $0xc0] sm:$0xff]
        %v3202 = vld [vmem:[#allocation8 + $0xc8] sm:$0xff]
        %v3203 = vld [vmem:[#allocation8 + $0xd0] sm:$0xff]
        %v3204 = vld [vmem:[#allocation8 + $0xd8] sm:$0xff]
        %v3205 = vld [vmem:[#allocation8 + $0xe0] sm:$0xff]
        %v3206 = vld [vmem:[#allocation8 + $0xe8] sm:$0xff]
        %v3207 = vld [vmem:[#allocation8 + $0xf0] sm:$0xff]
        %v3208 = vld [vmem:[#allocation8 + $0xf8] sm:$0xff]
        %v3209 = vld [vmem:[#allocation8 + $0x100] sm:$0xff]
        %v3210 = vld [vmem:[#allocation8 + $0x108] sm:$0xff]
        %v3211 = vld [vmem:[#allocation8 + $0x110] sm:$0xff]
        %v3212 = vld [vmem:[#allocation8 + $0x118] sm:$0xff]
        %v3213 = vld [vmem:[#allocation8 + $0x120] sm:$0xff]
        %v3214 = vld [vmem:[#allocation8 + $0x128] sm:$0xff]
        %v3215 = vld [vmem:[#allocation8 + $0x130] sm:$0xff]
        %v3216 = vld [vmem:[#allocation8 + $0x138] sm:$0xff]
        %v3217 = vld [vmem:[#allocation8 + $0x140] sm:$0xff]
        %v3218 = vld [vmem:[#allocation8 + $0x148] sm:$0xff]
        %v3219 = vld [vmem:[#allocation8 + $0x150] sm:$0xff]
        %v3220 = vld [vmem:[#allocation8 + $0x158] sm:$0xff]
        %v3221 = vld [vmem:[#allocation8 + $0x160] sm:$0xff]
        %v3222 = vld [vmem:[#allocation8 + $0x168] sm:$0xff]
        %v3223 = vld [vmem:[#allocation8 + $0x170] sm:$0xff]
        %v3224 = vld [vmem:[#allocation8 + $0x178] sm:$0xff]
        %v3225 = vld [vmem:[#allocation8 + $0x180] sm:$0xff]
        %v3226 = vld [vmem:[#allocation8 + $0x188] sm:$0xff]
        %v3227 = vld [vmem:[#allocation8 + $0x190] sm:$0xff]
        %v3228 = vld [vmem:[#allocation8 + $0x198] sm:$0xff]
        %v3229 = vld [vmem:[#allocation8 + $0x1a0] sm:$0xff]
        %v3230 = vld [vmem:[#allocation8 + $0x1a8] sm:$0xff]
        %v3231 = vld [vmem:[#allocation8 + $0x1b0] sm:$0xff]
        %v3232 = vld [vmem:[#allocation8 + $0x1b8] sm:$0xff]
        %v3233 = vld [vmem:[#allocation8 + $0x1c0] sm:$0xff]
        %v3234 = vld [vmem:[#allocation8 + $0x1c8] sm:$0xff]
        %v3235 = vld [vmem:[#allocation8 + $0x1d0] sm:$0xff]
        %v3236 = vld [vmem:[#allocation8 + $0x1d8] sm:$0xff]
        %v3237 = vld [vmem:[#allocation8 + $0x1e0] sm:$0xff]
        %v3238 = vld [vmem:[#allocation8 + $0x1e8] sm:$0xff]
        %v3239 = vld [vmem:[#allocation8 + $0x1f0] sm:$0xff]
        %v3240 = vld [vmem:[#allocation8 + $0x1f8] sm:$0xff]
        %v3241 = vld [vmem:[#allocation8 + $0x200] sm:$0xff]
        %v3242 = vld [vmem:[#allocation8 + $0x208] sm:$0xff]
        %v3243 = vld [vmem:[#allocation8 + $0x210] sm:$0xff]
        %v3244 = vld [vmem:[#allocation8 + $0x218] sm:$0xff]
        %v3245 = vld [vmem:[#allocation8 + $0x220] sm:$0xff]
        %v3246 = vld [vmem:[#allocation8 + $0x228] sm:$0xff]
        %v3247 = vld [vmem:[#allocation8 + $0x230] sm:$0xff]
        %v3248 = vld [vmem:[#allocation8 + $0x238] sm:$0xff]
        %v3249 = vld [vmem:[#allocation8 + $0x240] sm:$0xff]
        %v3250 = vld [vmem:[#allocation8 + $0x248] sm:$0xff]
        %v3251 = vld [vmem:[#allocation8 + $0x250] sm:$0xff]
        %v3252 = vld [vmem:[#allocation8 + $0x258] sm:$0xff]
        %v3253 = vld [vmem:[#allocation8 + $0x260] sm:$0xff]
        %v3254 = vld [vmem:[#allocation8 + $0x268] sm:$0xff]
        %v3255 = vld [vmem:[#allocation8 + $0x270] sm:$0xff]
        %v3256 = vld [vmem:[#allocation8 + $0x278] sm:$0xff]
        %v3257 = vld [vmem:[#allocation8 + $0x280] sm:$0xff]
        %v3258 = vld [vmem:[#allocation8 + $0x288] sm:$0xff]
        %v3259 = vld [vmem:[#allocation8 + $0x290] sm:$0xff]
        %v3260 = vld [vmem:[#allocation8 + $0x298] sm:$0xff]
        %v3261 = vld [vmem:[#allocation8 + $0x2a0] sm:$0xff]
        %v3262 = vld [vmem:[#allocation8 + $0x2a8] sm:$0xff]
        %v3263 = vld [vmem:[#allocation8 + $0x2b0] sm:$0xff]
        %v3264 = vld [vmem:[#allocation8 + $0x2b8] sm:$0xff]
        %v3265 = vld [vmem:[#allocation8 + $0x2c0] sm:$0xff]
        %v3266 = vld [vmem:[#allocation8 + $0x2c8] sm:$0xff]
        %v3267 = vld [vmem:[#allocation8 + $0x2d0] sm:$0xff]
        %v3268 = vld [vmem:[#allocation8 + $0x2d8] sm:$0xff]
        %v3269 = vld [vmem:[#allocation8 + $0x2e0] sm:$0xff]
        %v3270 = vld [vmem:[#allocation8 + $0x2e8] sm:$0xff]
        %v3271 = vld [vmem:[#allocation8 + $0x2f0] sm:$0xff]
        %v3272 = vld [vmem:[#allocation8 + $0x2f8] sm:$0xff]
        %v3273 = vld [vmem:[#allocation8 + $0x300] sm:$0xff]
        %v3274 = vld [vmem:[#allocation8 + $0x308] sm:$0xff]
        %v3275 = vld [vmem:[#allocation8 + $0x310] sm:$0xff]
        %v3276 = vld [vmem:[#allocation8 + $0x318] sm:$0xff]
        %v3277 = vld [vmem:[#allocation8 + $0x320] sm:$0xff]
        %v3278 = vld [vmem:[#allocation8 + $0x328] sm:$0xff]
        %v3279 = vld [vmem:[#allocation8 + $0x330] sm:$0xff]
        %v3280 = vld [vmem:[#allocation8 + $0x338] sm:$0xff]
        %v3281 = vld [vmem:[#allocation8 + $0x340] sm:$0xff]
        %v3282 = vld [vmem:[#allocation8 + $0x348] sm:$0xff]
        %v3283 = vld [vmem:[#allocation8 + $0x350] sm:$0xff]
        %v3284 = vld [vmem:[#allocation8 + $0x358] sm:$0xff]
        %v3285 = vld [vmem:[#allocation8 + $0x360] sm:$0xff]
        %v3286 = vld [vmem:[#allocation8 + $0x368] sm:$0xff]
        %v3287 = vld [vmem:[#allocation8 + $0x370] sm:$0xff]
        %v3288 = vld [vmem:[#allocation8 + $0x378] sm:$0xff]
        %v3289 = vld [vmem:[#allocation8 + $0x380] sm:$0xff]
        %v3290 = vld [vmem:[#allocation8 + $0x388] sm:$0xff]
        %v3291 = vld [vmem:[#allocation8 + $0x390] sm:$0xff]
        %v3292 = vld [vmem:[#allocation8 + $0x398] sm:$0xff]
        %v3293 = vld [vmem:[#allocation8 + $0x3a0] sm:$0xff]
        %v3294 = vld [vmem:[#allocation8 + $0x3a8] sm:$0xff]
        %v3295 = vld [vmem:[#allocation8 + $0x3b0] sm:$0xff]
        %v3296 = vld [vmem:[#allocation8 + $0x3b8] sm:$0xff]
        %v3297 = vld [vmem:[#allocation8 + $0x3c0] sm:$0xff]
        %v3298 = vld [vmem:[#allocation8 + $0x3c8] sm:$0xff]
        %v3299 = vld [vmem:[#allocation8 + $0x3d0] sm:$0xff]
        %v3300 = vld [vmem:[#allocation8 + $0x3d8] sm:$0xff]
        %v3301 = vld [vmem:[#allocation8 + $0x3e0] sm:$0xff]
        %v3302 = vld [vmem:[#allocation8 + $0x3e8] sm:$0xff]
        %v3303 = vld [vmem:[#allocation8 + $0x3f0] sm:$0xff]
        %v3304 = vld [vmem:[#allocation8 + $0x3f8] sm:$0xff]
        %v3305 = vld [vmem:[%s4] sm:$0xf]
        %v3307 = vlaneseq
        %v3308 = vshrl.u32 %v3307, 7
        %v3309 = vsub.s32 0, %v3308
        %v3310 = vrot.slane %v3305, %v3309
        %v3311 = vlaneseq
        %v3312 = vshrl.u32 %v3311, 7
        %v3313 = vsub.s32 1, %v3312
        %v3314 = vrot.slane %v3305, %v3313
        %v3315 = vlaneseq
        %v3316 = vshrl.u32 %v3315, 7
        %v3317 = vsub.s32 2, %v3316
        %v3318 = vrot.slane %v3305, %v3317
        %v3319 = vlaneseq
        %v3320 = vshrl.u32 %v3319, 7
        %v3321 = vsub.s32 3, %v3320
        %v3322 = vrot.slane %v3305, %v3321
        %v3455 = vunpack.c.l.b16 %v3177
        %v3456 = vunpack.c.h.b16 %v3177
        %v3457 = vunpack.c.l.b16 %v3178
        %v3458 = vunpack.c.h.b16 %v3178
        %v3459 = vunpack.c.l.b16 %v3179
        %v3460 = vunpack.c.h.b16 %v3179
        %v3461 = vunpack.c.l.b16 %v3180
        %v3462 = vunpack.c.h.b16 %v3180
        %v3463 = vunpack.c.l.b16 %v3181
        %v3464 = vunpack.c.h.b16 %v3181
        %v3465 = vunpack.c.l.b16 %v3182
        %v3466 = vunpack.c.h.b16 %v3182
        %v3467 = vunpack.c.l.b16 %v3183
        %v3468 = vunpack.c.h.b16 %v3183
        %v3469 = vunpack.c.l.b16 %v3184
        %v3470 = vunpack.c.h.b16 %v3184
        %v3471 = vunpack.c.l.b16 %v3185
        %v3472 = vunpack.c.h.b16 %v3185
        %v3473 = vunpack.c.l.b16 %v3186
        %v3474 = vunpack.c.h.b16 %v3186
        %v3475 = vunpack.c.l.b16 %v3187
        %v3476 = vunpack.c.h.b16 %v3187
        %v3477 = vunpack.c.l.b16 %v3188
        %v3478 = vunpack.c.h.b16 %v3188
        %v3479 = vunpack.c.l.b16 %v3189
        %v3480 = vunpack.c.h.b16 %v3189
        %v3481 = vunpack.c.l.b16 %v3190
        %v3482 = vunpack.c.h.b16 %v3190
        %v3483 = vunpack.c.l.b16 %v3191
        %v3484 = vunpack.c.h.b16 %v3191
        %v3485 = vunpack.c.l.b16 %v3192
        %v3486 = vunpack.c.h.b16 %v3192
        %v3487 = vunpack.c.l.b16 %v3193
        %v3488 = vunpack.c.h.b16 %v3193
        %v3489 = vunpack.c.l.b16 %v3194
        %v3490 = vunpack.c.h.b16 %v3194
        %v3491 = vunpack.c.l.b16 %v3195
        %v3492 = vunpack.c.h.b16 %v3195
        %v3493 = vunpack.c.l.b16 %v3196
        %v3494 = vunpack.c.h.b16 %v3196
        %v3495 = vunpack.c.l.b16 %v3197
        %v3496 = vunpack.c.h.b16 %v3197
        %v3497 = vunpack.c.l.b16 %v3198
        %v3498 = vunpack.c.h.b16 %v3198
        %v3499 = vunpack.c.l.b16 %v3199
        %v3500 = vunpack.c.h.b16 %v3199
        %v3501 = vunpack.c.l.b16 %v3200
        %v3502 = vunpack.c.h.b16 %v3200
        %v3503 = vunpack.c.l.b16 %v3201
        %v3504 = vunpack.c.h.b16 %v3201
        %v3505 = vunpack.c.l.b16 %v3202
        %v3506 = vunpack.c.h.b16 %v3202
        %v3507 = vunpack.c.l.b16 %v3203
        %v3508 = vunpack.c.h.b16 %v3203
        %v3509 = vunpack.c.l.b16 %v3204
        %v3510 = vunpack.c.h.b16 %v3204
        %v3511 = vunpack.c.l.b16 %v3205
        %v3512 = vunpack.c.h.b16 %v3205
        %v3513 = vunpack.c.l.b16 %v3206
        %v3514 = vunpack.c.h.b16 %v3206
        %v3515 = vunpack.c.l.b16 %v3207
        %v3516 = vunpack.c.h.b16 %v3207
        %v3517 = vunpack.c.l.b16 %v3208
        %v3518 = vunpack.c.h.b16 %v3208
        %v3519 = vunpack.c.l.b16 %v3209
        %v3520 = vunpack.c.h.b16 %v3209
        %v3521 = vunpack.c.l.b16 %v3210
        %v3522 = vunpack.c.h.b16 %v3210
        %v3523 = vunpack.c.l.b16 %v3211
        %v3524 = vunpack.c.h.b16 %v3211
        %v3525 = vunpack.c.l.b16 %v3212
        %v3526 = vunpack.c.h.b16 %v3212
        %v3527 = vunpack.c.l.b16 %v3213
        %v3528 = vunpack.c.h.b16 %v3213
        %v3529 = vunpack.c.l.b16 %v3214
        %v3530 = vunpack.c.h.b16 %v3214
        %v3531 = vunpack.c.l.b16 %v3215
        %v3532 = vunpack.c.h.b16 %v3215
        %v3533 = vunpack.c.l.b16 %v3216
        %v3534 = vunpack.c.h.b16 %v3216
        %v3535 = vunpack.c.l.b16 %v3217
        %v3536 = vunpack.c.h.b16 %v3217
        %v3537 = vunpack.c.l.b16 %v3218
        %v3538 = vunpack.c.h.b16 %v3218
        %v3539 = vunpack.c.l.b16 %v3219
        %v3540 = vunpack.c.h.b16 %v3219
        %v3541 = vunpack.c.l.b16 %v3220
        %v3542 = vunpack.c.h.b16 %v3220
        %v3543 = vunpack.c.l.b16 %v3221
        %v3544 = vunpack.c.h.b16 %v3221
        %v3545 = vunpack.c.l.b16 %v3222
        %v3546 = vunpack.c.h.b16 %v3222
        %v3547 = vunpack.c.l.b16 %v3223
        %v3548 = vunpack.c.h.b16 %v3223
        %v3549 = vunpack.c.l.b16 %v3224
        %v3550 = vunpack.c.h.b16 %v3224
        %v3551 = vunpack.c.l.b16 %v3225
        %v3552 = vunpack.c.h.b16 %v3225
        %v3553 = vunpack.c.l.b16 %v3226
        %v3554 = vunpack.c.h.b16 %v3226
        %v3555 = vunpack.c.l.b16 %v3227
        %v3556 = vunpack.c.h.b16 %v3227
        %v3557 = vunpack.c.l.b16 %v3228
        %v3558 = vunpack.c.h.b16 %v3228
        %v3559 = vunpack.c.l.b16 %v3229
        %v3560 = vunpack.c.h.b16 %v3229
        %v3561 = vunpack.c.l.b16 %v3230
        %v3562 = vunpack.c.h.b16 %v3230
        %v3563 = vunpack.c.l.b16 %v3231
        %v3564 = vunpack.c.h.b16 %v3231
        %v3565 = vunpack.c.l.b16 %v3232
        %v3566 = vunpack.c.h.b16 %v3232
        %v3567 = vunpack.c.l.b16 %v3233
        %v3568 = vunpack.c.h.b16 %v3233
        %v3569 = vunpack.c.l.b16 %v3234
        %v3570 = vunpack.c.h.b16 %v3234
        %v3571 = vunpack.c.l.b16 %v3235
        %v3572 = vunpack.c.h.b16 %v3235
        %v3573 = vunpack.c.l.b16 %v3236
        %v3574 = vunpack.c.h.b16 %v3236
        %v3575 = vunpack.c.l.b16 %v3237
        %v3576 = vunpack.c.h.b16 %v3237
        %v3577 = vunpack.c.l.b16 %v3238
        %v3578 = vunpack.c.h.b16 %v3238
        %v3579 = vunpack.c.l.b16 %v3239
        %v3580 = vunpack.c.h.b16 %v3239
        %v3581 = vunpack.c.l.b16 %v3240
        %v3582 = vunpack.c.h.b16 %v3240
        %v3583 = vunpack.c.l.b16 %v3241
        %v3584 = vunpack.c.h.b16 %v3241
        %v3585 = vunpack.c.l.b16 %v3242
        %v3586 = vunpack.c.h.b16 %v3242
        %v3587 = vunpack.c.l.b16 %v3243
        %v3588 = vunpack.c.h.b16 %v3243
        %v3589 = vunpack.c.l.b16 %v3244
        %v3590 = vunpack.c.h.b16 %v3244
        %v3591 = vunpack.c.l.b16 %v3245
        %v3592 = vunpack.c.h.b16 %v3245
        %v3593 = vunpack.c.l.b16 %v3246
        %v3594 = vunpack.c.h.b16 %v3246
        %v3595 = vunpack.c.l.b16 %v3247
        %v3596 = vunpack.c.h.b16 %v3247
        %v3597 = vunpack.c.l.b16 %v3248
        %v3598 = vunpack.c.h.b16 %v3248
        %v3599 = vunpack.c.l.b16 %v3249
        %v3600 = vunpack.c.h.b16 %v3249
        %v3601 = vunpack.c.l.b16 %v3250
        %v3602 = vunpack.c.h.b16 %v3250
        %v3603 = vunpack.c.l.b16 %v3251
        %v3604 = vunpack.c.h.b16 %v3251
        %v3605 = vunpack.c.l.b16 %v3252
        %v3606 = vunpack.c.h.b16 %v3252
        %v3607 = vunpack.c.l.b16 %v3253
        %v3608 = vunpack.c.h.b16 %v3253
        %v3609 = vunpack.c.l.b16 %v3254
        %v3610 = vunpack.c.h.b16 %v3254
        %v3611 = vunpack.c.l.b16 %v3255
        %v3612 = vunpack.c.h.b16 %v3255
        %v3613 = vunpack.c.l.b16 %v3256
        %v3614 = vunpack.c.h.b16 %v3256
        %v3615 = vunpack.c.l.b16 %v3257
        %v3616 = vunpack.c.h.b16 %v3257
        %v3617 = vunpack.c.l.b16 %v3258
        %v3618 = vunpack.c.h.b16 %v3258
        %v3619 = vunpack.c.l.b16 %v3259
        %v3620 = vunpack.c.h.b16 %v3259
        %v3621 = vunpack.c.l.b16 %v3260
        %v3622 = vunpack.c.h.b16 %v3260
        %v3623 = vunpack.c.l.b16 %v3261
        %v3624 = vunpack.c.h.b16 %v3261
        %v3625 = vunpack.c.l.b16 %v3262
        %v3626 = vunpack.c.h.b16 %v3262
        %v3627 = vunpack.c.l.b16 %v3263
        %v3628 = vunpack.c.h.b16 %v3263
        %v3629 = vunpack.c.l.b16 %v3264
        %v3630 = vunpack.c.h.b16 %v3264
        %v3631 = vunpack.c.l.b16 %v3265
        %v3632 = vunpack.c.h.b16 %v3265
        %v3633 = vunpack.c.l.b16 %v3266
        %v3634 = vunpack.c.h.b16 %v3266
        %v3635 = vunpack.c.l.b16 %v3267
        %v3636 = vunpack.c.h.b16 %v3267
        %v3637 = vunpack.c.l.b16 %v3268
        %v3638 = vunpack.c.h.b16 %v3268
        %v3639 = vunpack.c.l.b16 %v3269
        %v3640 = vunpack.c.h.b16 %v3269
        %v3641 = vunpack.c.l.b16 %v3270
        %v3642 = vunpack.c.h.b16 %v3270
        %v3643 = vunpack.c.l.b16 %v3271
        %v3644 = vunpack.c.h.b16 %v3271
        %v3645 = vunpack.c.l.b16 %v3272
        %v3646 = vunpack.c.h.b16 %v3272
        %v3647 = vunpack.c.l.b16 %v3273
        %v3648 = vunpack.c.h.b16 %v3273
        %v3649 = vunpack.c.l.b16 %v3274
        %v3650 = vunpack.c.h.b16 %v3274
        %v3651 = vunpack.c.l.b16 %v3275
        %v3652 = vunpack.c.h.b16 %v3275
        %v3653 = vunpack.c.l.b16 %v3276
        %v3654 = vunpack.c.h.b16 %v3276
        %v3655 = vunpack.c.l.b16 %v3277
        %v3656 = vunpack.c.h.b16 %v3277
        %v3657 = vunpack.c.l.b16 %v3278
        %v3658 = vunpack.c.h.b16 %v3278
        %v3659 = vunpack.c.l.b16 %v3279
        %v3660 = vunpack.c.h.b16 %v3279
        %v3661 = vunpack.c.l.b16 %v3280
        %v3662 = vunpack.c.h.b16 %v3280
        %v3663 = vunpack.c.l.b16 %v3281
        %v3664 = vunpack.c.h.b16 %v3281
        %v3665 = vunpack.c.l.b16 %v3282
        %v3666 = vunpack.c.h.b16 %v3282
        %v3667 = vunpack.c.l.b16 %v3283
        %v3668 = vunpack.c.h.b16 %v3283
        %v3669 = vunpack.c.l.b16 %v3284
        %v3670 = vunpack.c.h.b16 %v3284
        %v3671 = vunpack.c.l.b16 %v3285
        %v3672 = vunpack.c.h.b16 %v3285
        %v3673 = vunpack.c.l.b16 %v3286
        %v3674 = vunpack.c.h.b16 %v3286
        %v3675 = vunpack.c.l.b16 %v3287
        %v3676 = vunpack.c.h.b16 %v3287
        %v3677 = vunpack.c.l.b16 %v3288
        %v3678 = vunpack.c.h.b16 %v3288
        %v3679 = vunpack.c.l.b16 %v3289
        %v3680 = vunpack.c.h.b16 %v3289
        %v3681 = vunpack.c.l.b16 %v3290
        %v3682 = vunpack.c.h.b16 %v3290
        %v3683 = vunpack.c.l.b16 %v3291
        %v3684 = vunpack.c.h.b16 %v3291
        %v3685 = vunpack.c.l.b16 %v3292
        %v3686 = vunpack.c.h.b16 %v3292
        %v3687 = vunpack.c.l.b16 %v3293
        %v3688 = vunpack.c.h.b16 %v3293
        %v3689 = vunpack.c.l.b16 %v3294
        %v3690 = vunpack.c.h.b16 %v3294
        %v3691 = vunpack.c.l.b16 %v3295
        %v3692 = vunpack.c.h.b16 %v3295
        %v3693 = vunpack.c.l.b16 %v3296
        %v3694 = vunpack.c.h.b16 %v3296
        %v3695 = vunpack.c.l.b16 %v3297
        %v3696 = vunpack.c.h.b16 %v3297
        %v3697 = vunpack.c.l.b16 %v3298
        %v3698 = vunpack.c.h.b16 %v3298
        %v3699 = vunpack.c.l.b16 %v3299
        %v3700 = vunpack.c.h.b16 %v3299
        %v3701 = vunpack.c.l.b16 %v3300
        %v3702 = vunpack.c.h.b16 %v3300
        %v3703 = vunpack.c.l.b16 %v3301
        %v3704 = vunpack.c.h.b16 %v3301
        %v3705 = vunpack.c.l.b16 %v3302
        %v3706 = vunpack.c.h.b16 %v3302
        %v3707 = vunpack.c.l.b16 %v3303
        %v3708 = vunpack.c.h.b16 %v3303
        %v3709 = vunpack.c.l.b16 %v3304
        %v3710 = vunpack.c.h.b16 %v3304
        %v3711 = vpack.c.b16 %v3459, %v3455
        %v3712 = vpack.c.b16 %v3460, %v3456
        %v3713 = vpack.c.b16 %v3461, %v3457
        %v3714 = vpack.c.b16 %v3462, %v3458
        %v3715 = vpack.c.b16 %v3467, %v3463
        %v3716 = vpack.c.b16 %v3468, %v3464
        %v3717 = vpack.c.b16 %v3469, %v3465
        %v3718 = vpack.c.b16 %v3470, %v3466
        %v3719 = vpack.c.b16 %v3475, %v3471
        %v3720 = vpack.c.b16 %v3476, %v3472
        %v3721 = vpack.c.b16 %v3477, %v3473
        %v3722 = vpack.c.b16 %v3478, %v3474
        %v3723 = vpack.c.b16 %v3483, %v3479
        %v3724 = vpack.c.b16 %v3484, %v3480
        %v3725 = vpack.c.b16 %v3485, %v3481
        %v3726 = vpack.c.b16 %v3486, %v3482
        %v3727 = vpack.c.b16 %v3491, %v3487
        %v3728 = vpack.c.b16 %v3492, %v3488
        %v3729 = vpack.c.b16 %v3493, %v3489
        %v3730 = vpack.c.b16 %v3494, %v3490
        %v3731 = vpack.c.b16 %v3499, %v3495
        %v3732 = vpack.c.b16 %v3500, %v3496
        %v3733 = vpack.c.b16 %v3501, %v3497
        %v3734 = vpack.c.b16 %v3502, %v3498
        %v3735 = vpack.c.b16 %v3507, %v3503
        %v3736 = vpack.c.b16 %v3508, %v3504
        %v3737 = vpack.c.b16 %v3509, %v3505
        %v3738 = vpack.c.b16 %v3510, %v3506
        %v3739 = vpack.c.b16 %v3515, %v3511
        %v3740 = vpack.c.b16 %v3516, %v3512
        %v3741 = vpack.c.b16 %v3517, %v3513
        %v3742 = vpack.c.b16 %v3518, %v3514
        %v3743 = vpack.c.b16 %v3523, %v3519
        %v3744 = vpack.c.b16 %v3524, %v3520
        %v3745 = vpack.c.b16 %v3525, %v3521
        %v3746 = vpack.c.b16 %v3526, %v3522
        %v3747 = vpack.c.b16 %v3531, %v3527
        %v3748 = vpack.c.b16 %v3532, %v3528
        %v3749 = vpack.c.b16 %v3533, %v3529
        %v3750 = vpack.c.b16 %v3534, %v3530
        %v3751 = vpack.c.b16 %v3539, %v3535
        %v3752 = vpack.c.b16 %v3540, %v3536
        %v3753 = vpack.c.b16 %v3541, %v3537
        %v3754 = vpack.c.b16 %v3542, %v3538
        %v3755 = vpack.c.b16 %v3547, %v3543
        %v3756 = vpack.c.b16 %v3548, %v3544
        %v3757 = vpack.c.b16 %v3549, %v3545
        %v3758 = vpack.c.b16 %v3550, %v3546
        %v3759 = vpack.c.b16 %v3555, %v3551
        %v3760 = vpack.c.b16 %v3556, %v3552
        %v3761 = vpack.c.b16 %v3557, %v3553
        %v3762 = vpack.c.b16 %v3558, %v3554
        %v3763 = vpack.c.b16 %v3563, %v3559
        %v3764 = vpack.c.b16 %v3564, %v3560
        %v3765 = vpack.c.b16 %v3565, %v3561
        %v3766 = vpack.c.b16 %v3566, %v3562
        %v3767 = vpack.c.b16 %v3571, %v3567
        %v3768 = vpack.c.b16 %v3572, %v3568
        %v3769 = vpack.c.b16 %v3573, %v3569
        %v3770 = vpack.c.b16 %v3574, %v3570
        %v3771 = vpack.c.b16 %v3579, %v3575
        %v3772 = vpack.c.b16 %v3580, %v3576
        %v3773 = vpack.c.b16 %v3581, %v3577
        %v3774 = vpack.c.b16 %v3582, %v3578
        %v3775 = vpack.c.b16 %v3587, %v3583
        %v3776 = vpack.c.b16 %v3588, %v3584
        %v3777 = vpack.c.b16 %v3589, %v3585
        %v3778 = vpack.c.b16 %v3590, %v3586
        %v3779 = vpack.c.b16 %v3595, %v3591
        %v3780 = vpack.c.b16 %v3596, %v3592
        %v3781 = vpack.c.b16 %v3597, %v3593
        %v3782 = vpack.c.b16 %v3598, %v3594
        %v3783 = vpack.c.b16 %v3603, %v3599
        %v3784 = vpack.c.b16 %v3604, %v3600
        %v3785 = vpack.c.b16 %v3605, %v3601
        %v3786 = vpack.c.b16 %v3606, %v3602
        %v3787 = vpack.c.b16 %v3611, %v3607
        %v3788 = vpack.c.b16 %v3612, %v3608
        %v3789 = vpack.c.b16 %v3613, %v3609
        %v3790 = vpack.c.b16 %v3614, %v3610
        %v3791 = vpack.c.b16 %v3619, %v3615
        %v3792 = vpack.c.b16 %v3620, %v3616
        %v3793 = vpack.c.b16 %v3621, %v3617
        %v3794 = vpack.c.b16 %v3622, %v3618
        %v3795 = vpack.c.b16 %v3627, %v3623
        %v3796 = vpack.c.b16 %v3628, %v3624
        %v3797 = vpack.c.b16 %v3629, %v3625
        %v3798 = vpack.c.b16 %v3630, %v3626
        %v3799 = vpack.c.b16 %v3635, %v3631
        %v3800 = vpack.c.b16 %v3636, %v3632
        %v3801 = vpack.c.b16 %v3637, %v3633
        %v3802 = vpack.c.b16 %v3638, %v3634
        %v3803 = vpack.c.b16 %v3643, %v3639
        %v3804 = vpack.c.b16 %v3644, %v3640
        %v3805 = vpack.c.b16 %v3645, %v3641
        %v3806 = vpack.c.b16 %v3646, %v3642
        %v3807 = vpack.c.b16 %v3651, %v3647
        %v3808 = vpack.c.b16 %v3652, %v3648
        %v3809 = vpack.c.b16 %v3653, %v3649
        %v3810 = vpack.c.b16 %v3654, %v3650
        %v3811 = vpack.c.b16 %v3659, %v3655
        %v3812 = vpack.c.b16 %v3660, %v3656
        %v3813 = vpack.c.b16 %v3661, %v3657
        %v3814 = vpack.c.b16 %v3662, %v3658
        %v3815 = vpack.c.b16 %v3667, %v3663
        %v3816 = vpack.c.b16 %v3668, %v3664
        %v3817 = vpack.c.b16 %v3669, %v3665
        %v3818 = vpack.c.b16 %v3670, %v3666
        %v3819 = vpack.c.b16 %v3675, %v3671
        %v3820 = vpack.c.b16 %v3676, %v3672
        %v3821 = vpack.c.b16 %v3677, %v3673
        %v3822 = vpack.c.b16 %v3678, %v3674
        %v3823 = vpack.c.b16 %v3683, %v3679
        %v3824 = vpack.c.b16 %v3684, %v3680
        %v3825 = vpack.c.b16 %v3685, %v3681
        %v3826 = vpack.c.b16 %v3686, %v3682
        %v3827 = vpack.c.b16 %v3691, %v3687
        %v3828 = vpack.c.b16 %v3692, %v3688
        %v3829 = vpack.c.b16 %v3693, %v3689
        %v3830 = vpack.c.b16 %v3694, %v3690
        %v3831 = vpack.c.b16 %v3699, %v3695
        %v3832 = vpack.c.b16 %v3700, %v3696
        %v3833 = vpack.c.b16 %v3701, %v3697
        %v3834 = vpack.c.b16 %v3702, %v3698
        %v3835 = vpack.c.b16 %v3707, %v3703
        %v3836 = vpack.c.b16 %v3708, %v3704
        %v3837 = vpack.c.b16 %v3709, %v3705
        %v3838 = vpack.c.b16 %v3710, %v3706
        %3967 = vmatprep.subr.bf16.mxu0 %v3712
        %3968 = vmatpush1.bf16.msra.mxu0 %v3711
        %3969 = vmatprep.subr.bf16.mxu0 %v3716
        %3970 = vmatpush1.bf16.msra.mxu0 %v3715
        %3971 = vmatprep.subr.bf16.mxu0 %v3720
        %3972 = vmatpush1.bf16.msra.mxu0 %v3719
        %3973 = vmatprep.subr.bf16.mxu0 %v3724
        %3974 = vmatpush1.bf16.msra.mxu0 %v3723
        %3975 = vmatprep.subr.bf16.mxu0 %v3728
        %3976 = vmatpush1.bf16.msra.mxu0 %v3727
        %3977 = vmatprep.subr.bf16.mxu0 %v3732
        %3978 = vmatpush1.bf16.msra.mxu0 %v3731
        %3979 = vmatprep.subr.bf16.mxu0 %v3736
        %3980 = vmatpush1.bf16.msra.mxu0 %v3735
        %3981 = vmatprep.subr.bf16.mxu0 %v3740
        %3982 = vmatpush1.bf16.msra.mxu0 %v3739
        %3983 = vmatprep.subr.bf16.mxu0 %v3744
        %3984 = vmatpush1.bf16.msra.mxu0 %v3743
        %3985 = vmatprep.subr.bf16.mxu0 %v3748
        %3986 = vmatpush1.bf16.msra.mxu0 %v3747
        %3987 = vmatprep.subr.bf16.mxu0 %v3752
        %3988 = vmatpush1.bf16.msra.mxu0 %v3751
        %3989 = vmatprep.subr.bf16.mxu0 %v3756
        %3990 = vmatpush1.bf16.msra.mxu0 %v3755
        %3991 = vmatprep.subr.bf16.mxu0 %v3760
        %3992 = vmatpush1.bf16.msra.mxu0 %v3759
        %3993 = vmatprep.subr.bf16.mxu0 %v3764
        %3994 = vmatpush1.bf16.msra.mxu0 %v3763
        %3995 = vmatprep.subr.bf16.mxu0 %v3768
        %3996 = vmatpush1.bf16.msra.mxu0 %v3767
        %3997 = vmatprep.subr.bf16.mxu0 %v3772
        %3998 = vmatpush1.bf16.msra.mxu0 %v3771
        %3999 = vmatprep.mubr.bf16.mxu0 %v3146
        %4000 = vmatmul.mubr.bf16.gmra.mrb[0].mxu0 %v3145
        %v4001 = vpop.f32.mrb[0].mxu0
        %v4002 = vadd.f32 %v3310, %v4001
        %v4003 = vpop.f32.mrb[0].mxu0
        %v4004 = vadd.f32 %v3314, %v4003
        %v4005 = vpop.f32.mrb[0].mxu0
        %v4006 = vadd.f32 %v3310, %v4005
        %v4007 = vpop.f32.mrb[0].mxu0
        %v4008 = vadd.f32 %v3314, %v4007
        %4009 = vmatprep.mubr.bf16.mxu0 %v3150
        %4010 = vmatmul.mubr.bf16.gmra.mrb[0].mxu0 %v3149
        %v4011 = vpop.f32.mrb[0].mxu0
        %v4012 = vadd.f32 %v3310, %v4011
        %v4013 = vpop.f32.mrb[0].mxu0
        %v4014 = vadd.f32 %v3314, %v4013
        %v4015 = vpop.f32.mrb[0].mxu0
        %v4016 = vadd.f32 %v3310, %v4015
        %v4017 = vpop.f32.mrb[0].mxu0
        %v4018 = vadd.f32 %v3314, %v4017
        %4019 = vmatprep.mubr.bf16.mxu0 %v3154
        %4020 = vmatmul.mubr.bf16.gmra.mrb[0].mxu0 %v3153
        %v4021 = vpop.f32.mrb[0].mxu0
        %v4022 = vadd.f32 %v3310, %v4021
        %v4023 = vpop.f32.mrb[0].mxu0
        %v4024 = vadd.f32 %v3314, %v4023
        %v4025 = vpop.f32.mrb[0].mxu0
        %v4026 = vadd.f32 %v3310, %v4025
        %v4027 = vpop.f32.mrb[0].mxu0
        %v4028 = vadd.f32 %v3314, %v4027
        %4029 = vmatprep.mubr.bf16.mxu0 %v3158
        %4030 = vmatmul.mubr.bf16.gmra.mrb[0].mxu0 %v3157
        %v4031 = vpop.f32.mrb[0].mxu0
        %v4032 = vadd.f32 %v3310, %v4031
        %v4033 = vpop.f32.mrb[0].mxu0
        %v4034 = vadd.f32 %v3314, %v4033
        %v4035 = vpop.f32.mrb[0].mxu0
        %v4036 = vadd.f32 %v3310, %v4035
        %v4037 = vpop.f32.mrb[0].mxu0
        %v4038 = vadd.f32 %v3314, %v4037
        %4039 = vmatprep.mubr.bf16.mxu0 %v3162
        %4040 = vmatmul.mubr.bf16.gmra.mrb[0].mxu0 %v3161
        %v4041 = vpop.f32.mrb[0].mxu0
        %v4042 = vadd.f32 %v3310, %v4041
        %v4043 = vpop.f32.mrb[0].mxu0
        %v4044 = vadd.f32 %v3314, %v4043
        %v4045 = vpop.f32.mrb[0].mxu0
        %v4046 = vadd.f32 %v3310, %v4045
        %v4047 = vpop.f32.mrb[0].mxu0
        %v4048 = vadd.f32 %v3314, %v4047
        %4049 = vmatprep.mubr.bf16.mxu0 %v3166
        %4050 = vmatmul.mubr.bf16.gmra.mrb[0].mxu0 %v3165
        %v4051 = vpop.f32.mrb[0].mxu0
        %v4052 = vadd.f32 %v3310, %v4051
        %v4053 = vpop.f32.mrb[0].mxu0
        %v4054 = vadd.f32 %v3314, %v4053
        %v4055 = vpop.f32.mrb[0].mxu0
        %v4056 = vadd.f32 %v3310, %v4055
        %v4057 = vpop.f32.mrb[0].mxu0
        %v4058 = vadd.f32 %v3314, %v4057
        %4059 = vmatprep.mubr.bf16.mxu0 %v3170
        %4060 = vmatmul.mubr.bf16.gmra.mrb[0].mxu0 %v3169
        %v4061 = vpop.f32.mrb[0].mxu0
        %v4062 = vadd.f32 %v3310, %v4061
        %v4063 = vpop.f32.mrb[0].mxu0
        %v4064 = vadd.f32 %v3314, %v4063
        %v4065 = vpop.f32.mrb[0].mxu0
        %v4066 = vadd.f32 %v3310, %v4065
        %v4067 = vpop.f32.mrb[0].mxu0
        %v4068 = vadd.f32 %v3314, %v4067
        %4069 = vmatprep.mubr.bf16.mxu0 %v3174
        %4070 = vmatmul.mubr.bf16.gmra.mrb[0].mxu0 %v3173
        %v4071 = vpop.f32.mrb[0].mxu0
        %v4072 = vadd.f32 %v3310, %v4071
        %v4073 = vpop.f32.mrb[0].mxu0
        %v4074 = vadd.f32 %v3314, %v4073
        %v4075 = vpop.f32.mrb[0].mxu0
        %v4076 = vadd.f32 %v3310, %v4075
        %v4077 = vpop.f32.mrb[0].mxu0
        %v4078 = vadd.f32 %v3314, %v4077
        %4079 = vdwg.mxu0
        %4080 = vmatprep.subr.bf16.mxu0 %v3776
        %4081 = vmatpush1.bf16.msra.mxu0 %v3775
        %4082 = vmatprep.subr.bf16.mxu0 %v3780
        %4083 = vmatpush1.bf16.msra.mxu0 %v3779
        %4084 = vmatprep.subr.bf16.mxu0 %v3784
        %4085 = vmatpush1.bf16.msra.mxu0 %v3783
        %4086 = vmatprep.subr.bf16.mxu0 %v3788
        %4087 = vmatpush1.bf16.msra.mxu0 %v3787
        %4088 = vmatprep.subr.bf16.mxu0 %v3792
        %4089 = vmatpush1.bf16.msra.mxu0 %v3791
        %4090 = vmatprep.subr.bf16.mxu0 %v3796
        %4091 = vmatpush1.bf16.msra.mxu0 %v3795
        %4092 = vmatprep.subr.bf16.mxu0 %v3800
        %4093 = vmatpush1.bf16.msra.mxu0 %v3799
        %4094 = vmatprep.subr.bf16.mxu0 %v3804
        %4095 = vmatpush1.bf16.msra.mxu0 %v3803
        %4096 = vmatprep.subr.bf16.mxu0 %v3808
        %4097 = vmatpush1.bf16.msra.mxu0 %v3807
        %4098 = vmatprep.subr.bf16.mxu0 %v3812
        %4099 = vmatpush1.bf16.msra.mxu0 %v3811
        %4100 = vmatprep.subr.bf16.mxu0 %v3816
        %4101 = vmatpush1.bf16.msra.mxu0 %v3815
        %4102 = vmatprep.subr.bf16.mxu0 %v3820
        %4103 = vmatpush1.bf16.msra.mxu0 %v3819
        %4104 = vmatprep.subr.bf16.mxu0 %v3824
        %4105 = vmatpush1.bf16.msra.mxu0 %v3823
        %4106 = vmatprep.subr.bf16.mxu0 %v3828
        %4107 = vmatpush1.bf16.msra.mxu0 %v3827
        %4108 = vmatprep.subr.bf16.mxu0 %v3832
        %4109 = vmatpush1.bf16.msra.mxu0 %v3831
        %4110 = vmatprep.subr.bf16.mxu0 %v3836
        %4111 = vmatpush1.bf16.msra.mxu0 %v3835
        %4112 = vmatprep.mubr.bf16.mxu0 %v3148
        %4113 = vmatmul.mubr.bf16.gmra.mrb[0].mxu0 %v3147
        %v4114 = vpop.f32.mrb[0].mxu0
        %v4115 = vadd.f32 %v4002, %v4114
        %v4116 = vpop.f32.mrb[0].mxu0
        %v4117 = vadd.f32 %v4004, %v4116
        %v4118 = vpop.f32.mrb[0].mxu0
        %v4119 = vadd.f32 %v4006, %v4118
        %v4120 = vpop.f32.mrb[0].mxu0
        %v4121 = vadd.f32 %v4008, %v4120
        %4122 = vmatprep.mubr.bf16.mxu0 %v3152
        %4123 = vmatmul.mubr.bf16.gmra.mrb[0].mxu0 %v3151
        %v4124 = vpop.f32.mrb[0].mxu0
        %v4125 = vadd.f32 %v4012, %v4124
        %v4126 = vpop.f32.mrb[0].mxu0
        %v4127 = vadd.f32 %v4014, %v4126
        %v4128 = vpop.f32.mrb[0].mxu0
        %v4129 = vadd.f32 %v4016, %v4128
        %v4130 = vpop.f32.mrb[0].mxu0
        %v4131 = vadd.f32 %v4018, %v4130
        %4132 = vmatprep.mubr.bf16.mxu0 %v3156
        %4133 = vmatmul.mubr.bf16.gmra.mrb[0].mxu0 %v3155
        %v4134 = vpop.f32.mrb[0].mxu0
        %v4135 = vadd.f32 %v4022, %v4134
        %v4136 = vpop.f32.mrb[0].mxu0
        %v4137 = vadd.f32 %v4024, %v4136
        %v4138 = vpop.f32.mrb[0].mxu0
        %v4139 = vadd.f32 %v4026, %v4138
        %v4140 = vpop.f32.mrb[0].mxu0
        %v4141 = vadd.f32 %v4028, %v4140
        %4142 = vmatprep.mubr.bf16.mxu0 %v3160
        %4143 = vmatmul.mubr.bf16.gmra.mrb[0].mxu0 %v3159
        %v4144 = vpop.f32.mrb[0].mxu0
        %v4145 = vadd.f32 %v4032, %v4144
        %v4146 = vpop.f32.mrb[0].mxu0
        %v4147 = vadd.f32 %v4034, %v4146
        %v4148 = vpop.f32.mrb[0].mxu0
        %v4149 = vadd.f32 %v4036, %v4148
        %v4150 = vpop.f32.mrb[0].mxu0
        %v4151 = vadd.f32 %v4038, %v4150
        %4152 = vmatprep.mubr.bf16.mxu0 %v3164
        %4153 = vmatmul.mubr.bf16.gmra.mrb[0].mxu0 %v3163
        %v4154 = vpop.f32.mrb[0].mxu0
        %v4155 = vadd.f32 %v4042, %v4154
        %v4156 = vpop.f32.mrb[0].mxu0
        %v4157 = vadd.f32 %v4044, %v4156
        %v4158 = vpop.f32.mrb[0].mxu0
        %v4159 = vadd.f32 %v4046, %v4158
        %v4160 = vpop.f32.mrb[0].mxu0
        %v4161 = vadd.f32 %v4048, %v4160
        %4162 = vmatprep.mubr.bf16.mxu0 %v3168
        %4163 = vmatmul.mubr.bf16.gmra.mrb[0].mxu0 %v3167
        %v4164 = vpop.f32.mrb[0].mxu0
        %v4165 = vadd.f32 %v4052, %v4164
        %v4166 = vpop.f32.mrb[0].mxu0
        %v4167 = vadd.f32 %v4054, %v4166
        %v4168 = vpop.f32.mrb[0].mxu0
        %v4169 = vadd.f32 %v4056, %v4168
        %v4170 = vpop.f32.mrb[0].mxu0
        %v4171 = vadd.f32 %v4058, %v4170
        %4172 = vmatprep.mubr.bf16.mxu0 %v3172
        %4173 = vmatmul.mubr.bf16.gmra.mrb[0].mxu0 %v3171
        %v4174 = vpop.f32.mrb[0].mxu0
        %v4175 = vadd.f32 %v4062, %v4174
        %v4176 = vpop.f32.mrb[0].mxu0
        %v4177 = vadd.f32 %v4064, %v4176
        %v4178 = vpop.f32.mrb[0].mxu0
        %v4179 = vadd.f32 %v4066, %v4178
        %v4180 = vpop.f32.mrb[0].mxu0
        %v4181 = vadd.f32 %v4068, %v4180
        %4182 = vmatprep.mubr.bf16.mxu0 %v3176
        %4183 = vmatmul.mubr.bf16.gmra.mrb[0].mxu0 %v3175
        %v4184 = vpop.f32.mrb[0].mxu0
        %v4185 = vadd.f32 %v4072, %v4184
        %v4186 = vpop.f32.mrb[0].mxu0
        %v4187 = vadd.f32 %v4074, %v4186
        %v4188 = vpop.f32.mrb[0].mxu0
        %v4189 = vadd.f32 %v4076, %v4188
        %v4190 = vpop.f32.mrb[0].mxu0
        %v4191 = vadd.f32 %v4078, %v4190
        %4192 = vdwg.mxu0
        %4193 = vmatprep.subr.bf16.mxu0 %v3714
        %4194 = vmatpush1.bf16.msra.mxu0 %v3713
        %4195 = vmatprep.subr.bf16.mxu0 %v3718
        %4196 = vmatpush1.bf16.msra.mxu0 %v3717
        %4197 = vmatprep.subr.bf16.mxu0 %v3722
        %4198 = vmatpush1.bf16.msra.mxu0 %v3721
        %4199 = vmatprep.subr.bf16.mxu0 %v3726
        %4200 = vmatpush1.bf16.msra.mxu0 %v3725
        %4201 = vmatprep.subr.bf16.mxu0 %v3730
        %4202 = vmatpush1.bf16.msra.mxu0 %v3729
        %4203 = vmatprep.subr.bf16.mxu0 %v3734
        %4204 = vmatpush1.bf16.msra.mxu0 %v3733
        %4205 = vmatprep.subr.bf16.mxu0 %v3738
        %4206 = vmatpush1.bf16.msra.mxu0 %v3737
        %4207 = vmatprep.subr.bf16.mxu0 %v3742
        %4208 = vmatpush1.bf16.msra.mxu0 %v3741
        %4209 = vmatprep.subr.bf16.mxu0 %v3746
        %4210 = vmatpush1.bf16.msra.mxu0 %v3745
        %4211 = vmatprep.subr.bf16.mxu0 %v3750
        %4212 = vmatpush1.bf16.msra.mxu0 %v3749
        %4213 = vmatprep.subr.bf16.mxu0 %v3754
        %4214 = vmatpush1.bf16.msra.mxu0 %v3753
        %4215 = vmatprep.subr.bf16.mxu0 %v3758
        %4216 = vmatpush1.bf16.msra.mxu0 %v3757
        %4217 = vmatprep.subr.bf16.mxu0 %v3762
        %4218 = vmatpush1.bf16.msra.mxu0 %v3761
        %4219 = vmatprep.subr.bf16.mxu0 %v3766
        %4220 = vmatpush1.bf16.msra.mxu0 %v3765
        %4221 = vmatprep.subr.bf16.mxu0 %v3770
        %4222 = vmatpush1.bf16.msra.mxu0 %v3769
        %4223 = vmatprep.subr.bf16.mxu0 %v3774
        %4224 = vmatpush1.bf16.msra.mxu0 %v3773
        %4225 = vmatprep.mubr.bf16.mxu0 %v3146
        %4226 = vmatmul.mubr.bf16.gmra.mrb[0].mxu0 %v3145
        %v4227 = vpop.f32.mrb[0].mxu0
        %v4228 = vadd.f32 %v3318, %v4227
        %v4229 = vpop.f32.mrb[0].mxu0
        %v4230 = vadd.f32 %v3322, %v4229
        %v4231 = vpop.f32.mrb[0].mxu0
        %v4232 = vadd.f32 %v3318, %v4231
        %v4233 = vpop.f32.mrb[0].mxu0
        %v4234 = vadd.f32 %v3322, %v4233
        %4235 = vmatprep.mubr.bf16.mxu0 %v3150
        %4236 = vmatmul.mubr.bf16.gmra.mrb[0].mxu0 %v3149
        %v4237 = vpop.f32.mrb[0].mxu0
        %v4238 = vadd.f32 %v3318, %v4237
        %v4239 = vpop.f32.mrb[0].mxu0
        %v4240 = vadd.f32 %v3322, %v4239
        %v4241 = vpop.f32.mrb[0].mxu0
        %v4242 = vadd.f32 %v3318, %v4241
        %v4243 = vpop.f32.mrb[0].mxu0
        %v4244 = vadd.f32 %v3322, %v4243
        %4245 = vmatprep.mubr.bf16.mxu0 %v3154
        %4246 = vmatmul.mubr.bf16.gmra.mrb[0].mxu0 %v3153
        %v4247 = vpop.f32.mrb[0].mxu0
        %v4248 = vadd.f32 %v3318, %v4247
        %v4249 = vpop.f32.mrb[0].mxu0
        %v4250 = vadd.f32 %v3322, %v4249
        %v4251 = vpop.f32.mrb[0].mxu0
        %v4252 = vadd.f32 %v3318, %v4251
        %v4253 = vpop.f32.mrb[0].mxu0
        %v4254 = vadd.f32 %v3322, %v4253
        %4255 = vmatprep.mubr.bf16.mxu0 %v3158
        %4256 = vmatmul.mubr.bf16.gmra.mrb[0].mxu0 %v3157
        %v4257 = vpop.f32.mrb[0].mxu0
        %v4258 = vadd.f32 %v3318, %v4257
        %v4259 = vpop.f32.mrb[0].mxu0
        %v4260 = vadd.f32 %v3322, %v4259
        %v4261 = vpop.f32.mrb[0].mxu0
        %v4262 = vadd.f32 %v3318, %v4261
        %v4263 = vpop.f32.mrb[0].mxu0
        %v4264 = vadd.f32 %v3322, %v4263
        %4265 = vmatprep.mubr.bf16.mxu0 %v3162
        %4266 = vmatmul.mubr.bf16.gmra.mrb[0].mxu0 %v3161
        %v4267 = vpop.f32.mrb[0].mxu0
        %v4268 = vadd.f32 %v3318, %v4267
        %v4269 = vpop.f32.mrb[0].mxu0
        %v4270 = vadd.f32 %v3322, %v4269
        %v4271 = vpop.f32.mrb[0].mxu0
        %v4272 = vadd.f32 %v3318, %v4271
        %v4273 = vpop.f32.mrb[0].mxu0
        %v4274 = vadd.f32 %v3322, %v4273
        %4275 = vmatprep.mubr.bf16.mxu0 %v3166
        %4276 = vmatmul.mubr.bf16.gmra.mrb[0].mxu0 %v3165
        %v4277 = vpop.f32.mrb[0].mxu0
        %v4278 = vadd.f32 %v3318, %v4277
        %v4279 = vpop.f32.mrb[0].mxu0
        %v4280 = vadd.f32 %v3322, %v4279
        %v4281 = vpop.f32.mrb[0].mxu0
        %v4282 = vadd.f32 %v3318, %v4281
        %v4283 = vpop.f32.mrb[0].mxu0
        %v4284 = vadd.f32 %v3322, %v4283
        %4285 = vmatprep.mubr.bf16.mxu0 %v3170
        %4286 = vmatmul.mubr.bf16.gmra.mrb[0].mxu0 %v3169
        %v4287 = vpop.f32.mrb[0].mxu0
        %v4288 = vadd.f32 %v3318, %v4287
        %v4289 = vpop.f32.mrb[0].mxu0
        %v4290 = vadd.f32 %v3322, %v4289
        %v4291 = vpop.f32.mrb[0].mxu0
        %v4292 = vadd.f32 %v3318, %v4291
        %v4293 = vpop.f32.mrb[0].mxu0
        %v4294 = vadd.f32 %v3322, %v4293
        %4295 = vmatprep.mubr.bf16.mxu0 %v3174
        %4296 = vmatmul.mubr.bf16.gmra.mrb[0].mxu0 %v3173
        %v4297 = vpop.f32.mrb[0].mxu0
        %v4298 = vadd.f32 %v3318, %v4297
        %v4299 = vpop.f32.mrb[0].mxu0
        %v4300 = vadd.f32 %v3322, %v4299
        %v4301 = vpop.f32.mrb[0].mxu0
        %v4302 = vadd.f32 %v3318, %v4301
        %v4303 = vpop.f32.mrb[0].mxu0
        %v4304 = vadd.f32 %v3322, %v4303
        %4305 = vdwg.mxu0
        %4306 = vmatprep.subr.bf16.mxu0 %v3778
        %4307 = vmatpush1.bf16.msra.mxu0 %v3777
        %4308 = vmatprep.subr.bf16.mxu0 %v3782
        %4309 = vmatpush1.bf16.msra.mxu0 %v3781
        %4310 = vmatprep.subr.bf16.mxu0 %v3786
        %4311 = vmatpush1.bf16.msra.mxu0 %v3785
        %4312 = vmatprep.subr.bf16.mxu0 %v3790
        %4313 = vmatpush1.bf16.msra.mxu0 %v3789
        %4314 = vmatprep.subr.bf16.mxu0 %v3794
        %4315 = vmatpush1.bf16.msra.mxu0 %v3793
        %4316 = vmatprep.subr.bf16.mxu0 %v3798
        %4317 = vmatpush1.bf16.msra.mxu0 %v3797
        %4318 = vmatprep.subr.bf16.mxu0 %v3802
        %4319 = vmatpush1.bf16.msra.mxu0 %v3801
        %4320 = vmatprep.subr.bf16.mxu0 %v3806
        %4321 = vmatpush1.bf16.msra.mxu0 %v3805
        %4322 = vmatprep.subr.bf16.mxu0 %v3810
        %4323 = vmatpush1.bf16.msra.mxu0 %v3809
        %4324 = vmatprep.subr.bf16.mxu0 %v3814
        %4325 = vmatpush1.bf16.msra.mxu0 %v3813
        %4326 = vmatprep.subr.bf16.mxu0 %v3818
        %4327 = vmatpush1.bf16.msra.mxu0 %v3817
        %4328 = vmatprep.subr.bf16.mxu0 %v3822
        %4329 = vmatpush1.bf16.msra.mxu0 %v3821
        %4330 = vmatprep.subr.bf16.mxu0 %v3826
        %4331 = vmatpush1.bf16.msra.mxu0 %v3825
        %4332 = vmatprep.subr.bf16.mxu0 %v3830
        %4333 = vmatpush1.bf16.msra.mxu0 %v3829
        %4334 = vmatprep.subr.bf16.mxu0 %v3834
        %4335 = vmatpush1.bf16.msra.mxu0 %v3833
        %4336 = vmatprep.subr.bf16.mxu0 %v3838
        %4337 = vmatpush1.bf16.msra.mxu0 %v3837
        %4338 = vmatprep.mubr.bf16.mxu0 %v3148
        %4339 = vmatmul.mubr.bf16.gmra.mrb[0].mxu0 %v3147
        %v4340 = vpop.f32.mrb[0].mxu0
        %v4341 = vadd.f32 %v4228, %v4340
        %v4342 = vpop.f32.mrb[0].mxu0
        %v4343 = vadd.f32 %v4230, %v4342
        %v4344 = vpop.f32.mrb[0].mxu0
        %v4345 = vadd.f32 %v4232, %v4344
        %v4346 = vpop.f32.mrb[0].mxu0
        %v4347 = vadd.f32 %v4234, %v4346
        %4348 = vmatprep.mubr.bf16.mxu0 %v3152
        %4349 = vmatmul.mubr.bf16.gmra.mrb[0].mxu0 %v3151
        %v4350 = vpop.f32.mrb[0].mxu0
        %v4351 = vadd.f32 %v4238, %v4350
        %v4352 = vpop.f32.mrb[0].mxu0
        %v4353 = vadd.f32 %v4240, %v4352
        %v4354 = vpop.f32.mrb[0].mxu0
        %v4355 = vadd.f32 %v4242, %v4354
        %v4356 = vpop.f32.mrb[0].mxu0
        %v4357 = vadd.f32 %v4244, %v4356
        %4358 = vmatprep.mubr.bf16.mxu0 %v3156
        %4359 = vmatmul.mubr.bf16.gmra.mrb[0].mxu0 %v3155
        %v4360 = vpop.f32.mrb[0].mxu0
        %v4361 = vadd.f32 %v4248, %v4360
        %v4362 = vpop.f32.mrb[0].mxu0
        %v4363 = vadd.f32 %v4250, %v4362
        %v4364 = vpop.f32.mrb[0].mxu0
        %v4365 = vadd.f32 %v4252, %v4364
        %v4366 = vpop.f32.mrb[0].mxu0
        %v4367 = vadd.f32 %v4254, %v4366
        %4368 = vmatprep.mubr.bf16.mxu0 %v3160
        %4369 = vmatmul.mubr.bf16.gmra.mrb[0].mxu0 %v3159
        %v4370 = vpop.f32.mrb[0].mxu0
        %v4371 = vadd.f32 %v4258, %v4370
        %v4372 = vpop.f32.mrb[0].mxu0
        %v4373 = vadd.f32 %v4260, %v4372
        %v4374 = vpop.f32.mrb[0].mxu0
        %v4375 = vadd.f32 %v4262, %v4374
        %v4376 = vpop.f32.mrb[0].mxu0
        %v4377 = vadd.f32 %v4264, %v4376
        %4378 = vmatprep.mubr.bf16.mxu0 %v3164
        %4379 = vmatmul.mubr.bf16.gmra.mrb[0].mxu0 %v3163
        %v4380 = vpop.f32.mrb[0].mxu0
        %v4381 = vadd.f32 %v4268, %v4380
        %v4382 = vpop.f32.mrb[0].mxu0
        %v4383 = vadd.f32 %v4270, %v4382
        %v4384 = vpop.f32.mrb[0].mxu0
        %v4385 = vadd.f32 %v4272, %v4384
        %v4386 = vpop.f32.mrb[0].mxu0
        %v4387 = vadd.f32 %v4274, %v4386
        %4388 = vmatprep.mubr.bf16.mxu0 %v3168
        %4389 = vmatmul.mubr.bf16.gmra.mrb[0].mxu0 %v3167
        %v4390 = vpop.f32.mrb[0].mxu0
        %v4391 = vadd.f32 %v4278, %v4390
        %v4392 = vpop.f32.mrb[0].mxu0
        %v4393 = vadd.f32 %v4280, %v4392
        %v4394 = vpop.f32.mrb[0].mxu0
        %v4395 = vadd.f32 %v4282, %v4394
        %v4396 = vpop.f32.mrb[0].mxu0
        %v4397 = vadd.f32 %v4284, %v4396
        %4398 = vmatprep.mubr.bf16.mxu0 %v3172
        %4399 = vmatmul.mubr.bf16.gmra.mrb[0].mxu0 %v3171
        %v4400 = vpop.f32.mrb[0].mxu0
        %v4401 = vadd.f32 %v4288, %v4400
        %v4402 = vpop.f32.mrb[0].mxu0
        %v4403 = vadd.f32 %v4290, %v4402
        %v4404 = vpop.f32.mrb[0].mxu0
        %v4405 = vadd.f32 %v4292, %v4404
        %v4406 = vpop.f32.mrb[0].mxu0
        %v4407 = vadd.f32 %v4294, %v4406
        %4408 = vmatprep.mubr.bf16.mxu0 %v3176
        %4409 = vmatmul.mubr.bf16.gmra.mrb[0].mxu0 %v3175
        %v4410 = vpop.f32.mrb[0].mxu0
        %v4411 = vadd.f32 %v4298, %v4410
        %v4412 = vpop.f32.mrb[0].mxu0
        %v4413 = vadd.f32 %v4300, %v4412
        %v4414 = vpop.f32.mrb[0].mxu0
        %v4415 = vadd.f32 %v4302, %v4414
        %v4416 = vpop.f32.mrb[0].mxu0
        %v4417 = vadd.f32 %v4304, %v4416
        %4418 = vdwg.mxu0
        %vm4419 = vcmp.gt.f32.partialorder %v4115, 0.0
        %vm4420 = vcmp.gt.f32.partialorder %v4117, 0.0
        %vm4421 = vcmp.gt.f32.partialorder %v4341, 0.0
        %vm4422 = vcmp.gt.f32.partialorder %v4343, 0.0
        %vm4423 = vcmp.gt.f32.partialorder %v4119, 0.0
        %vm4424 = vcmp.gt.f32.partialorder %v4121, 0.0
        %vm4425 = vcmp.gt.f32.partialorder %v4345, 0.0
        %vm4426 = vcmp.gt.f32.partialorder %v4347, 0.0
        %vm4427 = vcmp.gt.f32.partialorder %v4125, 0.0
        %vm4428 = vcmp.gt.f32.partialorder %v4127, 0.0
        %vm4429 = vcmp.gt.f32.partialorder %v4351, 0.0
        %vm4430 = vcmp.gt.f32.partialorder %v4353, 0.0
        %vm4431 = vcmp.gt.f32.partialorder %v4129, 0.0
        %vm4432 = vcmp.gt.f32.partialorder %v4131, 0.0
        %vm4433 = vcmp.gt.f32.partialorder %v4355, 0.0
        %vm4434 = vcmp.gt.f32.partialorder %v4357, 0.0
        %vm4435 = vcmp.gt.f32.partialorder %v4135, 0.0
        %vm4436 = vcmp.gt.f32.partialorder %v4137, 0.0
        %vm4437 = vcmp.gt.f32.partialorder %v4361, 0.0
        %vm4438 = vcmp.gt.f32.partialorder %v4363, 0.0
        %vm4439 = vcmp.gt.f32.partialorder %v4139, 0.0
        %vm4440 = vcmp.gt.f32.partialorder %v4141, 0.0
        %vm4441 = vcmp.gt.f32.partialorder %v4365, 0.0
        %vm4442 = vcmp.gt.f32.partialorder %v4367, 0.0
        %vm4443 = vcmp.gt.f32.partialorder %v4145, 0.0
        %vm4444 = vcmp.gt.f32.partialorder %v4147, 0.0
        %vm4445 = vcmp.gt.f32.partialorder %v4371, 0.0
        %vm4446 = vcmp.gt.f32.partialorder %v4373, 0.0
        %vm4447 = vcmp.gt.f32.partialorder %v4149, 0.0
        %vm4448 = vcmp.gt.f32.partialorder %v4151, 0.0
        %vm4449 = vcmp.gt.f32.partialorder %v4375, 0.0
        %vm4450 = vcmp.gt.f32.partialorder %v4377, 0.0
        %vm4451 = vcmp.gt.f32.partialorder %v4155, 0.0
        %vm4452 = vcmp.gt.f32.partialorder %v4157, 0.0
        %vm4453 = vcmp.gt.f32.partialorder %v4381, 0.0
        %vm4454 = vcmp.gt.f32.partialorder %v4383, 0.0
        %vm4455 = vcmp.gt.f32.partialorder %v4159, 0.0
        %vm4456 = vcmp.gt.f32.partialorder %v4161, 0.0
        %vm4457 = vcmp.gt.f32.partialorder %v4385, 0.0
        %vm4458 = vcmp.gt.f32.partialorder %v4387, 0.0
        %vm4459 = vcmp.gt.f32.partialorder %v4165, 0.0
        %vm4460 = vcmp.gt.f32.partialorder %v4167, 0.0
        %vm4461 = vcmp.gt.f32.partialorder %v4391, 0.0
        %vm4462 = vcmp.gt.f32.partialorder %v4393, 0.0
        %vm4463 = vcmp.gt.f32.partialorder %v4169, 0.0
        %vm4464 = vcmp.gt.f32.partialorder %v4171, 0.0
        %vm4465 = vcmp.gt.f32.partialorder %v4395, 0.0
        %vm4466 = vcmp.gt.f32.partialorder %v4397, 0.0
        %vm4467 = vcmp.gt.f32.partialorder %v4175, 0.0
        %vm4468 = vcmp.gt.f32.partialorder %v4177, 0.0
        %vm4469 = vcmp.gt.f32.partialorder %v4401, 0.0
        %vm4470 = vcmp.gt.f32.partialorder %v4403, 0.0
        %vm4471 = vcmp.gt.f32.partialorder %v4179, 0.0
        %vm4472 = vcmp.gt.f32.partialorder %v4181, 0.0
        %vm4473 = vcmp.gt.f32.partialorder %v4405, 0.0
        %vm4474 = vcmp.gt.f32.partialorder %v4407, 0.0
        %vm4475 = vcmp.gt.f32.partialorder %v4185, 0.0
        %vm4476 = vcmp.gt.f32.partialorder %v4187, 0.0
        %vm4477 = vcmp.gt.f32.partialorder %v4411, 0.0
        %vm4478 = vcmp.gt.f32.partialorder %v4413, 0.0
        %vm4479 = vcmp.gt.f32.partialorder %v4189, 0.0
        %vm4480 = vcmp.gt.f32.partialorder %v4191, 0.0
        %vm4481 = vcmp.gt.f32.partialorder %v4415, 0.0
        %vm4482 = vcmp.gt.f32.partialorder %v4417, 0.0
        %v4483 = vmul.f32 %v4115, 0.2
        %v4484 = vmul.f32 %v4117, 0.2
        %v4485 = vmul.f32 %v4341, 0.2
        %v4486 = vmul.f32 %v4343, 0.2
        %v4487 = vmul.f32 %v4119, 0.2
        %v4488 = vmul.f32 %v4121, 0.2
        %v4489 = vmul.f32 %v4345, 0.2
        %v4490 = vmul.f32 %v4347, 0.2
        %v4491 = vmul.f32 %v4125, 0.2
        %v4492 = vmul.f32 %v4127, 0.2
        %v4493 = vmul.f32 %v4351, 0.2
        %v4494 = vmul.f32 %v4353, 0.2
        %v4495 = vmul.f32 %v4129, 0.2
        %v4496 = vmul.f32 %v4131, 0.2
        %v4497 = vmul.f32 %v4355, 0.2
        %v4498 = vmul.f32 %v4357, 0.2
        %v4499 = vmul.f32 %v4135, 0.2
        %v4500 = vmul.f32 %v4137, 0.2
        %v4501 = vmul.f32 %v4361, 0.2
        %v4502 = vmul.f32 %v4363, 0.2
        %v4503 = vmul.f32 %v4139, 0.2
        %v4504 = vmul.f32 %v4141, 0.2
        %v4505 = vmul.f32 %v4365, 0.2
        %v4506 = vmul.f32 %v4367, 0.2
        %v4507 = vmul.f32 %v4145, 0.2
        %v4508 = vmul.f32 %v4147, 0.2
        %v4509 = vmul.f32 %v4371, 0.2
        %v4510 = vmul.f32 %v4373, 0.2
        %v4511 = vmul.f32 %v4149, 0.2
        %v4512 = vmul.f32 %v4151, 0.2
        %v4513 = vmul.f32 %v4375, 0.2
        %v4514 = vmul.f32 %v4377, 0.2
        %v4515 = vmul.f32 %v4155, 0.2
        %v4516 = vmul.f32 %v4157, 0.2
        %v4517 = vmul.f32 %v4381, 0.2
        %v4518 = vmul.f32 %v4383, 0.2
        %v4519 = vmul.f32 %v4159, 0.2
        %v4520 = vmul.f32 %v4161, 0.2
        %v4521 = vmul.f32 %v4385, 0.2
        %v4522 = vmul.f32 %v4387, 0.2
        %v4523 = vmul.f32 %v4165, 0.2
        %v4524 = vmul.f32 %v4167, 0.2
        %v4525 = vmul.f32 %v4391, 0.2
        %v4526 = vmul.f32 %v4393, 0.2
        %v4527 = vmul.f32 %v4169, 0.2
        %v4528 = vmul.f32 %v4171, 0.2
        %v4529 = vmul.f32 %v4395, 0.2
        %v4530 = vmul.f32 %v4397, 0.2
        %v4531 = vmul.f32 %v4175, 0.2
        %v4532 = vmul.f32 %v4177, 0.2
        %v4533 = vmul.f32 %v4401, 0.2
        %v4534 = vmul.f32 %v4403, 0.2
        %v4535 = vmul.f32 %v4179, 0.2
        %v4536 = vmul.f32 %v4181, 0.2
        %v4537 = vmul.f32 %v4405, 0.2
        %v4538 = vmul.f32 %v4407, 0.2
        %v4539 = vmul.f32 %v4185, 0.2
        %v4540 = vmul.f32 %v4187, 0.2
        %v4541 = vmul.f32 %v4411, 0.2
        %v4542 = vmul.f32 %v4413, 0.2
        %v4543 = vmul.f32 %v4189, 0.2
        %v4544 = vmul.f32 %v4191, 0.2
        %v4545 = vmul.f32 %v4415, 0.2
        %v4546 = vmul.f32 %v4417, 0.2
        %v4547 = vsel %vm4419, %v4115, %v4483
        %v4548 = vsel %vm4420, %v4117, %v4484
        %v4549 = vsel %vm4421, %v4341, %v4485
        %v4550 = vsel %vm4422, %v4343, %v4486
        %v4551 = vsel %vm4423, %v4119, %v4487
        %v4552 = vsel %vm4424, %v4121, %v4488
        %v4553 = vsel %vm4425, %v4345, %v4489
        %v4554 = vsel %vm4426, %v4347, %v4490
        %v4555 = vsel %vm4427, %v4125, %v4491
        %v4556 = vsel %vm4428, %v4127, %v4492
        %v4557 = vsel %vm4429, %v4351, %v4493
        %v4558 = vsel %vm4430, %v4353, %v4494
        %v4559 = vsel %vm4431, %v4129, %v4495
        %v4560 = vsel %vm4432, %v4131, %v4496
        %v4561 = vsel %vm4433, %v4355, %v4497
        %v4562 = vsel %vm4434, %v4357, %v4498
        %v4563 = vsel %vm4435, %v4135, %v4499
        %v4564 = vsel %vm4436, %v4137, %v4500
        %v4565 = vsel %vm4437, %v4361, %v4501
        %v4566 = vsel %vm4438, %v4363, %v4502
        %v4567 = vsel %vm4439, %v4139, %v4503
        %v4568 = vsel %vm4440, %v4141, %v4504
        %v4569 = vsel %vm4441, %v4365, %v4505
        %v4570 = vsel %vm4442, %v4367, %v4506
        %v4571 = vsel %vm4443, %v4145, %v4507
        %v4572 = vsel %vm4444, %v4147, %v4508
        %v4573 = vsel %vm4445, %v4371, %v4509
        %v4574 = vsel %vm4446, %v4373, %v4510
        %v4575 = vsel %vm4447, %v4149, %v4511
        %v4576 = vsel %vm4448, %v4151, %v4512
        %v4577 = vsel %vm4449, %v4375, %v4513
        %v4578 = vsel %vm4450, %v4377, %v4514
        %v4579 = vsel %vm4451, %v4155, %v4515
        %v4580 = vsel %vm4452, %v4157, %v4516
        %v4581 = vsel %vm4453, %v4381, %v4517
        %v4582 = vsel %vm4454, %v4383, %v4518
        %v4583 = vsel %vm4455, %v4159, %v4519
        %v4584 = vsel %vm4456, %v4161, %v4520
        %v4585 = vsel %vm4457, %v4385, %v4521
        %v4586 = vsel %vm4458, %v4387, %v4522
        %v4587 = vsel %vm4459, %v4165, %v4523
        %v4588 = vsel %vm4460, %v4167, %v4524
        %v4589 = vsel %vm4461, %v4391, %v4525
        %v4590 = vsel %vm4462, %v4393, %v4526
        %v4591 = vsel %vm4463, %v4169, %v4527
        %v4592 = vsel %vm4464, %v4171, %v4528
        %v4593 = vsel %vm4465, %v4395, %v4529
        %v4594 = vsel %vm4466, %v4397, %v4530
        %v4595 = vsel %vm4467, %v4175, %v4531
        %v4596 = vsel %vm4468, %v4177, %v4532
        %v4597 = vsel %vm4469, %v4401, %v4533
        %v4598 = vsel %vm4470, %v4403, %v4534
        %v4599 = vsel %vm4471, %v4179, %v4535
        %v4600 = vsel %vm4472, %v4181, %v4536
        %v4601 = vsel %vm4473, %v4405, %v4537
        %v4602 = vsel %vm4474, %v4407, %v4538
        %v4603 = vsel %vm4475, %v4185, %v4539
        %v4604 = vsel %vm4476, %v4187, %v4540
        %v4605 = vsel %vm4477, %v4411, %v4541
        %v4606 = vsel %vm4478, %v4413, %v4542
        %v4607 = vsel %vm4479, %v4189, %v4543
        %v4608 = vsel %vm4480, %v4191, %v4544
        %v4609 = vsel %vm4481, %v4415, %v4545
        %v4610 = vsel %vm4482, %v4417, %v4546
        %v4611 = vld [vmem:[%s5] sm:$0xf]
        %v4613 = vlaneseq
        %v4614 = vshrl.u32 %v4613, 7
        %v4615 = vsub.s32 0, %v4614
        %v4616 = vrot.slane %v4611, %v4615
        %v4617 = vlaneseq
        %v4618 = vshrl.u32 %v4617, 7
        %v4619 = vsub.s32 1, %v4618
        %v4620 = vrot.slane %v4611, %v4619
        %v4621 = vlaneseq
        %v4622 = vshrl.u32 %v4621, 7
        %v4623 = vsub.s32 2, %v4622
        %v4624 = vrot.slane %v4611, %v4623
        %v4625 = vlaneseq
        %v4626 = vshrl.u32 %v4625, 7
        %v4627 = vsub.s32 3, %v4626
        %v4628 = vrot.slane %v4611, %v4627
        %v4633 = vmul.f32 %v4547, %v4616
        %v4634 = vmul.f32 %v4548, %v4620
        %v4635 = vmul.f32 %v4549, %v4624
        %v4636 = vmul.f32 %v4550, %v4628
        %v4637 = vmul.f32 %v4551, %v4616
        %v4638 = vmul.f32 %v4552, %v4620
        %v4639 = vmul.f32 %v4553, %v4624
        %v4640 = vmul.f32 %v4554, %v4628
        %v4641 = vmul.f32 %v4555, %v4616
        %v4642 = vmul.f32 %v4556, %v4620
        %v4643 = vmul.f32 %v4557, %v4624
        %v4644 = vmul.f32 %v4558, %v4628
        %v4645 = vmul.f32 %v4559, %v4616
        %v4646 = vmul.f32 %v4560, %v4620
        %v4647 = vmul.f32 %v4561, %v4624
        %v4648 = vmul.f32 %v4562, %v4628
        %v4649 = vmul.f32 %v4563, %v4616
        %v4650 = vmul.f32 %v4564, %v4620
        %v4651 = vmul.f32 %v4565, %v4624
        %v4652 = vmul.f32 %v4566, %v4628
        %v4653 = vmul.f32 %v4567, %v4616
        %v4654 = vmul.f32 %v4568, %v4620
        %v4655 = vmul.f32 %v4569, %v4624
        %v4656 = vmul.f32 %v4570, %v4628
        %v4657 = vmul.f32 %v4571, %v4616
        %v4658 = vmul.f32 %v4572, %v4620
        %v4659 = vmul.f32 %v4573, %v4624
        %v4660 = vmul.f32 %v4574, %v4628
        %v4661 = vmul.f32 %v4575, %v4616
        %v4662 = vmul.f32 %v4576, %v4620
        %v4663 = vmul.f32 %v4577, %v4624
        %v4664 = vmul.f32 %v4578, %v4628
        %v4665 = vmul.f32 %v4579, %v4616
        %v4666 = vmul.f32 %v4580, %v4620
        %v4667 = vmul.f32 %v4581, %v4624
        %v4668 = vmul.f32 %v4582, %v4628
        %v4669 = vmul.f32 %v4583, %v4616
        %v4670 = vmul.f32 %v4584, %v4620
        %v4671 = vmul.f32 %v4585, %v4624
        %v4672 = vmul.f32 %v4586, %v4628
        %v4673 = vmul.f32 %v4587, %v4616
        %v4674 = vmul.f32 %v4588, %v4620
        %v4675 = vmul.f32 %v4589, %v4624
        %v4676 = vmul.f32 %v4590, %v4628
        %v4677 = vmul.f32 %v4591, %v4616
        %v4678 = vmul.f32 %v4592, %v4620
        %v4679 = vmul.f32 %v4593, %v4624
        %v4680 = vmul.f32 %v4594, %v4628
        %v4681 = vmul.f32 %v4595, %v4616
        %v4682 = vmul.f32 %v4596, %v4620
        %v4683 = vmul.f32 %v4597, %v4624
        %v4684 = vmul.f32 %v4598, %v4628
        %v4685 = vmul.f32 %v4599, %v4616
        %v4686 = vmul.f32 %v4600, %v4620
        %v4687 = vmul.f32 %v4601, %v4624
        %v4688 = vmul.f32 %v4602, %v4628
        %v4689 = vmul.f32 %v4603, %v4616
        %v4690 = vmul.f32 %v4604, %v4620
        %v4691 = vmul.f32 %v4605, %v4624
        %v4692 = vmul.f32 %v4606, %v4628
        %v4693 = vmul.f32 %v4607, %v4616
        %v4694 = vmul.f32 %v4608, %v4620
        %v4695 = vmul.f32 %v4609, %v4624
        %v4696 = vmul.f32 %v4610, %v4628
        %v4697 = vadd.f32 %v4633, %v4634
        %v4698 = vadd.f32 %v4697, %v4635
        %v4699 = vadd.f32 %v4698, %v4636
        %4700 = vadd.xlane.f32.xlu0 %v4699
        %v4701 = vpop.xlane.xlu0 %4700
        %v4702 = vadd.f32 %v4637, %v4638
        %v4703 = vadd.f32 %v4702, %v4639
        %v4704 = vadd.f32 %v4703, %v4640
        %4705 = vadd.xlane.f32.xlu0 %v4704
        %v4706 = vpop.xlane.xlu0 %4705
        %v4707 = vadd.f32 %v4641, %v4642
        %v4708 = vadd.f32 %v4707, %v4643
        %v4709 = vadd.f32 %v4708, %v4644
        %4710 = vadd.xlane.f32.xlu0 %v4709
        %v4711 = vpop.xlane.xlu0 %4710
        %v4712 = vadd.f32 %v4645, %v4646
        %v4713 = vadd.f32 %v4712, %v4647
        %v4714 = vadd.f32 %v4713, %v4648
        %4715 = vadd.xlane.f32.xlu0 %v4714
        %v4716 = vpop.xlane.xlu0 %4715
        %v4717 = vadd.f32 %v4649, %v4650
        %v4718 = vadd.f32 %v4717, %v4651
        %v4719 = vadd.f32 %v4718, %v4652
        %4720 = vadd.xlane.f32.xlu0 %v4719
        %v4721 = vpop.xlane.xlu0 %4720
        %v4722 = vadd.f32 %v4653, %v4654
        %v4723 = vadd.f32 %v4722, %v4655
        %v4724 = vadd.f32 %v4723, %v4656
        %4725 = vadd.xlane.f32.xlu0 %v4724
        %v4726 = vpop.xlane.xlu0 %4725
        %v4727 = vadd.f32 %v4657, %v4658
        %v4728 = vadd.f32 %v4727, %v4659
        %v4729 = vadd.f32 %v4728, %v4660
        %4730 = vadd.xlane.f32.xlu0 %v4729
        %v4731 = vpop.xlane.xlu0 %4730
        %v4732 = vadd.f32 %v4661, %v4662
        %v4733 = vadd.f32 %v4732, %v4663
        %v4734 = vadd.f32 %v4733, %v4664
        %4735 = vadd.xlane.f32.xlu0 %v4734
        %v4736 = vpop.xlane.xlu0 %4735
        %v4737 = vadd.f32 %v4665, %v4666
        %v4738 = vadd.f32 %v4737, %v4667
        %v4739 = vadd.f32 %v4738, %v4668
        %4740 = vadd.xlane.f32.xlu0 %v4739
        %v4741 = vpop.xlane.xlu0 %4740
        %v4742 = vadd.f32 %v4669, %v4670
        %v4743 = vadd.f32 %v4742, %v4671
        %v4744 = vadd.f32 %v4743, %v4672
        %4745 = vadd.xlane.f32.xlu0 %v4744
        %v4746 = vpop.xlane.xlu0 %4745
        %v4747 = vadd.f32 %v4673, %v4674
        %v4748 = vadd.f32 %v4747, %v4675
        %v4749 = vadd.f32 %v4748, %v4676
        %4750 = vadd.xlane.f32.xlu0 %v4749
        %v4751 = vpop.xlane.xlu0 %4750
        %v4752 = vadd.f32 %v4677, %v4678
        %v4753 = vadd.f32 %v4752, %v4679
        %v4754 = vadd.f32 %v4753, %v4680
        %4755 = vadd.xlane.f32.xlu0 %v4754
        %v4756 = vpop.xlane.xlu0 %4755
        %v4757 = vadd.f32 %v4681, %v4682
        %v4758 = vadd.f32 %v4757, %v4683
        %v4759 = vadd.f32 %v4758, %v4684
        %4760 = vadd.xlane.f32.xlu0 %v4759
        %v4761 = vpop.xlane.xlu0 %4760
        %v4762 = vadd.f32 %v4685, %v4686
        %v4763 = vadd.f32 %v4762, %v4687
        %v4764 = vadd.f32 %v4763, %v4688
        %4765 = vadd.xlane.f32.xlu0 %v4764
        %v4766 = vpop.xlane.xlu0 %4765
        %v4767 = vadd.f32 %v4689, %v4690
        %v4768 = vadd.f32 %v4767, %v4691
        %v4769 = vadd.f32 %v4768, %v4692
        %4770 = vadd.xlane.f32.xlu0 %v4769
        %v4771 = vpop.xlane.xlu0 %4770
        %v4772 = vadd.f32 %v4693, %v4694
        %v4773 = vadd.f32 %v4772, %v4695
        %v4774 = vadd.f32 %v4773, %v4696
        %4775 = vadd.xlane.f32.xlu0 %v4774
        %v4776 = vpop.xlane.xlu0 %4775
        %s4777 = sld [smem:[#allocation2]]
        %v4778 = vstv %s4777
        %v4779 = vadd.f32 %v4701, %v4778
        %v4780 = vadd.f32 %v4706, %v4778
        %v4781 = vadd.f32 %v4711, %v4778
        %v4782 = vadd.f32 %v4716, %v4778
        %v4783 = vadd.f32 %v4721, %v4778
        %v4784 = vadd.f32 %v4726, %v4778
        %v4785 = vadd.f32 %v4731, %v4778
        %v4786 = vadd.f32 %v4736, %v4778
        %v4787 = vadd.f32 %v4741, %v4778
        %v4788 = vadd.f32 %v4746, %v4778
        %v4789 = vadd.f32 %v4751, %v4778
        %v4790 = vadd.f32 %v4756, %v4778
        %v4791 = vadd.f32 %v4761, %v4778
        %v4792 = vadd.f32 %v4766, %v4778
        %v4793 = vadd.f32 %v4771, %v4778
        %v4794 = vadd.f32 %v4776, %v4778
        %vm4795 = vcmp.ge.f32.partialorder %v4779, 0.0
        %vm4796 = vcmp.ge.f32.partialorder %v4780, 0.0
        %vm4797 = vcmp.ge.f32.partialorder %v4781, 0.0
        %vm4798 = vcmp.ge.f32.partialorder %v4782, 0.0
        %vm4799 = vcmp.ge.f32.partialorder %v4783, 0.0
        %vm4800 = vcmp.ge.f32.partialorder %v4784, 0.0
        %vm4801 = vcmp.ge.f32.partialorder %v4785, 0.0
        %vm4802 = vcmp.ge.f32.partialorder %v4786, 0.0
        %vm4803 = vcmp.ge.f32.partialorder %v4787, 0.0
        %vm4804 = vcmp.ge.f32.partialorder %v4788, 0.0
        %vm4805 = vcmp.ge.f32.partialorder %v4789, 0.0
        %vm4806 = vcmp.ge.f32.partialorder %v4790, 0.0
        %vm4807 = vcmp.ge.f32.partialorder %v4791, 0.0
        %vm4808 = vcmp.ge.f32.partialorder %v4792, 0.0
        %vm4809 = vcmp.ge.f32.partialorder %v4793, 0.0
        %vm4810 = vcmp.ge.f32.partialorder %v4794, 0.0
        %v4811 = vsub.f32 0.0, %v4779
        %v4812 = vsub.f32 0.0, %v4780
        %v4813 = vsub.f32 0.0, %v4781
        %v4814 = vsub.f32 0.0, %v4782
        %v4815 = vsub.f32 0.0, %v4783
        %v4816 = vsub.f32 0.0, %v4784
        %v4817 = vsub.f32 0.0, %v4785
        %v4818 = vsub.f32 0.0, %v4786
        %v4819 = vsub.f32 0.0, %v4787
        %v4820 = vsub.f32 0.0, %v4788
        %v4821 = vsub.f32 0.0, %v4789
        %v4822 = vsub.f32 0.0, %v4790
        %v4823 = vsub.f32 0.0, %v4791
        %v4824 = vsub.f32 0.0, %v4792
        %v4825 = vsub.f32 0.0, %v4793
        %v4826 = vsub.f32 0.0, %v4794
        %v4827 = vsel %vm4795, %v4811, %v4779
        %v4828 = vsel %vm4796, %v4812, %v4780
        %v4829 = vsel %vm4797, %v4813, %v4781
        %v4830 = vsel %vm4798, %v4814, %v4782
        %v4831 = vsel %vm4799, %v4815, %v4783
        %v4832 = vsel %vm4800, %v4816, %v4784
        %v4833 = vsel %vm4801, %v4817, %v4785
        %v4834 = vsel %vm4802, %v4818, %v4786
        %v4835 = vsel %vm4803, %v4819, %v4787
        %v4836 = vsel %vm4804, %v4820, %v4788
        %v4837 = vsel %vm4805, %v4821, %v4789
        %v4838 = vsel %vm4806, %v4822, %v4790
        %v4839 = vsel %vm4807, %v4823, %v4791
        %v4840 = vsel %vm4808, %v4824, %v4792
        %v4841 = vsel %vm4809, %v4825, %v4793
        %v4842 = vsel %vm4810, %v4826, %v4794
        %v4843 = vmul.f32 %v4827, 1.442695
        %v4844 = vpow.pop %v4843
        %v4845 = vmul.f32 %v4828, 1.442695
        %v4846 = vpow.pop %v4845
        %v4847 = vmul.f32 %v4829, 1.442695
        %v4848 = vpow.pop %v4847
        %v4849 = vmul.f32 %v4830, 1.442695
        %v4850 = vpow.pop %v4849
        %v4851 = vmul.f32 %v4831, 1.442695
        %v4852 = vpow.pop %v4851
        %v4853 = vmul.f32 %v4832, 1.442695
        %v4854 = vpow.pop %v4853
        %v4855 = vmul.f32 %v4833, 1.442695
        %v4856 = vpow.pop %v4855
        %v4857 = vmul.f32 %v4834, 1.442695
        %v4858 = vpow.pop %v4857
        %v4859 = vmul.f32 %v4835, 1.442695
        %v4860 = vpow.pop %v4859
        %v4861 = vmul.f32 %v4836, 1.442695
        %v4862 = vpow.pop %v4861
        %v4863 = vmul.f32 %v4837, 1.442695
        %v4864 = vpow.pop %v4863
        %v4865 = vmul.f32 %v4838, 1.442695
        %v4866 = vpow.pop %v4865
        %v4867 = vmul.f32 %v4839, 1.442695
        %v4868 = vpow.pop %v4867
        %v4869 = vmul.f32 %v4840, 1.442695
        %v4870 = vpow.pop %v4869
        %v4871 = vmul.f32 %v4841, 1.442695
        %v4872 = vpow.pop %v4871
        %v4873 = vmul.f32 %v4842, 1.442695
        %v4874 = vpow.pop %v4873
        %v4875 = vadd.f32 %v4844, 1.0
        %v4876 = vadd.f32 %v4846, 1.0
        %v4877 = vadd.f32 %v4848, 1.0
        %v4878 = vadd.f32 %v4850, 1.0
        %v4879 = vadd.f32 %v4852, 1.0
        %v4880 = vadd.f32 %v4854, 1.0
        %v4881 = vadd.f32 %v4856, 1.0
        %v4882 = vadd.f32 %v4858, 1.0
        %v4883 = vadd.f32 %v4860, 1.0
        %v4884 = vadd.f32 %v4862, 1.0
        %v4885 = vadd.f32 %v4864, 1.0
        %v4886 = vadd.f32 %v4866, 1.0
        %v4887 = vadd.f32 %v4868, 1.0
        %v4888 = vadd.f32 %v4870, 1.0
        %v4889 = vadd.f32 %v4872, 1.0
        %v4890 = vadd.f32 %v4874, 1.0
        %v4891 = vrcp.pop %v4875
        %v4892 = vmul.f32 1.0, %v4891
        %v4893 = vrcp.pop %v4876
        %v4894 = vmul.f32 1.0, %v4893
        %v4895 = vrcp.pop %v4877
        %v4896 = vmul.f32 1.0, %v4895
        %v4897 = vrcp.pop %v4878
        %v4898 = vmul.f32 1.0, %v4897
        %v4899 = vrcp.pop %v4879
        %v4900 = vmul.f32 1.0, %v4899
        %v4901 = vrcp.pop %v4880
        %v4902 = vmul.f32 1.0, %v4901
        %v4903 = vrcp.pop %v4881
        %v4904 = vmul.f32 1.0, %v4903
        %v4905 = vrcp.pop %v4882
        %v4906 = vmul.f32 1.0, %v4905
        %v4907 = vrcp.pop %v4883
        %v4908 = vmul.f32 1.0, %v4907
        %v4909 = vrcp.pop %v4884
        %v4910 = vmul.f32 1.0, %v4909
        %v4911 = vrcp.pop %v4885
        %v4912 = vmul.f32 1.0, %v4911
        %v4913 = vrcp.pop %v4886
        %v4914 = vmul.f32 1.0, %v4913
        %v4915 = vrcp.pop %v4887
        %v4916 = vmul.f32 1.0, %v4915
        %v4917 = vrcp.pop %v4888
        %v4918 = vmul.f32 1.0, %v4917
        %v4919 = vrcp.pop %v4889
        %v4920 = vmul.f32 1.0, %v4919
        %v4921 = vrcp.pop %v4890
        %v4922 = vmul.f32 1.0, %v4921
        %v4923 = vmul.f32 %v4844, %v4891
        %v4924 = vmul.f32 %v4846, %v4893
        %v4925 = vmul.f32 %v4848, %v4895
        %v4926 = vmul.f32 %v4850, %v4897
        %v4927 = vmul.f32 %v4852, %v4899
        %v4928 = vmul.f32 %v4854, %v4901
        %v4929 = vmul.f32 %v4856, %v4903
        %v4930 = vmul.f32 %v4858, %v4905
        %v4931 = vmul.f32 %v4860, %v4907
        %v4932 = vmul.f32 %v4862, %v4909
        %v4933 = vmul.f32 %v4864, %v4911
        %v4934 = vmul.f32 %v4866, %v4913
        %v4935 = vmul.f32 %v4868, %v4915
        %v4936 = vmul.f32 %v4870, %v4917
        %v4937 = vmul.f32 %v4872, %v4919
        %v4938 = vmul.f32 %v4874, %v4921
        %v4939 = vsel %vm4795, %v4892, %v4923
        %v4940 = vsel %vm4796, %v4894, %v4924
        %v4941 = vsel %vm4797, %v4896, %v4925
        %v4942 = vsel %vm4798, %v4898, %v4926
        %v4943 = vsel %vm4799, %v4900, %v4927
        %v4944 = vsel %vm4800, %v4902, %v4928
        %v4945 = vsel %vm4801, %v4904, %v4929
        %v4946 = vsel %vm4802, %v4906, %v4930
        %v4947 = vsel %vm4803, %v4908, %v4931
        %v4948 = vsel %vm4804, %v4910, %v4932
        %v4949 = vsel %vm4805, %v4912, %v4933
        %v4950 = vsel %vm4806, %v4914, %v4934
        %v4951 = vsel %vm4807, %v4916, %v4935
        %v4952 = vsel %vm4808, %v4918, %v4936
        %v4953 = vsel %vm4809, %v4920, %v4937
        %v4954 = vsel %vm4810, %v4922, %v4938
        %4955 = vst [vmem:[%s327] sm:$0xff] %v4939
        %4956 = vst [vmem:[%s327 + $0x8] sm:$0xff] %v4940
        %4957 = vst [vmem:[%s327 + $0x10] sm:$0xff] %v4941
        %4958 = vst [vmem:[%s327 + $0x18] sm:$0xff] %v4942
        %4959 = vst [vmem:[%s327 + $0x20] sm:$0xff] %v4943
        %4960 = vst [vmem:[%s327 + $0x28] sm:$0xff] %v4944
        %4961 = vst [vmem:[%s327 + $0x30] sm:$0xff] %v4945
        %4962 = vst [vmem:[%s327 + $0x38] sm:$0xff] %v4946
        %4963 = vst [vmem:[%s327 + $0x40] sm:$0xff] %v4947
        %4964 = vst [vmem:[%s327 + $0x48] sm:$0xff] %v4948
        %4965 = vst [vmem:[%s327 + $0x50] sm:$0xff] %v4949
        %4966 = vst [vmem:[%s327 + $0x58] sm:$0xff] %v4950
        %4967 = vst [vmem:[%s327 + $0x60] sm:$0xff] %v4951
        %4968 = vst [vmem:[%s327 + $0x68] sm:$0xff] %v4952
        %4969 = vst [vmem:[%s327 + $0x70] sm:$0xff] %v4953
        %4970 = vst [vmem:[%s327 + $0x78] sm:$0xff] %v4954
        %s4971 = sand.u32 %s186, 1
        %s4972 = scalar_lea.sflag [#allocation5], %s4971
        %s4973 = sand.u32 %s186, 1
        %s4974 = smul.addr %s4973, 128
        %s4975 = scalar_lea.vmem [#allocation9], %s4974
        // Predicated region
        $region61: #{tpu_custom_call.1} parent=47 // pred_check
          %p4976 = pneg %p196
        $region62: #{tpu_custom_call.1} parent=47 // pred_check_branch
          %4978 = sbr.rel (%p4976) target = $region64
        $region63: #{tpu_custom_call.1} parent=47 // pred_region
          %s4979 = smul.u32 16, %s26
          %s4981 = ssub.s32 2048, 2048
          %4982 = vsyncadd %s4972, %s4981
          %s4983 = smul.addr %s4979, 128
          %s4984 = scalar_lea.hbm %s7, %s4983
          %s4985 = sshll.u32 %s4975, 4
          %s4986 = int_to_ptr.vmem [resolvable:$true] %s4985
          %4991 = dma.vmem_to_hbm [thread:$0]  %s4986, 2048, %s4984, %s4972, 128, 128, 8
        $region64: #{tpu_custom_call.1} parent=47 // pred_fallthru
          _
      $region48: #{tpu_custom_call.1} parent=5 // pred_fallthru
        _
      %p4992 = scmp.le.s32.totalorder 2, %s21
      // Predicated region
      $region65: #{tpu_custom_call.1} parent=5 // pred_check
        %p4993 = pneg %p4992
      $region66: #{tpu_custom_call.1} parent=5 // pred_check_branch
        %4995 = sbr.rel (%p4993) target = $region68
      $region67: #{tpu_custom_call.1} parent=5 // pred_region
        %s4996 = ssub.s32 %s21, 2
        // Predicated region
        $region69: #{tpu_custom_call.1} parent=67 // pred_check
          %p4997 = pneg %p202
        $region70: #{tpu_custom_call.1} parent=67 // pred_check_branch
          %4999 = sbr.rel (%p4997) target = $region72
        $region71: #{tpu_custom_call.1} parent=67 // pred_region
          %s5000 = sand.u32 %s187, 1
          %s5001 = scalar_lea.sflag [#allocation5], %s5000
          %s5002 = sand.u32 %s187, 1
          %s5003 = smul.addr %s5002, 128
          %s5004 = scalar_lea.vmem [#allocation9], %s5003
          %5005 = dma.done %s5001, 2048
        $region72: #{tpu_custom_call.1} parent=67 // pred_fallthru
          _
      $region68: #{tpu_custom_call.1} parent=5 // pred_fallthru
        _
    $region6: #{tpu_custom_call.1} parent=1 // loop_footer
      %s25 = sadd.s32 1, %s21
    $region7: #{tpu_custom_call.1} parent=1 // loop_footer_branch
      %20 = sbr.rel target = $region3
    $region8: #{tpu_custom_call.1} parent=1 // loop_exit
      _
    %5006 = vsyncpa [#allocation4], 1
    %s5007 = scalar_lea.sflag [#allocation4], 1
    %5008 = vsyncpa %s5007, 1
    %5009 = vsyncpa [#allocation7], 1
    %5010 = vsyncpa [#allocation5], 1
    %s5011 = scalar_lea.sflag [#allocation5], 1
    %5012 = vsyncpa %s5011, 1

</llo_original>
